<compile_context>
chip_gen: v5e
topology: v5e:2x2
jax: 0.10.0
libtpu: 0.0.40
codegen_flags: <defaults>
</compile_context>

<pallas_src>
import functools
import numpy as np

import jax
import jax.numpy as jnp
from jax.experimental import pallas as pl
from jax.experimental.pallas import tpu as pltpu

NEG_INF = -1e9  # softmax-equivalent stand-in for float('-inf'); a corner-window
                # double add (-2e9) is numerically safe in f32.


# ----------------------------- in-kernel helpers -----------------------------

def _erf_poly(x):
    # Abramowitz & Stegun 7.1.26 (max abs err ~1.5e-7) -- exact-GELU quality
    # using only EUP/VPU-friendly ops (exp + polynomial), no lax.erf lowering.
    p = 0.3275911
    a1, a2, a3, a4, a5 = (0.254829592, -0.284496736, 1.421413741,
                          -1.453152027, 1.061405429)
    sgn = jnp.where(x >= 0.0, 1.0, -1.0)
    ax = jnp.abs(x)
    t = 1.0 / (1.0 + p * ax)
    poly = ((((a5 * t + a4) * t + a3) * t + a2) * t + a1) * t
    return sgn * (1.0 - poly * jnp.exp(-ax * ax))


def _gelu_exact(x):
    # matches torch.nn.GELU() default (erf form) to ~1e-6
    return 0.5 * x * (1.0 + _erf_poly(x * 0.7071067811865475))


def _grn(x, gamma, beta):
    # GRN over one batch element: x [L, C]; L2 over tokens, normalized by the
    # channel-mean of that norm (matches torch GRN with dims (1,2) == tokens).
    gx = jnp.sqrt(jnp.sum(x * x, axis=0, keepdims=True))          # [1, C]
    nx = gx / (jnp.mean(gx, axis=-1, keepdims=True) + 1e-6)
    return gamma * (x * nx) + beta + x


def _swin_block_body(x, bias, ag, ab, wq, wk, wv, wo, bo, mg, mb,
                     w1, b1, w2, b2, *, heads, scale):
    """GRN -> window attention (windows folded into `bias`) -> +res ->
       GRN -> w1 -> exact GELU -> w2 -> +res.  x: [L, C] (one batch element)."""
    L, C = x.shape

    # ---- attention branch ----
    y = _grn(x, ag, ab)
    yb = jnp.broadcast_to(y[None, :, :], (heads, L, C))           # [H, L, C]
    q = jnp.einsum('hlc,hcd->hld', yb, wq, preferred_element_type=jnp.float32)
    k = jnp.einsum('hlc,hcd->hld', yb, wk, preferred_element_type=jnp.float32)
    v = jnp.einsum('hlc,hcd->hld', yb, wv, preferred_element_type=jnp.float32)
    s = jnp.einsum('hid,hjd->hij', q, k,
                   preferred_element_type=jnp.float32) * scale    # [H, L, L]
    s = s + bias[None, :, :]
    s = s - jnp.max(s, axis=-1, keepdims=True)
    p = jnp.exp(s)
    p = p / jnp.sum(p, axis=-1, keepdims=True)                    # exact (f32 parity)
    o = jnp.einsum('hij,hjd->hid', p, v,
                   preferred_element_type=jnp.float32)            # [H, L, hd]
    oc = jnp.einsum('hld,hdc->hlc', o, wo,
                    preferred_element_type=jnp.float32)           # [H, L, C]
    a = jnp.sum(oc, axis=0) + bo + x                              # residual

    # ---- MLP branch (hidden activation never leaves VMEM) ----
    y2 = _grn(a, mg, mb)
    h1 = jnp.dot(y2, w1, preferred_element_type=jnp.float32) + b1
    h1 = _gelu_exact(h1)
    return jnp.dot(h1, w2, preferred_element_type=jnp.float32) + b2 + a


# ------------------------------ fused kernel ---------------------------------
# ref order: patches, pm_w, pm_b,
#            [bias, ag, ab, wq, wk, wv, wo, bo, mg, mb, w1, b1, w2, b2] x blocks,
#            ln_g, ln_b, head_w, head_b, out

def _fused_forward_kernel(*refs, heads, scale, num_blocks):
    assert len(refs) == 3 + 14 * num_blocks + 4 + 1
    o_ref = refs[-1]
    p_ref, pm_w, pm_b = refs[0], refs[1], refs[2]

    # patch-merge linear: [L, C*ds^2] @ [C*ds^2, D]
    x = jnp.dot(p_ref[0].astype(jnp.float32), pm_w[...],
                preferred_element_type=jnp.float32) + pm_b[...]   # [L, D]

    idx = 3
    for _ in range(num_blocks):
        (bias, ag, ab, wq, wk, wv, wo, bo, mg, mb, w1, b1, w2, b2) = \
            refs[idx:idx + 14]
        idx += 14
        x = _swin_block_body(
            x, bias[...], ag[...], ab[...], wq[...], wk[...], wv[...],
            wo[...], bo[...], mg[...], mb[...], w1[...], b1[...], w2[...],
            b2[...], heads=heads, scale=scale)

    # head: mean over tokens -> LayerNorm(eps=1e-5) -> Linear
    ln_g, ln_b, hw, hb = refs[idx:idx + 4]
    pooled = jnp.mean(x, axis=0, keepdims=True)                   # [1, D]
    mu = jnp.mean(pooled, axis=-1, keepdims=True)
    var = jnp.mean(jnp.square(pooled - mu), axis=-1, keepdims=True)
    xn = (pooled - mu) * jax.lax.rsqrt(var + 1e-5)
    xn = xn * ln_g[...] + ln_b[...]
    logits = jnp.dot(xn, hw[...], preferred_element_type=jnp.float32) + hb[...]
    o_ref[0] = logits.astype(o_ref.dtype)


# ---------------------- static window-bias construction ----------------------
# Cyclic shift + window partitioning + shift masks are equivalent to attention
# over the L = n_h*n_w tokens (kept in place) with an additive bias matrix:
#   bias[p,q] = pos_emb[rel(p,q)]  if p,q share a (shifted) window
#             += torch shift masks on the boundary windows
#             = NEG_INF            if p,q are in different windows
# evaluated on shifted coordinates p' = (p - displacement) mod n.

@functools.lru_cache(maxsize=None)
def _window_bias_static(n_h, n_w, window_size, shifted):
    d = window_size // 2 if shifted else 0
    rr, cc = np.meshgrid(np.arange(n_h), np.arange(n_w), indexing='ij')
    r = rr.reshape(-1)
    c = cc.reshape(-1)
    sr = (r - d) % n_h                       # shifted-frame coordinates
    sc = (c - d) % n_w
    wh = sr % window_size                    # intra-window coords
    ww = sc % window_size
    Wr = sr // window_size                   # window indices
    Wc = sc // window_size
    same = (Wr[:, None] == Wr[None, :]) & (Wc[:, None] == Wc[None, :])
    ri = (wh[None, :] - wh[:, None]) + window_size - 1   # key - query
    ci = (ww[None, :] - ww[:, None]) + window_size - 1
    add = np.where(same, 0.0, NEG_INF).astype(np.float32)
    if shifted:
        nw_h, nw_w = n_h // window_size, n_w // window_size
        thr = window_size - d
        # upper/lower mask on last window-row (torch: dots[:, :, -nw_w:])
        ul = same & (Wr[:, None] == nw_h - 1) & \
            ((wh[:, None] >= thr) != (wh[None, :] >= thr))
        # left/right mask on last window-col (torch: dots[:, :, nw_w-1::nw_w])
        lr = same & (Wc[:, None] == nw_w - 1) & \
            ((ww[:, None] >= thr) != (ww[None, :] >= thr))
        add = add + np.where(ul, NEG_INF, 0.0) + np.where(lr, NEG_INF, 0.0)
    flat_idx = (ri * (2 * window_size - 1) + ci).astype(np.int32)
    return flat_idx, add.astype(np.float32)


def build_attention_bias(pos_emb, n_h, n_w, window_size, shifted):
    flat_idx, add = _window_bias_static(n_h, n_w, window_size, bool(shifted))
    bias = jnp.take(pos_emb.reshape(-1), jnp.asarray(flat_idx))
    return bias + jnp.asarray(add)


# ----------------------- parameter packing (once, outside jit) ---------------

def pack_forward_args(params, *, heads, head_dim, window_size, n_h, n_w):
    """Flatten params into the kernel's operand order.  Biases are materialized
    here (hoisted out of the per-forward trace) and qkv / out-proj weights are
    pre-split per head so the kernel never slices along lanes."""
    sp = params['stage1']
    dim = sp['pm_w'].shape[1]
    inner = heads * head_dim
    args = [sp['pm_w'], sp['pm_b'].reshape(1, dim)]
    for blk_regular, blk_shifted in sp['blocks']:
        for blk, shifted in ((blk_regular, False), (blk_shifted, True)):
            bias = build_attention_bias(blk['pos_emb'], n_h, n_w, window_size,
                                        shifted)
            wqkv = blk['w_qkv']
            wq = wqkv[:, 0 * inner:1 * inner].reshape(dim, heads, head_dim)
            wk = wqkv[:, 1 * inner:2 * inner].reshape(dim, heads, head_dim)
            wv = wqkv[:, 2 * inner:3 * inner].reshape(dim, heads, head_dim)
            args += [
                bias,
                blk['attn_gamma'].reshape(1, dim), blk['attn_beta'].reshape(1, dim),
                jnp.transpose(wq, (1, 0, 2)),            # [H, C, hd]
                jnp.transpose(wk, (1, 0, 2)),
                jnp.transpose(wv, (1, 0, 2)),
                blk['w_out'].reshape(heads, head_dim, dim),   # [H, hd, C]
                blk['b_out'].reshape(1, dim),
                blk['mlp_gamma'].reshape(1, dim), blk['mlp_beta'].reshape(1, dim),
                blk['w1'], blk['b1'].reshape(1, -1),
                blk['w2'], blk['b2'].reshape(1, dim),
            ]
    hp = params['head']
    n_cls = hp['w'].shape[1]
    args += [hp['ln_g'].reshape(1, dim), hp['ln_b'].reshape(1, dim),
             hp['w'], hp['b'].reshape(1, n_cls)]
    return tuple(jnp.asarray(a, jnp.float32) for a in args)


# ------------------------------ forward wrapper -------------------------------

def _full_spec(a):
    nd = a.ndim
    return pl.BlockSpec(a.shape, lambda b, _nd=nd: (0,) * _nd)


def swin_forward(img, packed, *, heads, head_dim, downscaling_factor,
                 num_blocks):
    B, C, H, W = img.shape
    ds = downscaling_factor
    nh, nw = H // ds, W // ds
    L = nh * nw
    K0 = C * ds * ds
    # nn.Unfold(k=ds, stride=ds) feature ordering is (c, kh, kw), c slowest.
    patches = img.reshape(B, C, nh, ds, nw, ds)
    patches = patches.transpose(0, 2, 4, 1, 3, 5).reshape(B, L, K0)

    num_classes = packed[-1].shape[1]
    kernel = functools.partial(_fused_forward_kernel, heads=heads,
                               scale=head_dim ** -0.5, num_blocks=num_blocks)
    out = pl.pallas_call(
        kernel,
        grid=(B,),
        in_specs=[pl.BlockSpec((1, L, K0), lambda b: (b, 0, 0))]
                 + [_full_spec(a) for a in packed],
        out_specs=pl.BlockSpec((1, 1, num_classes), lambda b: (b, 0, 0)),
        out_shape=jax.ShapeDtypeStruct((B, 1, num_classes), jnp.float32),
        compiler_params=pltpu.CompilerParams(
            dimension_semantics=("parallel",)),   # both TCs on v7x
    )(patches, *packed)
    return out.reshape(B, num_classes)


# ------------------------------ parameters -----------------------------------

def init_params(key, *, channels, hidden_dim, layers, heads, head_dim,
                window_size, downscaling_factor, num_classes):
    keys = jax.random.split(key, 256)
    cnt = [0]

    def nrm(shape, s=0.05):
        k = keys[cnt[0]]; cnt[0] += 1
        return jax.random.normal(k, shape, jnp.float32) * s

    dim = hidden_dim
    inner = heads * head_dim
    mlp_dim = dim * 4

    def init_block():
        return dict(
            attn_gamma=nrm((1, 1, 1, dim)), attn_beta=nrm((1, 1, 1, dim)),
            w_qkv=nrm((dim, inner * 3)),
            pos_emb=nrm((2 * window_size - 1, 2 * window_size - 1), 1.0),
            w_out=nrm((inner, dim)), b_out=nrm((dim,)),
            mlp_gamma=nrm((1, 1, 1, dim)), mlp_beta=nrm((1, 1, 1, dim)),
            w1=nrm((dim, mlp_dim)), b1=nrm((mlp_dim,)),
            w2=nrm((mlp_dim, dim)), b2=nrm((dim,)),
        )

    return dict(
        stage1=dict(
            pm_w=nrm((channels * downscaling_factor ** 2, dim)),
            pm_b=nrm((dim,)),
            blocks=[(init_block(), init_block()) for _ in range(layers // 2)],
        ),
        head=dict(
            ln_g=1.0 + nrm((dim,)), ln_b=nrm((dim,)),
            w=nrm((dim, num_classes)), b=nrm((num_classes,)),
        ),
    )


# --------------------------------- main ---------------------------------------

if __name__ == "__main__":
    # small config consistent with the module:
    #   hidden_dim=32, layers=2, heads=2, channels=4, head_dim=16,
    #   window_size=2, downscaling_factor=4, num_classes=10
    cfg = dict(channels=4, hidden_dim=32, layers=2, heads=2, head_dim=16,
               window_size=2, downscaling_factor=4, num_classes=10)

    key = jax.random.PRNGKey(0)
    k_img, k_par = jax.random.split(key)
    img = jax.random.normal(k_img, (2, cfg['channels'], 16, 16), jnp.float32)

    params = init_params(k_par, **cfg)

    nh = img.shape[2] // cfg['downscaling_factor']
    nw = img.shape[3] // cfg['downscaling_factor']
    packed = pack_forward_args(
        params, heads=cfg['heads'], head_dim=cfg['head_dim'],
        window_size=cfg['window_size'], n_h=nh, n_w=nw)
    num_blocks = 2 * (cfg['layers'] // 2)

    fwd = jax.jit(functools.partial(
        swin_forward, heads=cfg['heads'], head_dim=cfg['head_dim'],
        downscaling_factor=cfg['downscaling_factor'], num_blocks=num_blocks))

    out = fwd(img, packed)
    out = jax.block_until_ready(out)
    assert out.shape == (2, cfg['num_classes'])
    assert bool(jnp.all(jnp.isfinite(out)))
    print("KERNEL_OK")
</pallas_src>

<mosaic_0001>
module attributes {stable_mosaic.version = 11 : i64} {
  func.func @_fused_forward_kernel(%arg0: i32, %arg1: memref<1x16x64xf32, #tpu.memory_space<vmem>>, %arg2: memref<64x32xf32, #tpu.memory_space<vmem>>, %arg3: memref<1x32xf32, #tpu.memory_space<vmem>>, %arg4: memref<16x16xf32, #tpu.memory_space<vmem>>, %arg5: memref<1x32xf32, #tpu.memory_space<vmem>>, %arg6: memref<1x32xf32, #tpu.memory_space<vmem>>, %arg7: memref<2x32x16xf32, #tpu.memory_space<vmem>>, %arg8: memref<2x32x16xf32, #tpu.memory_space<vmem>>, %arg9: memref<2x32x16xf32, #tpu.memory_space<vmem>>, %arg10: memref<2x16x32xf32, #tpu.memory_space<vmem>>, %arg11: memref<1x32xf32, #tpu.memory_space<vmem>>, %arg12: memref<1x32xf32, #tpu.memory_space<vmem>>, %arg13: memref<1x32xf32, #tpu.memory_space<vmem>>, %arg14: memref<32x128xf32, #tpu.memory_space<vmem>>, %arg15: memref<1x128xf32, #tpu.memory_space<vmem>>, %arg16: memref<128x32xf32, #tpu.memory_space<vmem>>, %arg17: memref<1x32xf32, #tpu.memory_space<vmem>>, %arg18: memref<16x16xf32, #tpu.memory_space<vmem>>, %arg19: memref<1x32xf32, #tpu.memory_space<vmem>>, %arg20: memref<1x32xf32, #tpu.memory_space<vmem>>, %arg21: memref<2x32x16xf32, #tpu.memory_space<vmem>>, %arg22: memref<2x32x16xf32, #tpu.memory_space<vmem>>, %arg23: memref<2x32x16xf32, #tpu.memory_space<vmem>>, %arg24: memref<2x16x32xf32, #tpu.memory_space<vmem>>, %arg25: memref<1x32xf32, #tpu.memory_space<vmem>>, %arg26: memref<1x32xf32, #tpu.memory_space<vmem>>, %arg27: memref<1x32xf32, #tpu.memory_space<vmem>>, %arg28: memref<32x128xf32, #tpu.memory_space<vmem>>, %arg29: memref<1x128xf32, #tpu.memory_space<vmem>>, %arg30: memref<128x32xf32, #tpu.memory_space<vmem>>, %arg31: memref<1x32xf32, #tpu.memory_space<vmem>>, %arg32: memref<1x32xf32, #tpu.memory_space<vmem>>, %arg33: memref<1x32xf32, #tpu.memory_space<vmem>>, %arg34: memref<32x10xf32, #tpu.memory_space<vmem>>, %arg35: memref<1x10xf32, #tpu.memory_space<vmem>>, %arg36: memref<1x1x10xf32, #tpu.memory_space<vmem>>) attributes {dimension_semantics = [#tpu.dimension_semantics<parallel>], iteration_bounds = array<i64: 2>, scalar_prefetch = 0 : i64, scratch_operands = 0 : i64, tpu.core_type = #tpu.core_type<tc>, window_params = [{transform_indices = @transform_0, window_bounds = array<i64: 1, 16, 64>}, {pipeline_mode = #tpu.pipeline_mode<synchronous>, transform_indices = @transform_1, window_bounds = array<i64: 64, 32>}, {pipeline_mode = #tpu.pipeline_mode<synchronous>, transform_indices = @transform_2, window_bounds = array<i64: 1, 32>}, {pipeline_mode = #tpu.pipeline_mode<synchronous>, transform_indices = @transform_3, window_bounds = array<i64: 16, 16>}, {pipeline_mode = #tpu.pipeline_mode<synchronous>, transform_indices = @transform_4, window_bounds = array<i64: 1, 32>}, {pipeline_mode = #tpu.pipeline_mode<synchronous>, transform_indices = @transform_5, window_bounds = array<i64: 1, 32>}, {pipeline_mode = #tpu.pipeline_mode<synchronous>, transform_indices = @transform_6, window_bounds = array<i64: 2, 32, 16>}, {pipeline_mode = #tpu.pipeline_mode<synchronous>, transform_indices = @transform_7, window_bounds = array<i64: 2, 32, 16>}, {pipeline_mode = #tpu.pipeline_mode<synchronous>, transform_indices = @transform_8, window_bounds = array<i64: 2, 32, 16>}, {pipeline_mode = #tpu.pipeline_mode<synchronous>, transform_indices = @transform_9, window_bounds = array<i64: 2, 16, 32>}, {pipeline_mode = #tpu.pipeline_mode<synchronous>, transform_indices = @transform_10, window_bounds = array<i64: 1, 32>}, {pipeline_mode = #tpu.pipeline_mode<synchronous>, transform_indices = @transform_11, window_bounds = array<i64: 1, 32>}, {pipeline_mode = #tpu.pipeline_mode<synchronous>, transform_indices = @transform_12, window_bounds = array<i64: 1, 32>}, {pipeline_mode = #tpu.pipeline_mode<synchronous>, transform_indices = @transform_13, window_bounds = array<i64: 32, 128>}, {pipeline_mode = #tpu.pipeline_mode<synchronous>, transform_indices = @transform_14, window_bounds = array<i64: 1, 128>}, {pipeline_mode = #tpu.pipeline_mode<synchronous>, transform_indices = @transform_15, window_bounds = array<i64: 128, 32>}, {pipeline_mode = #tpu.pipeline_mode<synchronous>, transform_indices = @transform_16, window_bounds = array<i64: 1, 32>}, {pipeline_mode = #tpu.pipeline_mode<synchronous>, transform_indices = @transform_17, window_bounds = array<i64: 16, 16>}, {pipeline_mode = #tpu.pipeline_mode<synchronous>, transform_indices = @transform_18, window_bounds = array<i64: 1, 32>}, {pipeline_mode = #tpu.pipeline_mode<synchronous>, transform_indices = @transform_19, window_bounds = array<i64: 1, 32>}, {pipeline_mode = #tpu.pipeline_mode<synchronous>, transform_indices = @transform_20, window_bounds = array<i64: 2, 32, 16>}, {pipeline_mode = #tpu.pipeline_mode<synchronous>, transform_indices = @transform_21, window_bounds = array<i64: 2, 32, 16>}, {pipeline_mode = #tpu.pipeline_mode<synchronous>, transform_indices = @transform_22, window_bounds = array<i64: 2, 32, 16>}, {pipeline_mode = #tpu.pipeline_mode<synchronous>, transform_indices = @transform_23, window_bounds = array<i64: 2, 16, 32>}, {pipeline_mode = #tpu.pipeline_mode<synchronous>, transform_indices = @transform_24, window_bounds = array<i64: 1, 32>}, {pipeline_mode = #tpu.pipeline_mode<synchronous>, transform_indices = @transform_25, window_bounds = array<i64: 1, 32>}, {pipeline_mode = #tpu.pipeline_mode<synchronous>, transform_indices = @transform_26, window_bounds = array<i64: 1, 32>}, {pipeline_mode = #tpu.pipeline_mode<synchronous>, transform_indices = @transform_27, window_bounds = array<i64: 32, 128>}, {pipeline_mode = #tpu.pipeline_mode<synchronous>, transform_indices = @transform_28, window_bounds = array<i64: 1, 128>}, {pipeline_mode = #tpu.pipeline_mode<synchronous>, transform_indices = @transform_29, window_bounds = array<i64: 128, 32>}, {pipeline_mode = #tpu.pipeline_mode<synchronous>, transform_indices = @transform_30, window_bounds = array<i64: 1, 32>}, {pipeline_mode = #tpu.pipeline_mode<synchronous>, transform_indices = @transform_31, window_bounds = array<i64: 1, 32>}, {pipeline_mode = #tpu.pipeline_mode<synchronous>, transform_indices = @transform_32, window_bounds = array<i64: 1, 32>}, {pipeline_mode = #tpu.pipeline_mode<synchronous>, transform_indices = @transform_33, window_bounds = array<i64: 32, 10>}, {pipeline_mode = #tpu.pipeline_mode<synchronous>, transform_indices = @transform_34, window_bounds = array<i64: 1, 10>}, {transform_indices = @transform_35, window_bounds = array<i64: 1, 1, 10>}]} {
    %c0 = arith.constant 0 : index
    %c0_0 = arith.constant 0 : index
    %c0_1 = arith.constant 0 : index
    %0 = vector.load %arg1[%c0, %c0_0, %c0_1] : memref<1x16x64xf32, #tpu.memory_space<vmem>>, vector<1x16x64xf32>
    %1 = vector.shape_cast %0 : vector<1x16x64xf32> to vector<16x64xf32>
    %c0_2 = arith.constant 0 : index
    %c0_3 = arith.constant 0 : index
    %2 = vector.load %arg2[%c0_2, %c0_3] : memref<64x32xf32, #tpu.memory_space<vmem>>, vector<64x32xf32>
    %cst = arith.constant dense<0.000000e+00> : vector<16x32xf32>
    %3 = tpu.matmul %1, %2, %cst {dimension_numbers = #tpu.dot_dimension_numbers<[1], [0], [0], [1], [0, 0, 1, 1], [], []>} : vector<16x64xf32>, vector<64x32xf32>, vector<16x32xf32> -> vector<16x32xf32>
    %c0_4 = arith.constant 0 : index
    %c0_5 = arith.constant 0 : index
    %4 = vector.load %arg3[%c0_4, %c0_5] : memref<1x32xf32, #tpu.memory_space<vmem>>, vector<1x32xf32>
    %5 = vector.broadcast %4 : vector<1x32xf32> to vector<16x32xf32>
    %6 = arith.addf %3, %5 : vector<16x32xf32>
    %c0_6 = arith.constant 0 : index
    %c0_7 = arith.constant 0 : index
    %7 = vector.load %arg4[%c0_6, %c0_7] : memref<16x16xf32, #tpu.memory_space<vmem>>, vector<16x16xf32>
    %c0_8 = arith.constant 0 : index
    %c0_9 = arith.constant 0 : index
    %8 = vector.load %arg5[%c0_8, %c0_9] : memref<1x32xf32, #tpu.memory_space<vmem>>, vector<1x32xf32>
    %c0_10 = arith.constant 0 : index
    %c0_11 = arith.constant 0 : index
    %9 = vector.load %arg6[%c0_10, %c0_11] : memref<1x32xf32, #tpu.memory_space<vmem>>, vector<1x32xf32>
    %c0_12 = arith.constant 0 : index
    %c0_13 = arith.constant 0 : index
    %c0_14 = arith.constant 0 : index
    %10 = vector.load %arg7[%c0_12, %c0_13, %c0_14] : memref<2x32x16xf32, #tpu.memory_space<vmem>>, vector<2x32x16xf32>
    %c0_15 = arith.constant 0 : index
    %c0_16 = arith.constant 0 : index
    %c0_17 = arith.constant 0 : index
    %11 = vector.load %arg8[%c0_15, %c0_16, %c0_17] : memref<2x32x16xf32, #tpu.memory_space<vmem>>, vector<2x32x16xf32>
    %c0_18 = arith.constant 0 : index
    %c0_19 = arith.constant 0 : index
    %c0_20 = arith.constant 0 : index
    %12 = vector.load %arg9[%c0_18, %c0_19, %c0_20] : memref<2x32x16xf32, #tpu.memory_space<vmem>>, vector<2x32x16xf32>
    %c0_21 = arith.constant 0 : index
    %c0_22 = arith.constant 0 : index
    %c0_23 = arith.constant 0 : index
    %13 = vector.load %arg10[%c0_21, %c0_22, %c0_23] : memref<2x16x32xf32, #tpu.memory_space<vmem>>, vector<2x16x32xf32>
    %c0_24 = arith.constant 0 : index
    %c0_25 = arith.constant 0 : index
    %14 = vector.load %arg11[%c0_24, %c0_25] : memref<1x32xf32, #tpu.memory_space<vmem>>, vector<1x32xf32>
    %c0_26 = arith.constant 0 : index
    %c0_27 = arith.constant 0 : index
    %15 = vector.load %arg12[%c0_26, %c0_27] : memref<1x32xf32, #tpu.memory_space<vmem>>, vector<1x32xf32>
    %c0_28 = arith.constant 0 : index
    %c0_29 = arith.constant 0 : index
    %16 = vector.load %arg13[%c0_28, %c0_29] : memref<1x32xf32, #tpu.memory_space<vmem>>, vector<1x32xf32>
    %c0_30 = arith.constant 0 : index
    %c0_31 = arith.constant 0 : index
    %17 = vector.load %arg14[%c0_30, %c0_31] : memref<32x128xf32, #tpu.memory_space<vmem>>, vector<32x128xf32>
    %c0_32 = arith.constant 0 : index
    %c0_33 = arith.constant 0 : index
    %18 = vector.load %arg15[%c0_32, %c0_33] : memref<1x128xf32, #tpu.memory_space<vmem>>, vector<1x128xf32>
    %c0_34 = arith.constant 0 : index
    %c0_35 = arith.constant 0 : index
    %19 = vector.load %arg16[%c0_34, %c0_35] : memref<128x32xf32, #tpu.memory_space<vmem>>, vector<128x32xf32>
    %c0_36 = arith.constant 0 : index
    %c0_37 = arith.constant 0 : index
    %20 = vector.load %arg17[%c0_36, %c0_37] : memref<1x32xf32, #tpu.memory_space<vmem>>, vector<1x32xf32>
    %21 = arith.mulf %6, %6 : vector<16x32xf32>
    %cst_38 = arith.constant dense<0.000000e+00> : vector<32xf32>
    %22 = vector.multi_reduction <add>, %21, %cst_38 [0] : vector<16x32xf32> to vector<32xf32>
    %23 = vector.shape_cast %22 : vector<32xf32> to vector<1x32xf32>
    %24 = math.sqrt %23 : vector<1x32xf32>
    %cst_39 = arith.constant dense<0.000000e+00> : vector<1xf32>
    %25 = vector.multi_reduction <add>, %24, %cst_39 [1] : vector<1x32xf32> to vector<1xf32>
    %26 = vector.shape_cast %25 : vector<1xf32> to vector<1x1xf32>
    %cst_40 = arith.constant 3.200000e+01 : f32
    %27 = vector.broadcast %cst_40 : f32 to vector<1x1xf32>
    %28 = arith.divf %26, %27 : vector<1x1xf32>
    %cst_41 = arith.constant 9.99999997E-7 : f32
    %29 = vector.broadcast %cst_41 : f32 to vector<1x1xf32>
    %30 = arith.addf %28, %29 : vector<1x1xf32>
    %31 = vector.broadcast %30 : vector<1x1xf32> to vector<1x32xf32>
    %32 = arith.divf %24, %31 : vector<1x32xf32>
    %33 = vector.broadcast %32 : vector<1x32xf32> to vector<16x32xf32>
    %34 = arith.mulf %6, %33 : vector<16x32xf32>
    %35 = vector.broadcast %8 : vector<1x32xf32> to vector<16x32xf32>
    %36 = arith.mulf %35, %34 : vector<16x32xf32>
    %37 = vector.broadcast %9 : vector<1x32xf32> to vector<16x32xf32>
    %38 = arith.addf %36, %37 : vector<16x32xf32>
    %39 = arith.addf %38, %6 : vector<16x32xf32>
    %40 = vector.shape_cast %39 : vector<16x32xf32> to vector<1x16x32xf32>
    %41 = vector.shape_cast %40 : vector<1x16x32xf32> to vector<1x16x32xf32>
    %42 = vector.broadcast %41 : vector<1x16x32xf32> to vector<2x16x32xf32>
    "tpu.trace_start"() <{level = 10 : i32, message = "hlc,hcd->hld"}> : () -> ()
    %cst_42 = arith.constant dense<0.000000e+00> : vector<2x16x16xf32>
    %43 = tpu.matmul %42, %10, %cst_42 {dimension_numbers = #tpu.dot_dimension_numbers<[2], [1], [1], [2], [0, 0, 0, 1, 1, 2], [0], [0]>} : vector<2x16x32xf32>, vector<2x32x16xf32>, vector<2x16x16xf32> -> vector<2x16x16xf32>
    %cst_43 = arith.constant dense<0.000000e+00> : vector<2x16x16xf32>
    %44 = tpu.matmul %42, %11, %cst_43 {dimension_numbers = #tpu.dot_dimension_numbers<[2], [1], [1], [2], [0, 0, 0, 1, 1, 2], [0], [0]>} : vector<2x16x32xf32>, vector<2x32x16xf32>, vector<2x16x16xf32> -> vector<2x16x16xf32>
    %cst_44 = arith.constant dense<0.000000e+00> : vector<2x16x16xf32>
    %45 = tpu.matmul %42, %12, %cst_44 {dimension_numbers = #tpu.dot_dimension_numbers<[2], [1], [1], [2], [0, 0, 0, 1, 1, 2], [0], [0]>} : vector<2x16x32xf32>, vector<2x32x16xf32>, vector<2x16x16xf32> -> vector<2x16x16xf32>
    "tpu.trace_stop"() : () -> ()
    "tpu.trace_start"() <{level = 10 : i32, message = "hid,hjd->hij"}> : () -> ()
    %cst_45 = arith.constant dense<0.000000e+00> : vector<2x16x16xf32>
    %46 = tpu.matmul %43, %44, %cst_45 {dimension_numbers = #tpu.dot_dimension_numbers<[2], [2], [1], [1], [0, 0, 0, 1, 1, 1], [0], [0]>} : vector<2x16x16xf32>, vector<2x16x16xf32>, vector<2x16x16xf32> -> vector<2x16x16xf32>
    "tpu.trace_stop"() : () -> ()
    %cst_46 = arith.constant 2.500000e-01 : f32
    %47 = vector.broadcast %cst_46 : f32 to vector<2x16x16xf32>
    %48 = arith.mulf %46, %47 : vector<2x16x16xf32>
    %49 = vector.shape_cast %7 : vector<16x16xf32> to vector<1x16x16xf32>
    %50 = vector.broadcast %49 : vector<1x16x16xf32> to vector<2x16x16xf32>
    %51 = arith.addf %48, %50 : vector<2x16x16xf32>
    %cst_47 = arith.constant dense<0xFF800000> : vector<2x16xf32>
    %52 = vector.multi_reduction <maximumf>, %51, %cst_47 [2] : vector<2x16x16xf32> to vector<2x16xf32>
    %53 = vector.shape_cast %52 : vector<2x16xf32> to vector<2x16x1xf32>
    %54 = vector.broadcast %53 : vector<2x16x1xf32> to vector<2x16x16xf32>
    %55 = arith.subf %51, %54 : vector<2x16x16xf32>
    %56 = math.exp %55 : vector<2x16x16xf32>
    %cst_48 = arith.constant dense<0.000000e+00> : vector<2x16xf32>
    %57 = vector.multi_reduction <add>, %56, %cst_48 [2] : vector<2x16x16xf32> to vector<2x16xf32>
    %58 = vector.shape_cast %57 : vector<2x16xf32> to vector<2x16x1xf32>
    %59 = vector.broadcast %58 : vector<2x16x1xf32> to vector<2x16x16xf32>
    %60 = arith.divf %56, %59 : vector<2x16x16xf32>
    "tpu.trace_start"() <{level = 10 : i32, message = "hij,hjd->hid"}> : () -> ()
    %cst_49 = arith.constant dense<0.000000e+00> : vector<2x16x16xf32>
    %61 = tpu.matmul %60, %45, %cst_49 {dimension_numbers = #tpu.dot_dimension_numbers<[2], [1], [1], [2], [0, 0, 0, 1, 1, 2], [0], [0]>} : vector<2x16x16xf32>, vector<2x16x16xf32>, vector<2x16x16xf32> -> vector<2x16x16xf32>
    "tpu.trace_stop"() : () -> ()
    "tpu.trace_start"() <{level = 10 : i32, message = "hld,hdc->hlc"}> : () -> ()
    %cst_50 = arith.constant dense<0.000000e+00> : vector<2x16x32xf32>
    %62 = tpu.matmul %61, %13, %cst_50 {dimension_numbers = #tpu.dot_dimension_numbers<[2], [1], [1], [2], [0, 0, 0, 1, 1, 2], [0], [0]>} : vector<2x16x16xf32>, vector<2x16x32xf32>, vector<2x16x32xf32> -> vector<2x16x32xf32>
    "tpu.trace_stop"() : () -> ()
    %cst_51 = arith.constant dense<0.000000e+00> : vector<16x32xf32>
    %63 = vector.multi_reduction <add>, %62, %cst_51 [0] : vector<2x16x32xf32> to vector<16x32xf32>
    %64 = vector.broadcast %14 : vector<1x32xf32> to vector<16x32xf32>
    %65 = arith.addf %63, %64 : vector<16x32xf32>
    %66 = arith.addf %65, %6 : vector<16x32xf32>
    %67 = arith.mulf %66, %66 : vector<16x32xf32>
    %cst_52 = arith.constant dense<0.000000e+00> : vector<32xf32>
    %68 = vector.multi_reduction <add>, %67, %cst_52 [0] : vector<16x32xf32> to vector<32xf32>
    %69 = vector.shape_cast %68 : vector<32xf32> to vector<1x32xf32>
    %70 = math.sqrt %69 : vector<1x32xf32>
    %cst_53 = arith.constant dense<0.000000e+00> : vector<1xf32>
    %71 = vector.multi_reduction <add>, %70, %cst_53 [1] : vector<1x32xf32> to vector<1xf32>
    %72 = vector.shape_cast %71 : vector<1xf32> to vector<1x1xf32>
    %cst_54 = arith.constant 3.200000e+01 : f32
    %73 = vector.broadcast %cst_54 : f32 to vector<1x1xf32>
    %74 = arith.divf %72, %73 : vector<1x1xf32>
    %cst_55 = arith.constant 9.99999997E-7 : f32
    %75 = vector.broadcast %cst_55 : f32 to vector<1x1xf32>
    %76 = arith.addf %74, %75 : vector<1x1xf32>
    %77 = vector.broadcast %76 : vector<1x1xf32> to vector<1x32xf32>
    %78 = arith.divf %70, %77 : vector<1x32xf32>
    %79 = vector.broadcast %78 : vector<1x32xf32> to vector<16x32xf32>
    %80 = arith.mulf %66, %79 : vector<16x32xf32>
    %81 = vector.broadcast %15 : vector<1x32xf32> to vector<16x32xf32>
    %82 = arith.mulf %81, %80 : vector<16x32xf32>
    %83 = vector.broadcast %16 : vector<1x32xf32> to vector<16x32xf32>
    %84 = arith.addf %82, %83 : vector<16x32xf32>
    %85 = arith.addf %84, %66 : vector<16x32xf32>
    %cst_56 = arith.constant dense<0.000000e+00> : vector<16x128xf32>
    %86 = tpu.matmul %85, %17, %cst_56 {dimension_numbers = #tpu.dot_dimension_numbers<[1], [0], [0], [1], [0, 0, 1, 1], [], []>} : vector<16x32xf32>, vector<32x128xf32>, vector<16x128xf32> -> vector<16x128xf32>
    %87 = vector.broadcast %18 : vector<1x128xf32> to vector<16x128xf32>
    %88 = arith.addf %86, %87 : vector<16x128xf32>
    %cst_57 = arith.constant 5.000000e-01 : f32
    %89 = vector.broadcast %cst_57 : f32 to vector<16x128xf32>
    %90 = arith.mulf %89, %88 : vector<16x128xf32>
    %cst_58 = arith.constant 0.707106769 : f32
    %91 = vector.broadcast %cst_58 : f32 to vector<16x128xf32>
    %92 = arith.mulf %88, %91 : vector<16x128xf32>
    %cst_59 = arith.constant 0.000000e+00 : f32
    %93 = vector.broadcast %cst_59 : f32 to vector<16x128xf32>
    %94 = arith.cmpf oge, %92, %93 : vector<16x128xf32>
    %cst_60 = arith.constant 1.000000e+00 : f32
    %cst_61 = arith.constant -1.000000e+00 : f32
    %95 = vector.broadcast %cst_60 : f32 to vector<16x128xf32>
    %96 = vector.broadcast %cst_61 : f32 to vector<16x128xf32>
    %97 = arith.select %94, %95, %96 : vector<16x128xi1>, vector<16x128xf32>
    %98 = math.absf %92 : vector<16x128xf32>
    %cst_62 = arith.constant 0.327591091 : f32
    %99 = vector.broadcast %cst_62 : f32 to vector<16x128xf32>
    %100 = arith.mulf %99, %98 : vector<16x128xf32>
    %cst_63 = arith.constant 1.000000e+00 : f32
    %101 = vector.broadcast %cst_63 : f32 to vector<16x128xf32>
    %102 = arith.addf %101, %100 : vector<16x128xf32>
    %cst_64 = arith.constant 1.000000e+00 : f32
    %103 = vector.broadcast %cst_64 : f32 to vector<16x128xf32>
    %104 = arith.divf %103, %102 : vector<16x128xf32>
    %cst_65 = arith.constant 1.06140542 : f32
    %105 = vector.broadcast %cst_65 : f32 to vector<16x128xf32>
    %106 = arith.mulf %105, %104 : vector<16x128xf32>
    %cst_66 = arith.constant -1.45315206 : f32
    %107 = vector.broadcast %cst_66 : f32 to vector<16x128xf32>
    %108 = arith.addf %106, %107 : vector<16x128xf32>
    %109 = arith.mulf %108, %104 : vector<16x128xf32>
    %cst_67 = arith.constant 1.42141378 : f32
    %110 = vector.broadcast %cst_67 : f32 to vector<16x128xf32>
    %111 = arith.addf %109, %110 : vector<16x128xf32>
    %112 = arith.mulf %111, %104 : vector<16x128xf32>
    %cst_68 = arith.constant -0.284496725 : f32
    %113 = vector.broadcast %cst_68 : f32 to vector<16x128xf32>
    %114 = arith.addf %112, %113 : vector<16x128xf32>
    %115 = arith.mulf %114, %104 : vector<16x128xf32>
    %cst_69 = arith.constant 0.254829586 : f32
    %116 = vector.broadcast %cst_69 : f32 to vector<16x128xf32>
    %117 = arith.addf %115, %116 : vector<16x128xf32>
    %118 = arith.mulf %117, %104 : vector<16x128xf32>
    %cst_70 = arith.constant 0.000000e+00 : f32
    %119 = vector.broadcast %cst_70 : f32 to vector<16x128xf32>
    %120 = arith.subf %119, %98 : vector<16x128xf32>
    %121 = arith.mulf %120, %98 : vector<16x128xf32>
    %122 = math.exp %121 : vector<16x128xf32>
    %123 = arith.mulf %118, %122 : vector<16x128xf32>
    %cst_71 = arith.constant 1.000000e+00 : f32
    %124 = vector.broadcast %cst_71 : f32 to vector<16x128xf32>
    %125 = arith.subf %124, %123 : vector<16x128xf32>
    %126 = arith.mulf %97, %125 : vector<16x128xf32>
    %cst_72 = arith.constant 1.000000e+00 : f32
    %127 = vector.broadcast %cst_72 : f32 to vector<16x128xf32>
    %128 = arith.addf %127, %126 : vector<16x128xf32>
    %129 = arith.mulf %90, %128 : vector<16x128xf32>
    %cst_73 = arith.constant dense<0.000000e+00> : vector<16x32xf32>
    %130 = tpu.matmul %129, %19, %cst_73 {dimension_numbers = #tpu.dot_dimension_numbers<[1], [0], [0], [1], [0, 0, 1, 1], [], []>} : vector<16x128xf32>, vector<128x32xf32>, vector<16x32xf32> -> vector<16x32xf32>
    %131 = vector.broadcast %20 : vector<1x32xf32> to vector<16x32xf32>
    %132 = arith.addf %130, %131 : vector<16x32xf32>
    %133 = arith.addf %132, %66 : vector<16x32xf32>
    %c0_74 = arith.constant 0 : index
    %c0_75 = arith.constant 0 : index
    %134 = vector.load %arg18[%c0_74, %c0_75] : memref<16x16xf32, #tpu.memory_space<vmem>>, vector<16x16xf32>
    %c0_76 = arith.constant 0 : index
    %c0_77 = arith.constant 0 : index
    %135 = vector.load %arg19[%c0_76, %c0_77] : memref<1x32xf32, #tpu.memory_space<vmem>>, vector<1x32xf32>
    %c0_78 = arith.constant 0 : index
    %c0_79 = arith.constant 0 : index
    %136 = vector.load %arg20[%c0_78, %c0_79] : memref<1x32xf32, #tpu.memory_space<vmem>>, vector<1x32xf32>
    %c0_80 = arith.constant 0 : index
    %c0_81 = arith.constant 0 : index
    %c0_82 = arith.constant 0 : index
    %137 = vector.load %arg21[%c0_80, %c0_81, %c0_82] : memref<2x32x16xf32, #tpu.memory_space<vmem>>, vector<2x32x16xf32>
    %c0_83 = arith.constant 0 : index
    %c0_84 = arith.constant 0 : index
    %c0_85 = arith.constant 0 : index
    %138 = vector.load %arg22[%c0_83, %c0_84, %c0_85] : memref<2x32x16xf32, #tpu.memory_space<vmem>>, vector<2x32x16xf32>
    %c0_86 = arith.constant 0 : index
    %c0_87 = arith.constant 0 : index
    %c0_88 = arith.constant 0 : index
    %139 = vector.load %arg23[%c0_86, %c0_87, %c0_88] : memref<2x32x16xf32, #tpu.memory_space<vmem>>, vector<2x32x16xf32>
    %c0_89 = arith.constant 0 : index
    %c0_90 = arith.constant 0 : index
    %c0_91 = arith.constant 0 : index
    %140 = vector.load %arg24[%c0_89, %c0_90, %c0_91] : memref<2x16x32xf32, #tpu.memory_space<vmem>>, vector<2x16x32xf32>
    %c0_92 = arith.constant 0 : index
    %c0_93 = arith.constant 0 : index
    %141 = vector.load %arg25[%c0_92, %c0_93] : memref<1x32xf32, #tpu.memory_space<vmem>>, vector<1x32xf32>
    %c0_94 = arith.constant 0 : index
    %c0_95 = arith.constant 0 : index
    %142 = vector.load %arg26[%c0_94, %c0_95] : memref<1x32xf32, #tpu.memory_space<vmem>>, vector<1x32xf32>
    %c0_96 = arith.constant 0 : index
    %c0_97 = arith.constant 0 : index
    %143 = vector.load %arg27[%c0_96, %c0_97] : memref<1x32xf32, #tpu.memory_space<vmem>>, vector<1x32xf32>
    %c0_98 = arith.constant 0 : index
    %c0_99 = arith.constant 0 : index
    %144 = vector.load %arg28[%c0_98, %c0_99] : memref<32x128xf32, #tpu.memory_space<vmem>>, vector<32x128xf32>
    %c0_100 = arith.constant 0 : index
    %c0_101 = arith.constant 0 : index
    %145 = vector.load %arg29[%c0_100, %c0_101] : memref<1x128xf32, #tpu.memory_space<vmem>>, vector<1x128xf32>
    %c0_102 = arith.constant 0 : index
    %c0_103 = arith.constant 0 : index
    %146 = vector.load %arg30[%c0_102, %c0_103] : memref<128x32xf32, #tpu.memory_space<vmem>>, vector<128x32xf32>
    %c0_104 = arith.constant 0 : index
    %c0_105 = arith.constant 0 : index
    %147 = vector.load %arg31[%c0_104, %c0_105] : memref<1x32xf32, #tpu.memory_space<vmem>>, vector<1x32xf32>
    %148 = arith.mulf %133, %133 : vector<16x32xf32>
    %cst_106 = arith.constant dense<0.000000e+00> : vector<32xf32>
    %149 = vector.multi_reduction <add>, %148, %cst_106 [0] : vector<16x32xf32> to vector<32xf32>
    %150 = vector.shape_cast %149 : vector<32xf32> to vector<1x32xf32>
    %151 = math.sqrt %150 : vector<1x32xf32>
    %cst_107 = arith.constant dense<0.000000e+00> : vector<1xf32>
    %152 = vector.multi_reduction <add>, %151, %cst_107 [1] : vector<1x32xf32> to vector<1xf32>
    %153 = vector.shape_cast %152 : vector<1xf32> to vector<1x1xf32>
    %cst_108 = arith.constant 3.200000e+01 : f32
    %154 = vector.broadcast %cst_108 : f32 to vector<1x1xf32>
    %155 = arith.divf %153, %154 : vector<1x1xf32>
    %cst_109 = arith.constant 9.99999997E-7 : f32
    %156 = vector.broadcast %cst_109 : f32 to vector<1x1xf32>
    %157 = arith.addf %155, %156 : vector<1x1xf32>
    %158 = vector.broadcast %157 : vector<1x1xf32> to vector<1x32xf32>
    %159 = arith.divf %151, %158 : vector<1x32xf32>
    %160 = vector.broadcast %159 : vector<1x32xf32> to vector<16x32xf32>
    %161 = arith.mulf %133, %160 : vector<16x32xf32>
    %162 = vector.broadcast %135 : vector<1x32xf32> to vector<16x32xf32>
    %163 = arith.mulf %162, %161 : vector<16x32xf32>
    %164 = vector.broadcast %136 : vector<1x32xf32> to vector<16x32xf32>
    %165 = arith.addf %163, %164 : vector<16x32xf32>
    %166 = arith.addf %165, %133 : vector<16x32xf32>
    %167 = vector.shape_cast %166 : vector<16x32xf32> to vector<1x16x32xf32>
    %168 = vector.shape_cast %167 : vector<1x16x32xf32> to vector<1x16x32xf32>
    %169 = vector.broadcast %168 : vector<1x16x32xf32> to vector<2x16x32xf32>
    "tpu.trace_start"() <{level = 10 : i32, message = "hlc,hcd->hld"}> : () -> ()
    %cst_110 = arith.constant dense<0.000000e+00> : vector<2x16x16xf32>
    %170 = tpu.matmul %169, %137, %cst_110 {dimension_numbers = #tpu.dot_dimension_numbers<[2], [1], [1], [2], [0, 0, 0, 1, 1, 2], [0], [0]>} : vector<2x16x32xf32>, vector<2x32x16xf32>, vector<2x16x16xf32> -> vector<2x16x16xf32>
    %cst_111 = arith.constant dense<0.000000e+00> : vector<2x16x16xf32>
    %171 = tpu.matmul %169, %138, %cst_111 {dimension_numbers = #tpu.dot_dimension_numbers<[2], [1], [1], [2], [0, 0, 0, 1, 1, 2], [0], [0]>} : vector<2x16x32xf32>, vector<2x32x16xf32>, vector<2x16x16xf32> -> vector<2x16x16xf32>
    %cst_112 = arith.constant dense<0.000000e+00> : vector<2x16x16xf32>
    %172 = tpu.matmul %169, %139, %cst_112 {dimension_numbers = #tpu.dot_dimension_numbers<[2], [1], [1], [2], [0, 0, 0, 1, 1, 2], [0], [0]>} : vector<2x16x32xf32>, vector<2x32x16xf32>, vector<2x16x16xf32> -> vector<2x16x16xf32>
    "tpu.trace_stop"() : () -> ()
    "tpu.trace_start"() <{level = 10 : i32, message = "hid,hjd->hij"}> : () -> ()
    %cst_113 = arith.constant dense<0.000000e+00> : vector<2x16x16xf32>
    %173 = tpu.matmul %170, %171, %cst_113 {dimension_numbers = #tpu.dot_dimension_numbers<[2], [2], [1], [1], [0, 0, 0, 1, 1, 1], [0], [0]>} : vector<2x16x16xf32>, vector<2x16x16xf32>, vector<2x16x16xf32> -> vector<2x16x16xf32>
    "tpu.trace_stop"() : () -> ()
    %cst_114 = arith.constant 2.500000e-01 : f32
    %174 = vector.broadcast %cst_114 : f32 to vector<2x16x16xf32>
    %175 = arith.mulf %173, %174 : vector<2x16x16xf32>
    %176 = vector.shape_cast %134 : vector<16x16xf32> to vector<1x16x16xf32>
    %177 = vector.broadcast %176 : vector<1x16x16xf32> to vector<2x16x16xf32>
    %178 = arith.addf %175, %177 : vector<2x16x16xf32>
    %cst_115 = arith.constant dense<0xFF800000> : vector<2x16xf32>
    %179 = vector.multi_reduction <maximumf>, %178, %cst_115 [2] : vector<2x16x16xf32> to vector<2x16xf32>
    %180 = vector.shape_cast %179 : vector<2x16xf32> to vector<2x16x1xf32>
    %181 = vector.broadcast %180 : vector<2x16x1xf32> to vector<2x16x16xf32>
    %182 = arith.subf %178, %181 : vector<2x16x16xf32>
    %183 = math.exp %182 : vector<2x16x16xf32>
    %cst_116 = arith.constant dense<0.000000e+00> : vector<2x16xf32>
    %184 = vector.multi_reduction <add>, %183, %cst_116 [2] : vector<2x16x16xf32> to vector<2x16xf32>
    %185 = vector.shape_cast %184 : vector<2x16xf32> to vector<2x16x1xf32>
    %186 = vector.broadcast %185 : vector<2x16x1xf32> to vector<2x16x16xf32>
    %187 = arith.divf %183, %186 : vector<2x16x16xf32>
    "tpu.trace_start"() <{level = 10 : i32, message = "hij,hjd->hid"}> : () -> ()
    %cst_117 = arith.constant dense<0.000000e+00> : vector<2x16x16xf32>
    %188 = tpu.matmul %187, %172, %cst_117 {dimension_numbers = #tpu.dot_dimension_numbers<[2], [1], [1], [2], [0, 0, 0, 1, 1, 2], [0], [0]>} : vector<2x16x16xf32>, vector<2x16x16xf32>, vector<2x16x16xf32> -> vector<2x16x16xf32>
    "tpu.trace_stop"() : () -> ()
    "tpu.trace_start"() <{level = 10 : i32, message = "hld,hdc->hlc"}> : () -> ()
    %cst_118 = arith.constant dense<0.000000e+00> : vector<2x16x32xf32>
    %189 = tpu.matmul %188, %140, %cst_118 {dimension_numbers = #tpu.dot_dimension_numbers<[2], [1], [1], [2], [0, 0, 0, 1, 1, 2], [0], [0]>} : vector<2x16x16xf32>, vector<2x16x32xf32>, vector<2x16x32xf32> -> vector<2x16x32xf32>
    "tpu.trace_stop"() : () -> ()
    %cst_119 = arith.constant dense<0.000000e+00> : vector<16x32xf32>
    %190 = vector.multi_reduction <add>, %189, %cst_119 [0] : vector<2x16x32xf32> to vector<16x32xf32>
    %191 = vector.broadcast %141 : vector<1x32xf32> to vector<16x32xf32>
    %192 = arith.addf %190, %191 : vector<16x32xf32>
    %193 = arith.addf %192, %133 : vector<16x32xf32>
    %194 = arith.mulf %193, %193 : vector<16x32xf32>
    %cst_120 = arith.constant dense<0.000000e+00> : vector<32xf32>
    %195 = vector.multi_reduction <add>, %194, %cst_120 [0] : vector<16x32xf32> to vector<32xf32>
    %196 = vector.shape_cast %195 : vector<32xf32> to vector<1x32xf32>
    %197 = math.sqrt %196 : vector<1x32xf32>
    %cst_121 = arith.constant dense<0.000000e+00> : vector<1xf32>
    %198 = vector.multi_reduction <add>, %197, %cst_121 [1] : vector<1x32xf32> to vector<1xf32>
    %199 = vector.shape_cast %198 : vector<1xf32> to vector<1x1xf32>
    %cst_122 = arith.constant 3.200000e+01 : f32
    %200 = vector.broadcast %cst_122 : f32 to vector<1x1xf32>
    %201 = arith.divf %199, %200 : vector<1x1xf32>
    %cst_123 = arith.constant 9.99999997E-7 : f32
    %202 = vector.broadcast %cst_123 : f32 to vector<1x1xf32>
    %203 = arith.addf %201, %202 : vector<1x1xf32>
    %204 = vector.broadcast %203 : vector<1x1xf32> to vector<1x32xf32>
    %205 = arith.divf %197, %204 : vector<1x32xf32>
    %206 = vector.broadcast %205 : vector<1x32xf32> to vector<16x32xf32>
    %207 = arith.mulf %193, %206 : vector<16x32xf32>
    %208 = vector.broadcast %142 : vector<1x32xf32> to vector<16x32xf32>
    %209 = arith.mulf %208, %207 : vector<16x32xf32>
    %210 = vector.broadcast %143 : vector<1x32xf32> to vector<16x32xf32>
    %211 = arith.addf %209, %210 : vector<16x32xf32>
    %212 = arith.addf %211, %193 : vector<16x32xf32>
    %cst_124 = arith.constant dense<0.000000e+00> : vector<16x128xf32>
    %213 = tpu.matmul %212, %144, %cst_124 {dimension_numbers = #tpu.dot_dimension_numbers<[1], [0], [0], [1], [0, 0, 1, 1], [], []>} : vector<16x32xf32>, vector<32x128xf32>, vector<16x128xf32> -> vector<16x128xf32>
    %214 = vector.broadcast %145 : vector<1x128xf32> to vector<16x128xf32>
    %215 = arith.addf %213, %214 : vector<16x128xf32>
    %cst_125 = arith.constant 5.000000e-01 : f32
    %216 = vector.broadcast %cst_125 : f32 to vector<16x128xf32>
    %217 = arith.mulf %216, %215 : vector<16x128xf32>
    %cst_126 = arith.constant 0.707106769 : f32
    %218 = vector.broadcast %cst_126 : f32 to vector<16x128xf32>
    %219 = arith.mulf %215, %218 : vector<16x128xf32>
    %cst_127 = arith.constant 0.000000e+00 : f32
    %220 = vector.broadcast %cst_127 : f32 to vector<16x128xf32>
    %221 = arith.cmpf oge, %219, %220 : vector<16x128xf32>
    %cst_128 = arith.constant 1.000000e+00 : f32
    %cst_129 = arith.constant -1.000000e+00 : f32
    %222 = vector.broadcast %cst_128 : f32 to vector<16x128xf32>
    %223 = vector.broadcast %cst_129 : f32 to vector<16x128xf32>
    %224 = arith.select %221, %222, %223 : vector<16x128xi1>, vector<16x128xf32>
    %225 = math.absf %219 : vector<16x128xf32>
    %cst_130 = arith.constant 0.327591091 : f32
    %226 = vector.broadcast %cst_130 : f32 to vector<16x128xf32>
    %227 = arith.mulf %226, %225 : vector<16x128xf32>
    %cst_131 = arith.constant 1.000000e+00 : f32
    %228 = vector.broadcast %cst_131 : f32 to vector<16x128xf32>
    %229 = arith.addf %228, %227 : vector<16x128xf32>
    %cst_132 = arith.constant 1.000000e+00 : f32
    %230 = vector.broadcast %cst_132 : f32 to vector<16x128xf32>
    %231 = arith.divf %230, %229 : vector<16x128xf32>
    %cst_133 = arith.constant 1.06140542 : f32
    %232 = vector.broadcast %cst_133 : f32 to vector<16x128xf32>
    %233 = arith.mulf %232, %231 : vector<16x128xf32>
    %cst_134 = arith.constant -1.45315206 : f32
    %234 = vector.broadcast %cst_134 : f32 to vector<16x128xf32>
    %235 = arith.addf %233, %234 : vector<16x128xf32>
    %236 = arith.mulf %235, %231 : vector<16x128xf32>
    %cst_135 = arith.constant 1.42141378 : f32
    %237 = vector.broadcast %cst_135 : f32 to vector<16x128xf32>
    %238 = arith.addf %236, %237 : vector<16x128xf32>
    %239 = arith.mulf %238, %231 : vector<16x128xf32>
    %cst_136 = arith.constant -0.284496725 : f32
    %240 = vector.broadcast %cst_136 : f32 to vector<16x128xf32>
    %241 = arith.addf %239, %240 : vector<16x128xf32>
    %242 = arith.mulf %241, %231 : vector<16x128xf32>
    %cst_137 = arith.constant 0.254829586 : f32
    %243 = vector.broadcast %cst_137 : f32 to vector<16x128xf32>
    %244 = arith.addf %242, %243 : vector<16x128xf32>
    %245 = arith.mulf %244, %231 : vector<16x128xf32>
    %cst_138 = arith.constant 0.000000e+00 : f32
    %246 = vector.broadcast %cst_138 : f32 to vector<16x128xf32>
    %247 = arith.subf %246, %225 : vector<16x128xf32>
    %248 = arith.mulf %247, %225 : vector<16x128xf32>
    %249 = math.exp %248 : vector<16x128xf32>
    %250 = arith.mulf %245, %249 : vector<16x128xf32>
    %cst_139 = arith.constant 1.000000e+00 : f32
    %251 = vector.broadcast %cst_139 : f32 to vector<16x128xf32>
    %252 = arith.subf %251, %250 : vector<16x128xf32>
    %253 = arith.mulf %224, %252 : vector<16x128xf32>
    %cst_140 = arith.constant 1.000000e+00 : f32
    %254 = vector.broadcast %cst_140 : f32 to vector<16x128xf32>
    %255 = arith.addf %254, %253 : vector<16x128xf32>
    %256 = arith.mulf %217, %255 : vector<16x128xf32>
    %cst_141 = arith.constant dense<0.000000e+00> : vector<16x32xf32>
    %257 = tpu.matmul %256, %146, %cst_141 {dimension_numbers = #tpu.dot_dimension_numbers<[1], [0], [0], [1], [0, 0, 1, 1], [], []>} : vector<16x128xf32>, vector<128x32xf32>, vector<16x32xf32> -> vector<16x32xf32>
    %258 = vector.broadcast %147 : vector<1x32xf32> to vector<16x32xf32>
    %259 = arith.addf %257, %258 : vector<16x32xf32>
    %260 = arith.addf %259, %193 : vector<16x32xf32>
    %cst_142 = arith.constant dense<0.000000e+00> : vector<32xf32>
    %261 = vector.multi_reduction <add>, %260, %cst_142 [0] : vector<16x32xf32> to vector<32xf32>
    %262 = vector.shape_cast %261 : vector<32xf32> to vector<1x32xf32>
    %cst_143 = arith.constant 1.600000e+01 : f32
    %263 = vector.broadcast %cst_143 : f32 to vector<1x32xf32>
    %264 = arith.divf %262, %263 : vector<1x32xf32>
    %cst_144 = arith.constant dense<0.000000e+00> : vector<1xf32>
    %265 = vector.multi_reduction <add>, %264, %cst_144 [1] : vector<1x32xf32> to vector<1xf32>
    %266 = vector.shape_cast %265 : vector<1xf32> to vector<1x1xf32>
    %cst_145 = arith.constant 3.200000e+01 : f32
    %267 = vector.broadcast %cst_145 : f32 to vector<1x1xf32>
    %268 = arith.divf %266, %267 : vector<1x1xf32>
    %269 = vector.broadcast %268 : vector<1x1xf32> to vector<1x32xf32>
    %270 = arith.subf %264, %269 : vector<1x32xf32>
    %271 = arith.mulf %270, %270 : vector<1x32xf32>
    %cst_146 = arith.constant dense<0.000000e+00> : vector<1xf32>
    %272 = vector.multi_reduction <add>, %271, %cst_146 [1] : vector<1x32xf32> to vector<1xf32>
    %273 = vector.shape_cast %272 : vector<1xf32> to vector<1x1xf32>
    %cst_147 = arith.constant 3.200000e+01 : f32
    %274 = vector.broadcast %cst_147 : f32 to vector<1x1xf32>
    %275 = arith.divf %273, %274 : vector<1x1xf32>
    %276 = vector.broadcast %268 : vector<1x1xf32> to vector<1x32xf32>
    %277 = arith.subf %264, %276 : vector<1x32xf32>
    %cst_148 = arith.constant 9.99999974E-6 : f32
    %278 = vector.broadcast %cst_148 : f32 to vector<1x1xf32>
    %279 = arith.addf %275, %278 : vector<1x1xf32>
    %280 = math.rsqrt %279 : vector<1x1xf32>
    %281 = vector.broadcast %280 : vector<1x1xf32> to vector<1x32xf32>
    %282 = arith.mulf %277, %281 : vector<1x32xf32>
    %c0_149 = arith.constant 0 : index
    %c0_150 = arith.constant 0 : index
    %283 = vector.load %arg32[%c0_149, %c0_150] : memref<1x32xf32, #tpu.memory_space<vmem>>, vector<1x32xf32>
    %284 = arith.mulf %282, %283 : vector<1x32xf32>
    %c0_151 = arith.constant 0 : index
    %c0_152 = arith.constant 0 : index
    %285 = vector.load %arg33[%c0_151, %c0_152] : memref<1x32xf32, #tpu.memory_space<vmem>>, vector<1x32xf32>
    %286 = arith.addf %284, %285 : vector<1x32xf32>
    %c0_153 = arith.constant 0 : index
    %c0_154 = arith.constant 0 : index
    %287 = vector.load %arg34[%c0_153, %c0_154] : memref<32x10xf32, #tpu.memory_space<vmem>>, vector<32x10xf32>
    %cst_155 = arith.constant dense<0.000000e+00> : vector<1x10xf32>
    %288 = tpu.matmul %286, %287, %cst_155 {dimension_numbers = #tpu.dot_dimension_numbers<[1], [0], [0], [1], [0, 0, 1, 1], [], []>} : vector<1x32xf32>, vector<32x10xf32>, vector<1x10xf32> -> vector<1x10xf32>
    %c0_156 = arith.constant 0 : index
    %c0_157 = arith.constant 0 : index
    %289 = vector.load %arg35[%c0_156, %c0_157] : memref<1x10xf32, #tpu.memory_space<vmem>>, vector<1x10xf32>
    %290 = arith.addf %288, %289 : vector<1x10xf32>
    %c0_158 = arith.constant 0 : index
    %c0_159 = arith.constant 0 : index
    %c0_160 = arith.constant 0 : index
    %291 = vector.load %arg36[%c0_158, %c0_159, %c0_160] : memref<1x1x10xf32, #tpu.memory_space<vmem>>, vector<1x1x10xf32>
    %292 = vector.shape_cast %291 : vector<1x1x10xf32> to vector<1x10xf32>
    %293 = vector.shape_cast %290 : vector<1x10xf32> to vector<1x1x10xf32>
    tpu.vector_store %arg36[%c0_158, %c0_159, %c0_160], %293 {strides = array<i32>} : memref<1x1x10xf32, #tpu.memory_space<vmem>>, vector<1x1x10xf32>,
    return
  }
  func.func @transform_0(%arg0: i32) -> (i32, i32, i32) {
    %c0_i32 = arith.constant 0 : i32
    %c0_i32_0 = arith.constant 0 : i32
    %c0_i32_1 = arith.constant 0 : i32
    return %arg0, %c0_i32, %c0_i32_0 : i32, i32, i32
  }
  func.func @transform_1(%arg0: i32) -> (i32, i32) {
    %c0_i32 = arith.constant 0 : i32
    %c0_i32_0 = arith.constant 0 : i32
    %c0_i32_1 = arith.constant 0 : i32
    return %c0_i32, %c0_i32_0 : i32, i32
  }
  func.func @transform_2(%arg0: i32) -> (i32, i32) {
    %c0_i32 = arith.constant 0 : i32
    %c0_i32_0 = arith.constant 0 : i32
    %c0_i32_1 = arith.constant 0 : i32
    return %c0_i32, %c0_i32_0 : i32, i32
  }
  func.func @transform_3(%arg0: i32) -> (i32, i32) {
    %c0_i32 = arith.constant 0 : i32
    %c0_i32_0 = arith.constant 0 : i32
    %c0_i32_1 = arith.constant 0 : i32
    return %c0_i32, %c0_i32_0 : i32, i32
  }
  func.func @transform_4(%arg0: i32) -> (i32, i32) {
    %c0_i32 = arith.constant 0 : i32
    %c0_i32_0 = arith.constant 0 : i32
    %c0_i32_1 = arith.constant 0 : i32
    return %c0_i32, %c0_i32_0 : i32, i32
  }
  func.func @transform_5(%arg0: i32) -> (i32, i32) {
    %c0_i32 = arith.constant 0 : i32
    %c0_i32_0 = arith.constant 0 : i32
    %c0_i32_1 = arith.constant 0 : i32
    return %c0_i32, %c0_i32_0 : i32, i32
  }
  func.func @transform_6(%arg0: i32) -> (i32, i32, i32) {
    %c0_i32 = arith.constant 0 : i32
    %c0_i32_0 = arith.constant 0 : i32
    %c0_i32_1 = arith.constant 0 : i32
    %c0_i32_2 = arith.constant 0 : i32
    return %c0_i32, %c0_i32_0, %c0_i32_1 : i32, i32, i32
  }
  func.func @transform_7(%arg0: i32) -> (i32, i32, i32) {
    %c0_i32 = arith.constant 0 : i32
    %c0_i32_0 = arith.constant 0 : i32
    %c0_i32_1 = arith.constant 0 : i32
    %c0_i32_2 = arith.constant 0 : i32
    return %c0_i32, %c0_i32_0, %c0_i32_1 : i32, i32, i32
  }
  func.func @transform_8(%arg0: i32) -> (i32, i32, i32) {
    %c0_i32 = arith.constant 0 : i32
    %c0_i32_0 = arith.constant 0 : i32
    %c0_i32_1 = arith.constant 0 : i32
    %c0_i32_2 = arith.constant 0 : i32
    return %c0_i32, %c0_i32_0, %c0_i32_1 : i32, i32, i32
  }
  func.func @transform_9(%arg0: i32) -> (i32, i32, i32) {
    %c0_i32 = arith.constant 0 : i32
    %c0_i32_0 = arith.constant 0 : i32
    %c0_i32_1 = arith.constant 0 : i32
    %c0_i32_2 = arith.constant 0 : i32
    return %c0_i32, %c0_i32_0, %c0_i32_1 : i32, i32, i32
  }
  func.func @transform_10(%arg0: i32) -> (i32, i32) {
    %c0_i32 = arith.constant 0 : i32
    %c0_i32_0 = arith.constant 0 : i32
    %c0_i32_1 = arith.constant 0 : i32
    return %c0_i32, %c0_i32_0 : i32, i32
  }
  func.func @transform_11(%arg0: i32) -> (i32, i32) {
    %c0_i32 = arith.constant 0 : i32
    %c0_i32_0 = arith.constant 0 : i32
    %c0_i32_1 = arith.constant 0 : i32
    return %c0_i32, %c0_i32_0 : i32, i32
  }
  func.func @transform_12(%arg0: i32) -> (i32, i32) {
    %c0_i32 = arith.constant 0 : i32
    %c0_i32_0 = arith.constant 0 : i32
    %c0_i32_1 = arith.constant 0 : i32
    return %c0_i32, %c0_i32_0 : i32, i32
  }
  func.func @transform_13(%arg0: i32) -> (i32, i32) {
    %c0_i32 = arith.constant 0 : i32
    %c0_i32_0 = arith.constant 0 : i32
    %c0_i32_1 = arith.constant 0 : i32
    return %c0_i32, %c0_i32_0 : i32, i32
  }
  func.func @transform_14(%arg0: i32) -> (i32, i32) {
    %c0_i32 = arith.constant 0 : i32
    %c0_i32_0 = arith.constant 0 : i32
    %c0_i32_1 = arith.constant 0 : i32
    return %c0_i32, %c0_i32_0 : i32, i32
  }
  func.func @transform_15(%arg0: i32) -> (i32, i32) {
    %c0_i32 = arith.constant 0 : i32
    %c0_i32_0 = arith.constant 0 : i32
    %c0_i32_1 = arith.constant 0 : i32
    return %c0_i32, %c0_i32_0 : i32, i32
  }
  func.func @transform_16(%arg0: i32) -> (i32, i32) {
    %c0_i32 = arith.constant 0 : i32
    %c0_i32_0 = arith.constant 0 : i32
    %c0_i32_1 = arith.constant 0 : i32
    return %c0_i32, %c0_i32_0 : i32, i32
  }
  func.func @transform_17(%arg0: i32) -> (i32, i32) {
    %c0_i32 = arith.constant 0 : i32
    %c0_i32_0 = arith.constant 0 : i32
    %c0_i32_1 = arith.constant 0 : i32
    return %c0_i32, %c0_i32_0 : i32, i32
  }
  func.func @transform_18(%arg0: i32) -> (i32, i32) {
    %c0_i32 = arith.constant 0 : i32
    %c0_i32_0 = arith.constant 0 : i32
    %c0_i32_1 = arith.constant 0 : i32
    return %c0_i32, %c0_i32_0 : i32, i32
  }
  func.func @transform_19(%arg0: i32) -> (i32, i32) {
    %c0_i32 = arith.constant 0 : i32
    %c0_i32_0 = arith.constant 0 : i32
    %c0_i32_1 = arith.constant 0 : i32
    return %c0_i32, %c0_i32_0 : i32, i32
  }
  func.func @transform_20(%arg0: i32) -> (i32, i32, i32) {
    %c0_i32 = arith.constant 0 : i32
    %c0_i32_0 = arith.constant 0 : i32
    %c0_i32_1 = arith.constant 0 : i32
    %c0_i32_2 = arith.constant 0 : i32
    return %c0_i32, %c0_i32_0, %c0_i32_1 : i32, i32, i32
  }
  func.func @transform_21(%arg0: i32) -> (i32, i32, i32) {
    %c0_i32 = arith.constant 0 : i32
    %c0_i32_0 = arith.constant 0 : i32
    %c0_i32_1 = arith.constant 0 : i32
    %c0_i32_2 = arith.constant 0 : i32
    return %c0_i32, %c0_i32_0, %c0_i32_1 : i32, i32, i32
  }
  func.func @transform_22(%arg0: i32) -> (i32, i32, i32) {
    %c0_i32 = arith.constant 0 : i32
    %c0_i32_0 = arith.constant 0 : i32
    %c0_i32_1 = arith.constant 0 : i32
    %c0_i32_2 = arith.constant 0 : i32
    return %c0_i32, %c0_i32_0, %c0_i32_1 : i32, i32, i32
  }
  func.func @transform_23(%arg0: i32) -> (i32, i32, i32) {
    %c0_i32 = arith.constant 0 : i32
    %c0_i32_0 = arith.constant 0 : i32
    %c0_i32_1 = arith.constant 0 : i32
    %c0_i32_2 = arith.constant 0 : i32
    return %c0_i32, %c0_i32_0, %c0_i32_1 : i32, i32, i32
  }
  func.func @transform_24(%arg0: i32) -> (i32, i32) {
    %c0_i32 = arith.constant 0 : i32
    %c0_i32_0 = arith.constant 0 : i32
    %c0_i32_1 = arith.constant 0 : i32
    return %c0_i32, %c0_i32_0 : i32, i32
  }
  func.func @transform_25(%arg0: i32) -> (i32, i32) {
    %c0_i32 = arith.constant 0 : i32
    %c0_i32_0 = arith.constant 0 : i32
    %c0_i32_1 = arith.constant 0 : i32
    return %c0_i32, %c0_i32_0 : i32, i32
  }
  func.func @transform_26(%arg0: i32) -> (i32, i32) {
    %c0_i32 = arith.constant 0 : i32
    %c0_i32_0 = arith.constant 0 : i32
    %c0_i32_1 = arith.constant 0 : i32
    return %c0_i32, %c0_i32_0 : i32, i32
  }
  func.func @transform_27(%arg0: i32) -> (i32, i32) {
    %c0_i32 = arith.constant 0 : i32
    %c0_i32_0 = arith.constant 0 : i32
    %c0_i32_1 = arith.constant 0 : i32
    return %c0_i32, %c0_i32_0 : i32, i32
  }
  func.func @transform_28(%arg0: i32) -> (i32, i32) {
    %c0_i32 = arith.constant 0 : i32
    %c0_i32_0 = arith.constant 0 : i32
    %c0_i32_1 = arith.constant 0 : i32
    return %c0_i32, %c0_i32_0 : i32, i32
  }
  func.func @transform_29(%arg0: i32) -> (i32, i32) {
    %c0_i32 = arith.constant 0 : i32
    %c0_i32_0 = arith.constant 0 : i32
    %c0_i32_1 = arith.constant 0 : i32
    return %c0_i32, %c0_i32_0 : i32, i32
  }
  func.func @transform_30(%arg0: i32) -> (i32, i32) {
    %c0_i32 = arith.constant 0 : i32
    %c0_i32_0 = arith.constant 0 : i32
    %c0_i32_1 = arith.constant 0 : i32
    return %c0_i32, %c0_i32_0 : i32, i32
  }
  func.func @transform_31(%arg0: i32) -> (i32, i32) {
    %c0_i32 = arith.constant 0 : i32
    %c0_i32_0 = arith.constant 0 : i32
    %c0_i32_1 = arith.constant 0 : i32
    return %c0_i32, %c0_i32_0 : i32, i32
  }
  func.func @transform_32(%arg0: i32) -> (i32, i32) {
    %c0_i32 = arith.constant 0 : i32
    %c0_i32_0 = arith.constant 0 : i32
    %c0_i32_1 = arith.constant 0 : i32
    return %c0_i32, %c0_i32_0 : i32, i32
  }
  func.func @transform_33(%arg0: i32) -> (i32, i32) {
    %c0_i32 = arith.constant 0 : i32
    %c0_i32_0 = arith.constant 0 : i32
    %c0_i32_1 = arith.constant 0 : i32
    return %c0_i32, %c0_i32_0 : i32, i32
  }
  func.func @transform_34(%arg0: i32) -> (i32, i32) {
    %c0_i32 = arith.constant 0 : i32
    %c0_i32_0 = arith.constant 0 : i32
    %c0_i32_1 = arith.constant 0 : i32
    return %c0_i32, %c0_i32_0 : i32, i32
  }
  func.func @transform_35(%arg0: i32) -> (i32, i32, i32) {
    %c0_i32 = arith.constant 0 : i32
    %c0_i32_0 = arith.constant 0 : i32
    %c0_i32_1 = arith.constant 0 : i32
    return %arg0, %c0_i32, %c0_i32_0 : i32, i32, i32
  }
}

</mosaic_0001>

<llo_original>
// kernel: swin_forward.1
$region0: #{swin_forward.1}
  #allocation0 [shape = 'u32[]', space=smem, size = 0x4, offset = 0x4, fixed_abs, tag = 'smem constant byte address 0x4 - core index']
  #allocation1 [shape = 'u32[72,128]{1,0:T(1,128)}', space=vmem, size = 0x9000, scoped, tag = 'internal scratch']
  %s0 = inlined_call_operand.smem [shape: u32[36], index: -1, kind: input, shape index: {}]
  %s1 = sld [smem:[%s0]]
  %s2 = scalar_lea.smem %s0, 1
  %s3 = sld [smem:[%s2]]
  %s4 = scalar_lea.smem %s0, 2
  %s5 = sld [smem:[%s4]]
  %s6 = scalar_lea.smem %s0, 3
  %s7 = sld [smem:[%s6]]
  %s8 = scalar_lea.smem %s0, 4
  %s9 = sld [smem:[%s8]]
  %s10 = scalar_lea.smem %s0, 5
  %s11 = sld [smem:[%s10]]
  %s12 = scalar_lea.smem %s0, 6
  %s13 = sld [smem:[%s12]]
  %s14 = scalar_lea.smem %s0, 7
  %s15 = sld [smem:[%s14]]
  %s16 = scalar_lea.smem %s0, 8
  %s17 = sld [smem:[%s16]]
  %s18 = scalar_lea.smem %s0, 9
  %s19 = sld [smem:[%s18]]
  %s20 = scalar_lea.smem %s0, 10
  %s21 = sld [smem:[%s20]]
  %s22 = scalar_lea.smem %s0, 11
  %s23 = sld [smem:[%s22]]
  %s24 = scalar_lea.smem %s0, 12
  %s25 = sld [smem:[%s24]]
  %s26 = scalar_lea.smem %s0, 13
  %s27 = sld [smem:[%s26]]
  %s28 = scalar_lea.smem %s0, 14
  %s29 = sld [smem:[%s28]]
  %s30 = scalar_lea.smem %s0, 15
  %s31 = sld [smem:[%s30]]
  %s32 = scalar_lea.smem %s0, 16
  %s33 = sld [smem:[%s32]]
  %s34 = scalar_lea.smem %s0, 17
  %s35 = sld [smem:[%s34]]
  %s36 = scalar_lea.smem %s0, 18
  %s37 = sld [smem:[%s36]]
  %s38 = scalar_lea.smem %s0, 19
  %s39 = sld [smem:[%s38]]
  %s40 = scalar_lea.smem %s0, 20
  %s41 = sld [smem:[%s40]]
  %s42 = scalar_lea.smem %s0, 21
  %s43 = sld [smem:[%s42]]
  %s44 = scalar_lea.smem %s0, 22
  %s45 = sld [smem:[%s44]]
  %s46 = scalar_lea.smem %s0, 23
  %s47 = sld [smem:[%s46]]
  %s48 = scalar_lea.smem %s0, 24
  %s49 = sld [smem:[%s48]]
  %s50 = scalar_lea.smem %s0, 25
  %s51 = sld [smem:[%s50]]
  %s52 = scalar_lea.smem %s0, 26
  %s53 = sld [smem:[%s52]]
  %s54 = scalar_lea.smem %s0, 27
  %s55 = sld [smem:[%s54]]
  %s56 = scalar_lea.smem %s0, 28
  %s57 = sld [smem:[%s56]]
  %s58 = scalar_lea.smem %s0, 29
  %s59 = sld [smem:[%s58]]
  %s60 = scalar_lea.smem %s0, 30
  %s61 = sld [smem:[%s60]]
  %s62 = scalar_lea.smem %s0, 31
  %s63 = sld [smem:[%s62]]
  %s64 = scalar_lea.smem %s0, 32
  %s65 = sld [smem:[%s64]]
  %s66 = scalar_lea.smem %s0, 33
  %s67 = sld [smem:[%s66]]
  %s68 = scalar_lea.smem %s0, 34
  %s69 = sld [smem:[%s68]]
  %s70 = scalar_lea.smem %s0, 35
  %s71 = sld [smem:[%s70]]
  %s72 = sld [smem:[#allocation0]]
  $region173: #{swin_forward.1} parent=0
    _
  %s74 = ssub.s32 1, %s72
  %s75 = scalar_select 0, %s74, %s72
  $region1: #{swin_forward.1} parent=0
    #allocation2 [shape = 'u8[1024]{0}', space=vmem, size = 0x400, scoped, tag = 'output window, operand 0']
    #allocation3 [shape = 's32[2]{0}', space=sflag, size = 0x8, scoped, tag = 'scoped memory for swin_forward.1']
    %76 = vsyncpa [#allocation3], 0
    %s77 = scalar_lea.sflag [#allocation3], 1
    %78 = vsyncpa %s77, 0
    loop: start=0, step=1, limit=4
    $region2: #{swin_forward.1} parent=1 // loop_pre_header
      _
    $region3: #{swin_forward.1} parent=1 // loop_header
      %s80 = sphi 0, %s84
      %p81 = scmp.ge.s32.totalorder %s80, 4
      %s90 = sphi 0, %s92
      %s93 = sphi 0, %s90
      %s94 = sphi 0, %s93
      %s110 = sphi 0, %s94
      %s114 = sphi 0, %s114
      %s116 = sphi 0, %s114
      %s117 = sphi 0, %s116
      %s131 = sphi 0, %s117
      %s135 = sphi 0, %s135
      %s137 = sphi 0, %s135
      %s138 = sphi 0, %s137
      %s152 = sphi 0, %s138
      %s156 = sphi 0, %s156
      %s158 = sphi 0, %s156
      %s159 = sphi 0, %s158
      %s173 = sphi 0, %s159
      %s177 = sphi 0, %s177
      %s179 = sphi 0, %s177
      %s180 = sphi 0, %s179
      %s194 = sphi 0, %s180
      %s198 = sphi 0, %s198
      %s200 = sphi 0, %s198
      %s201 = sphi 0, %s200
      %s215 = sphi 0, %s201
      %s219 = sphi 0, %s219
      %s221 = sphi 0, %s219
      %s222 = sphi 0, %s221
      %s236 = sphi 0, %s222
      %s240 = sphi 0, %s240
      %s242 = sphi 0, %s240
      %s243 = sphi 0, %s242
      %s257 = sphi 0, %s243
      %s261 = sphi 0, %s261
      %s263 = sphi 0, %s261
      %s264 = sphi 0, %s263
      %s278 = sphi 0, %s264
      %s282 = sphi 0, %s282
      %s284 = sphi 0, %s282
      %s285 = sphi 0, %s284
      %s299 = sphi 0, %s285
      %s303 = sphi 0, %s303
      %s305 = sphi 0, %s303
      %s306 = sphi 0, %s305
      %s320 = sphi 0, %s306
      %s324 = sphi 0, %s324
      %s326 = sphi 0, %s324
      %s327 = sphi 0, %s326
      %s341 = sphi 0, %s327
      %s345 = sphi 0, %s345
      %s347 = sphi 0, %s345
      %s348 = sphi 0, %s347
      %s362 = sphi 0, %s348
      %s366 = sphi 0, %s366
      %s368 = sphi 0, %s366
      %s369 = sphi 0, %s368
      %s383 = sphi 0, %s369
      %s387 = sphi 0, %s387
      %s389 = sphi 0, %s387
      %s390 = sphi 0, %s389
      %s404 = sphi 0, %s390
      %s408 = sphi 0, %s408
      %s410 = sphi 0, %s408
      %s411 = sphi 0, %s410
      %s425 = sphi 0, %s411
      %s429 = sphi 0, %s429
      %s431 = sphi 0, %s429
      %s432 = sphi 0, %s431
      %s446 = sphi 0, %s432
      %s450 = sphi 0, %s450
      %s452 = sphi 0, %s450
      %s453 = sphi 0, %s452
      %s467 = sphi 0, %s453
      %s471 = sphi 0, %s471
      %s473 = sphi 0, %s471
      %s474 = sphi 0, %s473
      %s488 = sphi 0, %s474
      %s492 = sphi 0, %s492
      %s494 = sphi 0, %s492
      %s495 = sphi 0, %s494
      %s509 = sphi 0, %s495
      %s513 = sphi 0, %s513
      %s515 = sphi 0, %s513
      %s516 = sphi 0, %s515
      %s530 = sphi 0, %s516
      %s534 = sphi 0, %s534
      %s536 = sphi 0, %s534
      %s537 = sphi 0, %s536
      %s551 = sphi 0, %s537
      %s555 = sphi 0, %s555
      %s557 = sphi 0, %s555
      %s558 = sphi 0, %s557
      %s572 = sphi 0, %s558
      %s576 = sphi 0, %s576
      %s578 = sphi 0, %s576
      %s579 = sphi 0, %s578
      %s593 = sphi 0, %s579
      %s597 = sphi 0, %s597
      %s599 = sphi 0, %s597
      %s600 = sphi 0, %s599
      %s614 = sphi 0, %s600
      %s618 = sphi 0, %s618
      %s620 = sphi 0, %s618
      %s621 = sphi 0, %s620
      %s635 = sphi 0, %s621
      %s639 = sphi 0, %s639
      %s641 = sphi 0, %s639
      %s642 = sphi 0, %s641
      %s656 = sphi 0, %s642
      %s660 = sphi 0, %s660
      %s662 = sphi 0, %s660
      %s663 = sphi 0, %s662
      %s677 = sphi 0, %s663
      %s681 = sphi 0, %s681
      %s683 = sphi 0, %s681
      %s684 = sphi 0, %s683
      %s698 = sphi 0, %s684
      %s702 = sphi 0, %s702
      %s704 = sphi 0, %s702
      %s705 = sphi 0, %s704
      %s719 = sphi 0, %s705
      %s723 = sphi 0, %s723
      %s725 = sphi 0, %s723
      %s726 = sphi 0, %s725
      %s740 = sphi 0, %s726
      %s744 = sphi 0, %s744
      %s746 = sphi 0, %s744
      %s747 = sphi 0, %s746
      %s761 = sphi 0, %s747
      %s765 = sphi 0, %s765
      %s767 = sphi 0, %s765
      %s768 = sphi 0, %s767
      %s782 = sphi 0, %s768
      %s786 = sphi 0, %s786
      %s788 = sphi 0, %s786
      %s789 = sphi 0, %s788
      %s803 = sphi 0, %s789
      %s807 = sphi 0, %s807
      %s809 = sphi 0, %s807
      %s810 = sphi 0, %s809
      %s824 = sphi 0, %s810
      %s830 = sphi 0, %s832
      %s833 = sphi 0, %s830
      %s834 = sphi 0, %s833
      %s850 = sphi 0, %s834
    $region4: #{swin_forward.1} parent=1 // loop_header_branch
      %83 = sbr.rel (%p81) target = $region8
    $region5: #{swin_forward.1} parent=1 // loop_body
      %s85 = ssub.s32 %s80, 1
      %s86 = ssub.s32 %s80, 2
      %s87 = sadd.s32 %s80, 1
      %s88 = ssub.s32 %s80, %s87
      %p89 = scmp.eq.s32.totalorder %s88, 0
      %s91 = sadd.s32 %s90, 1
      %s92 = scalar_select %p89, %s90, %s91
      %p95 = pneg %p89
      %p96 = scmp.eq.s32.totalorder %s80, 1
      %p97 = por %p95, %p96
      %p98 = scmp.ne.s32.totalorder %s90, %s93
      %p99 = scmp.eq.s32.totalorder %s80, 0
      %p100 = por %p98, %p99
      %p101 = scmp.ne.s32.totalorder %s90, %s93
      %p102 = scmp.eq.s32.totalorder %s85, 1
      %p103 = por %p101, %p102
      %p104 = scmp.ne.s32.totalorder %s93, %s94
      %p105 = scmp.eq.s32.totalorder %s85, 0
      %p106 = por %p104, %p105
      %p107 = scmp.ne.s32.totalorder %s93, %s94
      %p108 = scmp.eq.s32.totalorder %s86, 1
      %p109 = por %p107, %p108
      %p111 = scmp.ne.s32.totalorder %s94, %s110
      %p112 = scmp.eq.s32.totalorder %s86, 0
      %p113 = por %p111, %p112
      %s115 = sadd.s32 %s114, 1
      %p118 = scmp.eq.s32.totalorder %s80, 1
      %p119 = scmp.ne.s32.totalorder %s114, %s116
      %p120 = scmp.eq.s32.totalorder %s80, 0
      %p121 = por %p119, %p120
      %p122 = scmp.ne.s32.totalorder %s114, %s116
      %p123 = scmp.eq.s32.totalorder %s85, 1
      %p124 = por %p122, %p123
      %p125 = scmp.ne.s32.totalorder %s116, %s117
      %p126 = scmp.eq.s32.totalorder %s85, 0
      %p127 = por %p125, %p126
      %p128 = scmp.ne.s32.totalorder %s116, %s117
      %p129 = scmp.eq.s32.totalorder %s86, 1
      %p130 = por %p128, %p129
      %p132 = scmp.ne.s32.totalorder %s117, %s131
      %p133 = scmp.eq.s32.totalorder %s86, 0
      %p134 = por %p132, %p133
      %s136 = sadd.s32 %s135, 1
      %p139 = scmp.eq.s32.totalorder %s80, 1
      %p140 = scmp.ne.s32.totalorder %s135, %s137
      %p141 = scmp.eq.s32.totalorder %s80, 0
      %p142 = por %p140, %p141
      %p143 = scmp.ne.s32.totalorder %s135, %s137
      %p144 = scmp.eq.s32.totalorder %s85, 1
      %p145 = por %p143, %p144
      %p146 = scmp.ne.s32.totalorder %s137, %s138
      %p147 = scmp.eq.s32.totalorder %s85, 0
      %p148 = por %p146, %p147
      %p149 = scmp.ne.s32.totalorder %s137, %s138
      %p150 = scmp.eq.s32.totalorder %s86, 1
      %p151 = por %p149, %p150
      %p153 = scmp.ne.s32.totalorder %s138, %s152
      %p154 = scmp.eq.s32.totalorder %s86, 0
      %p155 = por %p153, %p154
      %s157 = sadd.s32 %s156, 1
      %p160 = scmp.eq.s32.totalorder %s80, 1
      %p161 = scmp.ne.s32.totalorder %s156, %s158
      %p162 = scmp.eq.s32.totalorder %s80, 0
      %p163 = por %p161, %p162
      %p164 = scmp.ne.s32.totalorder %s156, %s158
      %p165 = scmp.eq.s32.totalorder %s85, 1
      %p166 = por %p164, %p165
      %p167 = scmp.ne.s32.totalorder %s158, %s159
      %p168 = scmp.eq.s32.totalorder %s85, 0
      %p169 = por %p167, %p168
      %p170 = scmp.ne.s32.totalorder %s158, %s159
      %p171 = scmp.eq.s32.totalorder %s86, 1
      %p172 = por %p170, %p171
      %p174 = scmp.ne.s32.totalorder %s159, %s173
      %p175 = scmp.eq.s32.totalorder %s86, 0
      %p176 = por %p174, %p175
      %s178 = sadd.s32 %s177, 1
      %p181 = scmp.eq.s32.totalorder %s80, 1
      %p182 = scmp.ne.s32.totalorder %s177, %s179
      %p183 = scmp.eq.s32.totalorder %s80, 0
      %p184 = por %p182, %p183
      %p185 = scmp.ne.s32.totalorder %s177, %s179
      %p186 = scmp.eq.s32.totalorder %s85, 1
      %p187 = por %p185, %p186
      %p188 = scmp.ne.s32.totalorder %s179, %s180
      %p189 = scmp.eq.s32.totalorder %s85, 0
      %p190 = por %p188, %p189
      %p191 = scmp.ne.s32.totalorder %s179, %s180
      %p192 = scmp.eq.s32.totalorder %s86, 1
      %p193 = por %p191, %p192
      %p195 = scmp.ne.s32.totalorder %s180, %s194
      %p196 = scmp.eq.s32.totalorder %s86, 0
      %p197 = por %p195, %p196
      %s199 = sadd.s32 %s198, 1
      %p202 = scmp.eq.s32.totalorder %s80, 1
      %p203 = scmp.ne.s32.totalorder %s198, %s200
      %p204 = scmp.eq.s32.totalorder %s80, 0
      %p205 = por %p203, %p204
      %p206 = scmp.ne.s32.totalorder %s198, %s200
      %p207 = scmp.eq.s32.totalorder %s85, 1
      %p208 = por %p206, %p207
      %p209 = scmp.ne.s32.totalorder %s200, %s201
      %p210 = scmp.eq.s32.totalorder %s85, 0
      %p211 = por %p209, %p210
      %p212 = scmp.ne.s32.totalorder %s200, %s201
      %p213 = scmp.eq.s32.totalorder %s86, 1
      %p214 = por %p212, %p213
      %p216 = scmp.ne.s32.totalorder %s201, %s215
      %p217 = scmp.eq.s32.totalorder %s86, 0
      %p218 = por %p216, %p217
      %s220 = sadd.s32 %s219, 1
      %p223 = scmp.eq.s32.totalorder %s80, 1
      %p224 = scmp.ne.s32.totalorder %s219, %s221
      %p225 = scmp.eq.s32.totalorder %s80, 0
      %p226 = por %p224, %p225
      %p227 = scmp.ne.s32.totalorder %s219, %s221
      %p228 = scmp.eq.s32.totalorder %s85, 1
      %p229 = por %p227, %p228
      %p230 = scmp.ne.s32.totalorder %s221, %s222
      %p231 = scmp.eq.s32.totalorder %s85, 0
      %p232 = por %p230, %p231
      %p233 = scmp.ne.s32.totalorder %s221, %s222
      %p234 = scmp.eq.s32.totalorder %s86, 1
      %p235 = por %p233, %p234
      %p237 = scmp.ne.s32.totalorder %s222, %s236
      %p238 = scmp.eq.s32.totalorder %s86, 0
      %p239 = por %p237, %p238
      %s241 = sadd.s32 %s240, 1
      %p244 = scmp.eq.s32.totalorder %s80, 1
      %p245 = scmp.ne.s32.totalorder %s240, %s242
      %p246 = scmp.eq.s32.totalorder %s80, 0
      %p247 = por %p245, %p246
      %p248 = scmp.ne.s32.totalorder %s240, %s242
      %p249 = scmp.eq.s32.totalorder %s85, 1
      %p250 = por %p248, %p249
      %p251 = scmp.ne.s32.totalorder %s242, %s243
      %p252 = scmp.eq.s32.totalorder %s85, 0
      %p253 = por %p251, %p252
      %p254 = scmp.ne.s32.totalorder %s242, %s243
      %p255 = scmp.eq.s32.totalorder %s86, 1
      %p256 = por %p254, %p255
      %p258 = scmp.ne.s32.totalorder %s243, %s257
      %p259 = scmp.eq.s32.totalorder %s86, 0
      %p260 = por %p258, %p259
      %s262 = sadd.s32 %s261, 1
      %p265 = scmp.eq.s32.totalorder %s80, 1
      %p266 = scmp.ne.s32.totalorder %s261, %s263
      %p267 = scmp.eq.s32.totalorder %s80, 0
      %p268 = por %p266, %p267
      %p269 = scmp.ne.s32.totalorder %s261, %s263
      %p270 = scmp.eq.s32.totalorder %s85, 1
      %p271 = por %p269, %p270
      %p272 = scmp.ne.s32.totalorder %s263, %s264
      %p273 = scmp.eq.s32.totalorder %s85, 0
      %p274 = por %p272, %p273
      %p275 = scmp.ne.s32.totalorder %s263, %s264
      %p276 = scmp.eq.s32.totalorder %s86, 1
      %p277 = por %p275, %p276
      %p279 = scmp.ne.s32.totalorder %s264, %s278
      %p280 = scmp.eq.s32.totalorder %s86, 0
      %p281 = por %p279, %p280
      %s283 = sadd.s32 %s282, 1
      %p286 = scmp.eq.s32.totalorder %s80, 1
      %p287 = scmp.ne.s32.totalorder %s282, %s284
      %p288 = scmp.eq.s32.totalorder %s80, 0
      %p289 = por %p287, %p288
      %p290 = scmp.ne.s32.totalorder %s282, %s284
      %p291 = scmp.eq.s32.totalorder %s85, 1
      %p292 = por %p290, %p291
      %p293 = scmp.ne.s32.totalorder %s284, %s285
      %p294 = scmp.eq.s32.totalorder %s85, 0
      %p295 = por %p293, %p294
      %p296 = scmp.ne.s32.totalorder %s284, %s285
      %p297 = scmp.eq.s32.totalorder %s86, 1
      %p298 = por %p296, %p297
      %p300 = scmp.ne.s32.totalorder %s285, %s299
      %p301 = scmp.eq.s32.totalorder %s86, 0
      %p302 = por %p300, %p301
      %s304 = sadd.s32 %s303, 1
      %p307 = scmp.eq.s32.totalorder %s80, 1
      %p308 = scmp.ne.s32.totalorder %s303, %s305
      %p309 = scmp.eq.s32.totalorder %s80, 0
      %p310 = por %p308, %p309
      %p311 = scmp.ne.s32.totalorder %s303, %s305
      %p312 = scmp.eq.s32.totalorder %s85, 1
      %p313 = por %p311, %p312
      %p314 = scmp.ne.s32.totalorder %s305, %s306
      %p315 = scmp.eq.s32.totalorder %s85, 0
      %p316 = por %p314, %p315
      %p317 = scmp.ne.s32.totalorder %s305, %s306
      %p318 = scmp.eq.s32.totalorder %s86, 1
      %p319 = por %p317, %p318
      %p321 = scmp.ne.s32.totalorder %s306, %s320
      %p322 = scmp.eq.s32.totalorder %s86, 0
      %p323 = por %p321, %p322
      %s325 = sadd.s32 %s324, 1
      %p328 = scmp.eq.s32.totalorder %s80, 1
      %p329 = scmp.ne.s32.totalorder %s324, %s326
      %p330 = scmp.eq.s32.totalorder %s80, 0
      %p331 = por %p329, %p330
      %p332 = scmp.ne.s32.totalorder %s324, %s326
      %p333 = scmp.eq.s32.totalorder %s85, 1
      %p334 = por %p332, %p333
      %p335 = scmp.ne.s32.totalorder %s326, %s327
      %p336 = scmp.eq.s32.totalorder %s85, 0
      %p337 = por %p335, %p336
      %p338 = scmp.ne.s32.totalorder %s326, %s327
      %p339 = scmp.eq.s32.totalorder %s86, 1
      %p340 = por %p338, %p339
      %p342 = scmp.ne.s32.totalorder %s327, %s341
      %p343 = scmp.eq.s32.totalorder %s86, 0
      %p344 = por %p342, %p343
      %s346 = sadd.s32 %s345, 1
      %p349 = scmp.eq.s32.totalorder %s80, 1
      %p350 = scmp.ne.s32.totalorder %s345, %s347
      %p351 = scmp.eq.s32.totalorder %s80, 0
      %p352 = por %p350, %p351
      %p353 = scmp.ne.s32.totalorder %s345, %s347
      %p354 = scmp.eq.s32.totalorder %s85, 1
      %p355 = por %p353, %p354
      %p356 = scmp.ne.s32.totalorder %s347, %s348
      %p357 = scmp.eq.s32.totalorder %s85, 0
      %p358 = por %p356, %p357
      %p359 = scmp.ne.s32.totalorder %s347, %s348
      %p360 = scmp.eq.s32.totalorder %s86, 1
      %p361 = por %p359, %p360
      %p363 = scmp.ne.s32.totalorder %s348, %s362
      %p364 = scmp.eq.s32.totalorder %s86, 0
      %p365 = por %p363, %p364
      %s367 = sadd.s32 %s366, 1
      %p370 = scmp.eq.s32.totalorder %s80, 1
      %p371 = scmp.ne.s32.totalorder %s366, %s368
      %p372 = scmp.eq.s32.totalorder %s80, 0
      %p373 = por %p371, %p372
      %p374 = scmp.ne.s32.totalorder %s366, %s368
      %p375 = scmp.eq.s32.totalorder %s85, 1
      %p376 = por %p374, %p375
      %p377 = scmp.ne.s32.totalorder %s368, %s369
      %p378 = scmp.eq.s32.totalorder %s85, 0
      %p379 = por %p377, %p378
      %p380 = scmp.ne.s32.totalorder %s368, %s369
      %p381 = scmp.eq.s32.totalorder %s86, 1
      %p382 = por %p380, %p381
      %p384 = scmp.ne.s32.totalorder %s369, %s383
      %p385 = scmp.eq.s32.totalorder %s86, 0
      %p386 = por %p384, %p385
      %s388 = sadd.s32 %s387, 1
      %p391 = scmp.eq.s32.totalorder %s80, 1
      %p392 = scmp.ne.s32.totalorder %s387, %s389
      %p393 = scmp.eq.s32.totalorder %s80, 0
      %p394 = por %p392, %p393
      %p395 = scmp.ne.s32.totalorder %s387, %s389
      %p396 = scmp.eq.s32.totalorder %s85, 1
      %p397 = por %p395, %p396
      %p398 = scmp.ne.s32.totalorder %s389, %s390
      %p399 = scmp.eq.s32.totalorder %s85, 0
      %p400 = por %p398, %p399
      %p401 = scmp.ne.s32.totalorder %s389, %s390
      %p402 = scmp.eq.s32.totalorder %s86, 1
      %p403 = por %p401, %p402
      %p405 = scmp.ne.s32.totalorder %s390, %s404
      %p406 = scmp.eq.s32.totalorder %s86, 0
      %p407 = por %p405, %p406
      %s409 = sadd.s32 %s408, 1
      %p412 = scmp.eq.s32.totalorder %s80, 1
      %p413 = scmp.ne.s32.totalorder %s408, %s410
      %p414 = scmp.eq.s32.totalorder %s80, 0
      %p415 = por %p413, %p414
      %p416 = scmp.ne.s32.totalorder %s408, %s410
      %p417 = scmp.eq.s32.totalorder %s85, 1
      %p418 = por %p416, %p417
      %p419 = scmp.ne.s32.totalorder %s410, %s411
      %p420 = scmp.eq.s32.totalorder %s85, 0
      %p421 = por %p419, %p420
      %p422 = scmp.ne.s32.totalorder %s410, %s411
      %p423 = scmp.eq.s32.totalorder %s86, 1
      %p424 = por %p422, %p423
      %p426 = scmp.ne.s32.totalorder %s411, %s425
      %p427 = scmp.eq.s32.totalorder %s86, 0
      %p428 = por %p426, %p427
      %s430 = sadd.s32 %s429, 1
      %p433 = scmp.eq.s32.totalorder %s80, 1
      %p434 = scmp.ne.s32.totalorder %s429, %s431
      %p435 = scmp.eq.s32.totalorder %s80, 0
      %p436 = por %p434, %p435
      %p437 = scmp.ne.s32.totalorder %s429, %s431
      %p438 = scmp.eq.s32.totalorder %s85, 1
      %p439 = por %p437, %p438
      %p440 = scmp.ne.s32.totalorder %s431, %s432
      %p441 = scmp.eq.s32.totalorder %s85, 0
      %p442 = por %p440, %p441
      %p443 = scmp.ne.s32.totalorder %s431, %s432
      %p444 = scmp.eq.s32.totalorder %s86, 1
      %p445 = por %p443, %p444
      %p447 = scmp.ne.s32.totalorder %s432, %s446
      %p448 = scmp.eq.s32.totalorder %s86, 0
      %p449 = por %p447, %p448
      %s451 = sadd.s32 %s450, 1
      %p454 = scmp.eq.s32.totalorder %s80, 1
      %p455 = scmp.ne.s32.totalorder %s450, %s452
      %p456 = scmp.eq.s32.totalorder %s80, 0
      %p457 = por %p455, %p456
      %p458 = scmp.ne.s32.totalorder %s450, %s452
      %p459 = scmp.eq.s32.totalorder %s85, 1
      %p460 = por %p458, %p459
      %p461 = scmp.ne.s32.totalorder %s452, %s453
      %p462 = scmp.eq.s32.totalorder %s85, 0
      %p463 = por %p461, %p462
      %p464 = scmp.ne.s32.totalorder %s452, %s453
      %p465 = scmp.eq.s32.totalorder %s86, 1
      %p466 = por %p464, %p465
      %p468 = scmp.ne.s32.totalorder %s453, %s467
      %p469 = scmp.eq.s32.totalorder %s86, 0
      %p470 = por %p468, %p469
      %s472 = sadd.s32 %s471, 1
      %p475 = scmp.eq.s32.totalorder %s80, 1
      %p476 = scmp.ne.s32.totalorder %s471, %s473
      %p477 = scmp.eq.s32.totalorder %s80, 0
      %p478 = por %p476, %p477
      %p479 = scmp.ne.s32.totalorder %s471, %s473
      %p480 = scmp.eq.s32.totalorder %s85, 1
      %p481 = por %p479, %p480
      %p482 = scmp.ne.s32.totalorder %s473, %s474
      %p483 = scmp.eq.s32.totalorder %s85, 0
      %p484 = por %p482, %p483
      %p485 = scmp.ne.s32.totalorder %s473, %s474
      %p486 = scmp.eq.s32.totalorder %s86, 1
      %p487 = por %p485, %p486
      %p489 = scmp.ne.s32.totalorder %s474, %s488
      %p490 = scmp.eq.s32.totalorder %s86, 0
      %p491 = por %p489, %p490
      %s493 = sadd.s32 %s492, 1
      %p496 = scmp.eq.s32.totalorder %s80, 1
      %p497 = scmp.ne.s32.totalorder %s492, %s494
      %p498 = scmp.eq.s32.totalorder %s80, 0
      %p499 = por %p497, %p498
      %p500 = scmp.ne.s32.totalorder %s492, %s494
      %p501 = scmp.eq.s32.totalorder %s85, 1
      %p502 = por %p500, %p501
      %p503 = scmp.ne.s32.totalorder %s494, %s495
      %p504 = scmp.eq.s32.totalorder %s85, 0
      %p505 = por %p503, %p504
      %p506 = scmp.ne.s32.totalorder %s494, %s495
      %p507 = scmp.eq.s32.totalorder %s86, 1
      %p508 = por %p506, %p507
      %p510 = scmp.ne.s32.totalorder %s495, %s509
      %p511 = scmp.eq.s32.totalorder %s86, 0
      %p512 = por %p510, %p511
      %s514 = sadd.s32 %s513, 1
      %p517 = scmp.eq.s32.totalorder %s80, 1
      %p518 = scmp.ne.s32.totalorder %s513, %s515
      %p519 = scmp.eq.s32.totalorder %s80, 0
      %p520 = por %p518, %p519
      %p521 = scmp.ne.s32.totalorder %s513, %s515
      %p522 = scmp.eq.s32.totalorder %s85, 1
      %p523 = por %p521, %p522
      %p524 = scmp.ne.s32.totalorder %s515, %s516
      %p525 = scmp.eq.s32.totalorder %s85, 0
      %p526 = por %p524, %p525
      %p527 = scmp.ne.s32.totalorder %s515, %s516
      %p528 = scmp.eq.s32.totalorder %s86, 1
      %p529 = por %p527, %p528
      %p531 = scmp.ne.s32.totalorder %s516, %s530
      %p532 = scmp.eq.s32.totalorder %s86, 0
      %p533 = por %p531, %p532
      %s535 = sadd.s32 %s534, 1
      %p538 = scmp.eq.s32.totalorder %s80, 1
      %p539 = scmp.ne.s32.totalorder %s534, %s536
      %p540 = scmp.eq.s32.totalorder %s80, 0
      %p541 = por %p539, %p540
      %p542 = scmp.ne.s32.totalorder %s534, %s536
      %p543 = scmp.eq.s32.totalorder %s85, 1
      %p544 = por %p542, %p543
      %p545 = scmp.ne.s32.totalorder %s536, %s537
      %p546 = scmp.eq.s32.totalorder %s85, 0
      %p547 = por %p545, %p546
      %p548 = scmp.ne.s32.totalorder %s536, %s537
      %p549 = scmp.eq.s32.totalorder %s86, 1
      %p550 = por %p548, %p549
      %p552 = scmp.ne.s32.totalorder %s537, %s551
      %p553 = scmp.eq.s32.totalorder %s86, 0
      %p554 = por %p552, %p553
      %s556 = sadd.s32 %s555, 1
      %p559 = scmp.eq.s32.totalorder %s80, 1
      %p560 = scmp.ne.s32.totalorder %s555, %s557
      %p561 = scmp.eq.s32.totalorder %s80, 0
      %p562 = por %p560, %p561
      %p563 = scmp.ne.s32.totalorder %s555, %s557
      %p564 = scmp.eq.s32.totalorder %s85, 1
      %p565 = por %p563, %p564
      %p566 = scmp.ne.s32.totalorder %s557, %s558
      %p567 = scmp.eq.s32.totalorder %s85, 0
      %p568 = por %p566, %p567
      %p569 = scmp.ne.s32.totalorder %s557, %s558
      %p570 = scmp.eq.s32.totalorder %s86, 1
      %p571 = por %p569, %p570
      %p573 = scmp.ne.s32.totalorder %s558, %s572
      %p574 = scmp.eq.s32.totalorder %s86, 0
      %p575 = por %p573, %p574
      %s577 = sadd.s32 %s576, 1
      %p580 = scmp.eq.s32.totalorder %s80, 1
      %p581 = scmp.ne.s32.totalorder %s576, %s578
      %p582 = scmp.eq.s32.totalorder %s80, 0
      %p583 = por %p581, %p582
      %p584 = scmp.ne.s32.totalorder %s576, %s578
      %p585 = scmp.eq.s32.totalorder %s85, 1
      %p586 = por %p584, %p585
      %p587 = scmp.ne.s32.totalorder %s578, %s579
      %p588 = scmp.eq.s32.totalorder %s85, 0
      %p589 = por %p587, %p588
      %p590 = scmp.ne.s32.totalorder %s578, %s579
      %p591 = scmp.eq.s32.totalorder %s86, 1
      %p592 = por %p590, %p591
      %p594 = scmp.ne.s32.totalorder %s579, %s593
      %p595 = scmp.eq.s32.totalorder %s86, 0
      %p596 = por %p594, %p595
      %s598 = sadd.s32 %s597, 1
      %p601 = scmp.eq.s32.totalorder %s80, 1
      %p602 = scmp.ne.s32.totalorder %s597, %s599
      %p603 = scmp.eq.s32.totalorder %s80, 0
      %p604 = por %p602, %p603
      %p605 = scmp.ne.s32.totalorder %s597, %s599
      %p606 = scmp.eq.s32.totalorder %s85, 1
      %p607 = por %p605, %p606
      %p608 = scmp.ne.s32.totalorder %s599, %s600
      %p609 = scmp.eq.s32.totalorder %s85, 0
      %p610 = por %p608, %p609
      %p611 = scmp.ne.s32.totalorder %s599, %s600
      %p612 = scmp.eq.s32.totalorder %s86, 1
      %p613 = por %p611, %p612
      %p615 = scmp.ne.s32.totalorder %s600, %s614
      %p616 = scmp.eq.s32.totalorder %s86, 0
      %p617 = por %p615, %p616
      %s619 = sadd.s32 %s618, 1
      %p622 = scmp.eq.s32.totalorder %s80, 1
      %p623 = scmp.ne.s32.totalorder %s618, %s620
      %p624 = scmp.eq.s32.totalorder %s80, 0
      %p625 = por %p623, %p624
      %p626 = scmp.ne.s32.totalorder %s618, %s620
      %p627 = scmp.eq.s32.totalorder %s85, 1
      %p628 = por %p626, %p627
      %p629 = scmp.ne.s32.totalorder %s620, %s621
      %p630 = scmp.eq.s32.totalorder %s85, 0
      %p631 = por %p629, %p630
      %p632 = scmp.ne.s32.totalorder %s620, %s621
      %p633 = scmp.eq.s32.totalorder %s86, 1
      %p634 = por %p632, %p633
      %p636 = scmp.ne.s32.totalorder %s621, %s635
      %p637 = scmp.eq.s32.totalorder %s86, 0
      %p638 = por %p636, %p637
      %s640 = sadd.s32 %s639, 1
      %p643 = scmp.eq.s32.totalorder %s80, 1
      %p644 = scmp.ne.s32.totalorder %s639, %s641
      %p645 = scmp.eq.s32.totalorder %s80, 0
      %p646 = por %p644, %p645
      %p647 = scmp.ne.s32.totalorder %s639, %s641
      %p648 = scmp.eq.s32.totalorder %s85, 1
      %p649 = por %p647, %p648
      %p650 = scmp.ne.s32.totalorder %s641, %s642
      %p651 = scmp.eq.s32.totalorder %s85, 0
      %p652 = por %p650, %p651
      %p653 = scmp.ne.s32.totalorder %s641, %s642
      %p654 = scmp.eq.s32.totalorder %s86, 1
      %p655 = por %p653, %p654
      %p657 = scmp.ne.s32.totalorder %s642, %s656
      %p658 = scmp.eq.s32.totalorder %s86, 0
      %p659 = por %p657, %p658
      %s661 = sadd.s32 %s660, 1
      %p664 = scmp.eq.s32.totalorder %s80, 1
      %p665 = scmp.ne.s32.totalorder %s660, %s662
      %p666 = scmp.eq.s32.totalorder %s80, 0
      %p667 = por %p665, %p666
      %p668 = scmp.ne.s32.totalorder %s660, %s662
      %p669 = scmp.eq.s32.totalorder %s85, 1
      %p670 = por %p668, %p669
      %p671 = scmp.ne.s32.totalorder %s662, %s663
      %p672 = scmp.eq.s32.totalorder %s85, 0
      %p673 = por %p671, %p672
      %p674 = scmp.ne.s32.totalorder %s662, %s663
      %p675 = scmp.eq.s32.totalorder %s86, 1
      %p676 = por %p674, %p675
      %p678 = scmp.ne.s32.totalorder %s663, %s677
      %p679 = scmp.eq.s32.totalorder %s86, 0
      %p680 = por %p678, %p679
      %s682 = sadd.s32 %s681, 1
      %p685 = scmp.eq.s32.totalorder %s80, 1
      %p686 = scmp.ne.s32.totalorder %s681, %s683
      %p687 = scmp.eq.s32.totalorder %s80, 0
      %p688 = por %p686, %p687
      %p689 = scmp.ne.s32.totalorder %s681, %s683
      %p690 = scmp.eq.s32.totalorder %s85, 1
      %p691 = por %p689, %p690
      %p692 = scmp.ne.s32.totalorder %s683, %s684
      %p693 = scmp.eq.s32.totalorder %s85, 0
      %p694 = por %p692, %p693
      %p695 = scmp.ne.s32.totalorder %s683, %s684
      %p696 = scmp.eq.s32.totalorder %s86, 1
      %p697 = por %p695, %p696
      %p699 = scmp.ne.s32.totalorder %s684, %s698
      %p700 = scmp.eq.s32.totalorder %s86, 0
      %p701 = por %p699, %p700
      %s703 = sadd.s32 %s702, 1
      %p706 = scmp.eq.s32.totalorder %s80, 1
      %p707 = scmp.ne.s32.totalorder %s702, %s704
      %p708 = scmp.eq.s32.totalorder %s80, 0
      %p709 = por %p707, %p708
      %p710 = scmp.ne.s32.totalorder %s702, %s704
      %p711 = scmp.eq.s32.totalorder %s85, 1
      %p712 = por %p710, %p711
      %p713 = scmp.ne.s32.totalorder %s704, %s705
      %p714 = scmp.eq.s32.totalorder %s85, 0
      %p715 = por %p713, %p714
      %p716 = scmp.ne.s32.totalorder %s704, %s705
      %p717 = scmp.eq.s32.totalorder %s86, 1
      %p718 = por %p716, %p717
      %p720 = scmp.ne.s32.totalorder %s705, %s719
      %p721 = scmp.eq.s32.totalorder %s86, 0
      %p722 = por %p720, %p721
      %s724 = sadd.s32 %s723, 1
      %p727 = scmp.eq.s32.totalorder %s80, 1
      %p728 = scmp.ne.s32.totalorder %s723, %s725
      %p729 = scmp.eq.s32.totalorder %s80, 0
      %p730 = por %p728, %p729
      %p731 = scmp.ne.s32.totalorder %s723, %s725
      %p732 = scmp.eq.s32.totalorder %s85, 1
      %p733 = por %p731, %p732
      %p734 = scmp.ne.s32.totalorder %s725, %s726
      %p735 = scmp.eq.s32.totalorder %s85, 0
      %p736 = por %p734, %p735
      %p737 = scmp.ne.s32.totalorder %s725, %s726
      %p738 = scmp.eq.s32.totalorder %s86, 1
      %p739 = por %p737, %p738
      %p741 = scmp.ne.s32.totalorder %s726, %s740
      %p742 = scmp.eq.s32.totalorder %s86, 0
      %p743 = por %p741, %p742
      %s745 = sadd.s32 %s744, 1
      %p748 = scmp.eq.s32.totalorder %s80, 1
      %p749 = scmp.ne.s32.totalorder %s744, %s746
      %p750 = scmp.eq.s32.totalorder %s80, 0
      %p751 = por %p749, %p750
      %p752 = scmp.ne.s32.totalorder %s744, %s746
      %p753 = scmp.eq.s32.totalorder %s85, 1
      %p754 = por %p752, %p753
      %p755 = scmp.ne.s32.totalorder %s746, %s747
      %p756 = scmp.eq.s32.totalorder %s85, 0
      %p757 = por %p755, %p756
      %p758 = scmp.ne.s32.totalorder %s746, %s747
      %p759 = scmp.eq.s32.totalorder %s86, 1
      %p760 = por %p758, %p759
      %p762 = scmp.ne.s32.totalorder %s747, %s761
      %p763 = scmp.eq.s32.totalorder %s86, 0
      %p764 = por %p762, %p763
      %s766 = sadd.s32 %s765, 1
      %p769 = scmp.eq.s32.totalorder %s80, 1
      %p770 = scmp.ne.s32.totalorder %s765, %s767
      %p771 = scmp.eq.s32.totalorder %s80, 0
      %p772 = por %p770, %p771
      %p773 = scmp.ne.s32.totalorder %s765, %s767
      %p774 = scmp.eq.s32.totalorder %s85, 1
      %p775 = por %p773, %p774
      %p776 = scmp.ne.s32.totalorder %s767, %s768
      %p777 = scmp.eq.s32.totalorder %s85, 0
      %p778 = por %p776, %p777
      %p779 = scmp.ne.s32.totalorder %s767, %s768
      %p780 = scmp.eq.s32.totalorder %s86, 1
      %p781 = por %p779, %p780
      %p783 = scmp.ne.s32.totalorder %s768, %s782
      %p784 = scmp.eq.s32.totalorder %s86, 0
      %p785 = por %p783, %p784
      %s787 = sadd.s32 %s786, 1
      %p790 = scmp.eq.s32.totalorder %s80, 1
      %p791 = scmp.ne.s32.totalorder %s786, %s788
      %p792 = scmp.eq.s32.totalorder %s80, 0
      %p793 = por %p791, %p792
      %p794 = scmp.ne.s32.totalorder %s786, %s788
      %p795 = scmp.eq.s32.totalorder %s85, 1
      %p796 = por %p794, %p795
      %p797 = scmp.ne.s32.totalorder %s788, %s789
      %p798 = scmp.eq.s32.totalorder %s85, 0
      %p799 = por %p797, %p798
      %p800 = scmp.ne.s32.totalorder %s788, %s789
      %p801 = scmp.eq.s32.totalorder %s86, 1
      %p802 = por %p800, %p801
      %p804 = scmp.ne.s32.totalorder %s789, %s803
      %p805 = scmp.eq.s32.totalorder %s86, 0
      %p806 = por %p804, %p805
      %s808 = sadd.s32 %s807, 1
      %p811 = scmp.eq.s32.totalorder %s80, 1
      %p812 = scmp.ne.s32.totalorder %s807, %s809
      %p813 = scmp.eq.s32.totalorder %s80, 0
      %p814 = por %p812, %p813
      %p815 = scmp.ne.s32.totalorder %s807, %s809
      %p816 = scmp.eq.s32.totalorder %s85, 1
      %p817 = por %p815, %p816
      %p818 = scmp.ne.s32.totalorder %s809, %s810
      %p819 = scmp.eq.s32.totalorder %s85, 0
      %p820 = por %p818, %p819
      %p821 = scmp.ne.s32.totalorder %s809, %s810
      %p822 = scmp.eq.s32.totalorder %s86, 1
      %p823 = por %p821, %p822
      %p825 = scmp.ne.s32.totalorder %s810, %s824
      %p826 = scmp.eq.s32.totalorder %s86, 0
      %p827 = por %p825, %p826
      %s828 = ssub.s32 %s80, %s87
      %p829 = scmp.eq.s32.totalorder %s828, 0
      %s831 = sadd.s32 %s830, 1
      %s832 = scalar_select %p829, %s830, %s831
      %p835 = pneg %p829
      %p836 = scmp.eq.s32.totalorder %s80, 1
      %p837 = por %p835, %p836
      %p838 = scmp.ne.s32.totalorder %s830, %s833
      %p839 = scmp.eq.s32.totalorder %s80, 0
      %p840 = por %p838, %p839
      %p841 = scmp.ne.s32.totalorder %s830, %s833
      %p842 = scmp.eq.s32.totalorder %s85, 1
      %p843 = por %p841, %p842
      %p844 = scmp.ne.s32.totalorder %s833, %s834
      %p845 = scmp.eq.s32.totalorder %s85, 0
      %p846 = por %p844, %p845
      %p847 = scmp.ne.s32.totalorder %s833, %s834
      %p848 = scmp.eq.s32.totalorder %s86, 1
      %p849 = por %p847, %p848
      %p851 = scmp.ne.s32.totalorder %s834, %s850
      %p852 = scmp.eq.s32.totalorder %s86, 0
      %p853 = por %p851, %p852
      %p854 = scmp.le.s32.totalorder 1, %s80
      %p855 = scmp.lt.s32.totalorder %s80, 3
      %p856 = pnand %p854, %p855
      %p857 = pneg %p856
      // Predicated region
      $region9: #{swin_forward.1} parent=5 // pred_check
        _
      $region10: #{swin_forward.1} parent=5 // pred_check_branch
        %859 = sbr.rel (%p856) target = $region12
      $region11: #{swin_forward.1} parent=5 // pred_region
        %s860 = ssub.s32 %s80, 1
        // Predicated region
        $region13: #{swin_forward.1} parent=11 // pred_check
          %p861 = pneg %p127
        $region14: #{swin_forward.1} parent=11 // pred_check_branch
          %863 = sbr.rel (%p861) target = $region16
        $region15: #{swin_forward.1} parent=11 // pred_region
          _
        $region16: #{swin_forward.1} parent=11 // pred_fallthru
          _
        // Predicated region
        $region17: #{swin_forward.1} parent=11 // pred_check
          %p864 = pneg %p148
        $region18: #{swin_forward.1} parent=11 // pred_check_branch
          %866 = sbr.rel (%p864) target = $region20
        $region19: #{swin_forward.1} parent=11 // pred_region
          _
        $region20: #{swin_forward.1} parent=11 // pred_fallthru
          _
        // Predicated region
        $region21: #{swin_forward.1} parent=11 // pred_check
          %p867 = pneg %p169
        $region22: #{swin_forward.1} parent=11 // pred_check_branch
          %869 = sbr.rel (%p867) target = $region24
        $region23: #{swin_forward.1} parent=11 // pred_region
          _
        $region24: #{swin_forward.1} parent=11 // pred_fallthru
          _
        // Predicated region
        $region25: #{swin_forward.1} parent=11 // pred_check
          %p870 = pneg %p190
        $region26: #{swin_forward.1} parent=11 // pred_check_branch
          %872 = sbr.rel (%p870) target = $region28
        $region27: #{swin_forward.1} parent=11 // pred_region
          _
        $region28: #{swin_forward.1} parent=11 // pred_fallthru
          _
        // Predicated region
        $region29: #{swin_forward.1} parent=11 // pred_check
          %p873 = pneg %p211
        $region30: #{swin_forward.1} parent=11 // pred_check_branch
          %875 = sbr.rel (%p873) target = $region32
        $region31: #{swin_forward.1} parent=11 // pred_region
          _
        $region32: #{swin_forward.1} parent=11 // pred_fallthru
          _
        // Predicated region
        $region33: #{swin_forward.1} parent=11 // pred_check
          %p876 = pneg %p232
        $region34: #{swin_forward.1} parent=11 // pred_check_branch
          %878 = sbr.rel (%p876) target = $region36
        $region35: #{swin_forward.1} parent=11 // pred_region
          _
        $region36: #{swin_forward.1} parent=11 // pred_fallthru
          _
        // Predicated region
        $region37: #{swin_forward.1} parent=11 // pred_check
          %p879 = pneg %p253
        $region38: #{swin_forward.1} parent=11 // pred_check_branch
          %881 = sbr.rel (%p879) target = $region40
        $region39: #{swin_forward.1} parent=11 // pred_region
          _
        $region40: #{swin_forward.1} parent=11 // pred_fallthru
          _
        // Predicated region
        $region41: #{swin_forward.1} parent=11 // pred_check
          %p882 = pneg %p274
        $region42: #{swin_forward.1} parent=11 // pred_check_branch
          %884 = sbr.rel (%p882) target = $region44
        $region43: #{swin_forward.1} parent=11 // pred_region
          _
        $region44: #{swin_forward.1} parent=11 // pred_fallthru
          _
        // Predicated region
        $region45: #{swin_forward.1} parent=11 // pred_check
          %p885 = pneg %p295
        $region46: #{swin_forward.1} parent=11 // pred_check_branch
          %887 = sbr.rel (%p885) target = $region48
        $region47: #{swin_forward.1} parent=11 // pred_region
          _
        $region48: #{swin_forward.1} parent=11 // pred_fallthru
          _
        // Predicated region
        $region49: #{swin_forward.1} parent=11 // pred_check
          %p888 = pneg %p316
        $region50: #{swin_forward.1} parent=11 // pred_check_branch
          %890 = sbr.rel (%p888) target = $region52
        $region51: #{swin_forward.1} parent=11 // pred_region
          _
        $region52: #{swin_forward.1} parent=11 // pred_fallthru
          _
        // Predicated region
        $region53: #{swin_forward.1} parent=11 // pred_check
          %p891 = pneg %p337
        $region54: #{swin_forward.1} parent=11 // pred_check_branch
          %893 = sbr.rel (%p891) target = $region56
        $region55: #{swin_forward.1} parent=11 // pred_region
          _
        $region56: #{swin_forward.1} parent=11 // pred_fallthru
          _
        // Predicated region
        $region57: #{swin_forward.1} parent=11 // pred_check
          %p894 = pneg %p358
        $region58: #{swin_forward.1} parent=11 // pred_check_branch
          %896 = sbr.rel (%p894) target = $region60
        $region59: #{swin_forward.1} parent=11 // pred_region
          _
        $region60: #{swin_forward.1} parent=11 // pred_fallthru
          _
        // Predicated region
        $region61: #{swin_forward.1} parent=11 // pred_check
          %p897 = pneg %p379
        $region62: #{swin_forward.1} parent=11 // pred_check_branch
          %899 = sbr.rel (%p897) target = $region64
        $region63: #{swin_forward.1} parent=11 // pred_region
          _
        $region64: #{swin_forward.1} parent=11 // pred_fallthru
          _
        // Predicated region
        $region65: #{swin_forward.1} parent=11 // pred_check
          %p900 = pneg %p400
        $region66: #{swin_forward.1} parent=11 // pred_check_branch
          %902 = sbr.rel (%p900) target = $region68
        $region67: #{swin_forward.1} parent=11 // pred_region
          _
        $region68: #{swin_forward.1} parent=11 // pred_fallthru
          _
        // Predicated region
        $region69: #{swin_forward.1} parent=11 // pred_check
          %p903 = pneg %p421
        $region70: #{swin_forward.1} parent=11 // pred_check_branch
          %905 = sbr.rel (%p903) target = $region72
        $region71: #{swin_forward.1} parent=11 // pred_region
          _
        $region72: #{swin_forward.1} parent=11 // pred_fallthru
          _
        // Predicated region
        $region73: #{swin_forward.1} parent=11 // pred_check
          %p906 = pneg %p442
        $region74: #{swin_forward.1} parent=11 // pred_check_branch
          %908 = sbr.rel (%p906) target = $region76
        $region75: #{swin_forward.1} parent=11 // pred_region
          _
        $region76: #{swin_forward.1} parent=11 // pred_fallthru
          _
        // Predicated region
        $region77: #{swin_forward.1} parent=11 // pred_check
          %p909 = pneg %p463
        $region78: #{swin_forward.1} parent=11 // pred_check_branch
          %911 = sbr.rel (%p909) target = $region80
        $region79: #{swin_forward.1} parent=11 // pred_region
          _
        $region80: #{swin_forward.1} parent=11 // pred_fallthru
          _
        // Predicated region
        $region81: #{swin_forward.1} parent=11 // pred_check
          %p912 = pneg %p484
        $region82: #{swin_forward.1} parent=11 // pred_check_branch
          %914 = sbr.rel (%p912) target = $region84
        $region83: #{swin_forward.1} parent=11 // pred_region
          _
        $region84: #{swin_forward.1} parent=11 // pred_fallthru
          _
        // Predicated region
        $region85: #{swin_forward.1} parent=11 // pred_check
          %p915 = pneg %p505
        $region86: #{swin_forward.1} parent=11 // pred_check_branch
          %917 = sbr.rel (%p915) target = $region88
        $region87: #{swin_forward.1} parent=11 // pred_region
          _
        $region88: #{swin_forward.1} parent=11 // pred_fallthru
          _
        // Predicated region
        $region89: #{swin_forward.1} parent=11 // pred_check
          %p918 = pneg %p526
        $region90: #{swin_forward.1} parent=11 // pred_check_branch
          %920 = sbr.rel (%p918) target = $region92
        $region91: #{swin_forward.1} parent=11 // pred_region
          _
        $region92: #{swin_forward.1} parent=11 // pred_fallthru
          _
        // Predicated region
        $region93: #{swin_forward.1} parent=11 // pred_check
          %p921 = pneg %p547
        $region94: #{swin_forward.1} parent=11 // pred_check_branch
          %923 = sbr.rel (%p921) target = $region96
        $region95: #{swin_forward.1} parent=11 // pred_region
          _
        $region96: #{swin_forward.1} parent=11 // pred_fallthru
          _
        // Predicated region
        $region97: #{swin_forward.1} parent=11 // pred_check
          %p924 = pneg %p568
        $region98: #{swin_forward.1} parent=11 // pred_check_branch
          %926 = sbr.rel (%p924) target = $region100
        $region99: #{swin_forward.1} parent=11 // pred_region
          _
        $region100: #{swin_forward.1} parent=11 // pred_fallthru
          _
        // Predicated region
        $region101: #{swin_forward.1} parent=11 // pred_check
          %p927 = pneg %p589
        $region102: #{swin_forward.1} parent=11 // pred_check_branch
          %929 = sbr.rel (%p927) target = $region104
        $region103: #{swin_forward.1} parent=11 // pred_region
          _
        $region104: #{swin_forward.1} parent=11 // pred_fallthru
          _
        // Predicated region
        $region105: #{swin_forward.1} parent=11 // pred_check
          %p930 = pneg %p610
        $region106: #{swin_forward.1} parent=11 // pred_check_branch
          %932 = sbr.rel (%p930) target = $region108
        $region107: #{swin_forward.1} parent=11 // pred_region
          _
        $region108: #{swin_forward.1} parent=11 // pred_fallthru
          _
        // Predicated region
        $region109: #{swin_forward.1} parent=11 // pred_check
          %p933 = pneg %p631
        $region110: #{swin_forward.1} parent=11 // pred_check_branch
          %935 = sbr.rel (%p933) target = $region112
        $region111: #{swin_forward.1} parent=11 // pred_region
          _
        $region112: #{swin_forward.1} parent=11 // pred_fallthru
          _
        // Predicated region
        $region113: #{swin_forward.1} parent=11 // pred_check
          %p936 = pneg %p652
        $region114: #{swin_forward.1} parent=11 // pred_check_branch
          %938 = sbr.rel (%p936) target = $region116
        $region115: #{swin_forward.1} parent=11 // pred_region
          _
        $region116: #{swin_forward.1} parent=11 // pred_fallthru
          _
        // Predicated region
        $region117: #{swin_forward.1} parent=11 // pred_check
          %p939 = pneg %p673
        $region118: #{swin_forward.1} parent=11 // pred_check_branch
          %941 = sbr.rel (%p939) target = $region120
        $region119: #{swin_forward.1} parent=11 // pred_region
          _
        $region120: #{swin_forward.1} parent=11 // pred_fallthru
          _
        // Predicated region
        $region121: #{swin_forward.1} parent=11 // pred_check
          %p942 = pneg %p694
        $region122: #{swin_forward.1} parent=11 // pred_check_branch
          %944 = sbr.rel (%p942) target = $region124
        $region123: #{swin_forward.1} parent=11 // pred_region
          _
        $region124: #{swin_forward.1} parent=11 // pred_fallthru
          _
        // Predicated region
        $region125: #{swin_forward.1} parent=11 // pred_check
          %p945 = pneg %p715
        $region126: #{swin_forward.1} parent=11 // pred_check_branch
          %947 = sbr.rel (%p945) target = $region128
        $region127: #{swin_forward.1} parent=11 // pred_region
          _
        $region128: #{swin_forward.1} parent=11 // pred_fallthru
          _
        // Predicated region
        $region129: #{swin_forward.1} parent=11 // pred_check
          %p948 = pneg %p736
        $region130: #{swin_forward.1} parent=11 // pred_check_branch
          %950 = sbr.rel (%p948) target = $region132
        $region131: #{swin_forward.1} parent=11 // pred_region
          _
        $region132: #{swin_forward.1} parent=11 // pred_fallthru
          _
        // Predicated region
        $region133: #{swin_forward.1} parent=11 // pred_check
          %p951 = pneg %p757
        $region134: #{swin_forward.1} parent=11 // pred_check_branch
          %953 = sbr.rel (%p951) target = $region136
        $region135: #{swin_forward.1} parent=11 // pred_region
          _
        $region136: #{swin_forward.1} parent=11 // pred_fallthru
          _
        // Predicated region
        $region137: #{swin_forward.1} parent=11 // pred_check
          %p954 = pneg %p778
        $region138: #{swin_forward.1} parent=11 // pred_check_branch
          %956 = sbr.rel (%p954) target = $region140
        $region139: #{swin_forward.1} parent=11 // pred_region
          _
        $region140: #{swin_forward.1} parent=11 // pred_fallthru
          _
        // Predicated region
        $region141: #{swin_forward.1} parent=11 // pred_check
          %p957 = pneg %p799
        $region142: #{swin_forward.1} parent=11 // pred_check_branch
          %959 = sbr.rel (%p957) target = $region144
        $region143: #{swin_forward.1} parent=11 // pred_region
          _
        $region144: #{swin_forward.1} parent=11 // pred_fallthru
          _
        // Predicated region
        $region145: #{swin_forward.1} parent=11 // pred_check
          %p960 = pneg %p820
        $region146: #{swin_forward.1} parent=11 // pred_check_branch
          %962 = sbr.rel (%p960) target = $region148
        $region147: #{swin_forward.1} parent=11 // pred_region
          _
        $region148: #{swin_forward.1} parent=11 // pred_fallthru
          _
      $region12: #{swin_forward.1} parent=5 // pred_fallthru
        _
      %p963 = scmp.lt.s32.totalorder %s80, 2
      // Predicated region
      $region149: #{swin_forward.1} parent=5 // pred_check
        %p964 = pneg %p963
      $region150: #{swin_forward.1} parent=5 // pred_check_branch
        %966 = sbr.rel (%p964) target = $region152
      $region151: #{swin_forward.1} parent=5 // pred_region
        // Predicated region
        $region153: #{swin_forward.1} parent=151 // pred_check
          %p967 = pneg %p100
        $region154: #{swin_forward.1} parent=151 // pred_check_branch
          %969 = sbr.rel (%p967) target = $region156
        $region155: #{swin_forward.1} parent=151 // pred_region
          %p970 = scmp.lt.s32.totalorder %s80, 1
          %s971 = scalar_select %p970, %s80, 1
          %s972 = smul.addr %s971, 2
          %s973 = smul.addr %s972, 8
          %s974 = scalar_lea.vmem %s1, %s973
        $region156: #{swin_forward.1} parent=151 // pred_fallthru
          _
      $region152: #{swin_forward.1} parent=5 // pred_fallthru
        _
      %p975 = scmp.le.s32.totalorder 1, %s80
      %p976 = scmp.lt.s32.totalorder %s80, 3
      %p977 = pnand %p975, %p976
      %p978 = pneg %p977
      // Predicated region
      $region157: #{swin_forward.1} parent=5 // pred_check
        _
      $region158: #{swin_forward.1} parent=5 // pred_check_branch
        %980 = sbr.rel (%p977) target = $region160
      $region159: #{swin_forward.1} parent=5 // pred_region
        %s981 = ssub.s32 %s80, 1
        %p982 = scmp.lt.s32.totalorder %s85, 1
        %s983 = scalar_select %p982, %s85, 1
        %s984 = smul.addr %s983, 2
        %s985 = smul.addr %s984, 8
        %s986 = scalar_lea.vmem %s1, %s985
        %p987 = pneg %p106
        %p988 = pneg %p103
        %p989 = pneg %p127
        %p990 = pneg %p124
        %p991 = pneg %p148
        %p992 = pneg %p145
        %p993 = pneg %p169
        %p994 = pneg %p166
        %p995 = pneg %p190
        %p996 = pneg %p187
        %p997 = pneg %p211
        %p998 = pneg %p208
        %p999 = pneg %p232
        %p1000 = pneg %p229
        %p1001 = pneg %p253
        %p1002 = pneg %p250
        %p1003 = pneg %p274
        %p1004 = pneg %p271
        %p1005 = pneg %p295
        %p1006 = pneg %p292
        %p1007 = pneg %p316
        %p1008 = pneg %p313
        %p1009 = pneg %p337
        %p1010 = pneg %p334
        %p1011 = pneg %p358
        %p1012 = pneg %p355
        %p1013 = pneg %p379
        %p1014 = pneg %p376
        %p1015 = pneg %p400
        %p1016 = pneg %p397
        %p1017 = pneg %p421
        %p1018 = pneg %p418
        %p1019 = pneg %p442
        %p1020 = pneg %p439
        %p1021 = pneg %p463
        %p1022 = pneg %p460
        %p1023 = pneg %p484
        %p1024 = pneg %p481
        %p1025 = pneg %p505
        %p1026 = pneg %p502
        %p1027 = pneg %p526
        %p1028 = pneg %p523
        %p1029 = pneg %p547
        %p1030 = pneg %p544
        %p1031 = pneg %p568
        %p1032 = pneg %p565
        %p1033 = pneg %p589
        %p1034 = pneg %p586
        %p1035 = pneg %p610
        %p1036 = pneg %p607
        %p1037 = pneg %p631
        %p1038 = pneg %p628
        %p1039 = pneg %p652
        %p1040 = pneg %p649
        %p1041 = pneg %p673
        %p1042 = pneg %p670
        %p1043 = pneg %p694
        %p1044 = pneg %p691
        %p1045 = pneg %p715
        %p1046 = pneg %p712
        %p1047 = pneg %p736
        %p1048 = pneg %p733
        %p1049 = pneg %p757
        %p1050 = pneg %p754
        %p1051 = pneg %p778
        %p1052 = pneg %p775
        %p1053 = pneg %p799
        %p1054 = pneg %p796
        %p1055 = pneg %p820
        %p1056 = pneg %p817
        %p1057 = pneg %p846
        %p1058 = pneg %p843
        %s1059 = sand.u32 %s833, 1
        %s1060 = scalar_lea.sflag [#allocation3], %s1059
        %s1061 = sand.u32 %s833, 1
        %s1062 = scalar_lea.vmem [#allocation2], %s1061
        %p1063 = scmp.lt.s32.totalorder %s85, 1
        %s1064 = scalar_select %p1063, %s85, 1
        %s1065 = smul.addr %s1064, 2
        %s1066 = smul.addr %s1065, 8
        %s1067 = scalar_lea.vmem %s1, %s1066
        %v1068 = vld [vmem:[%s1067] sm:$0xff]
        %v1069 = vld [vmem:[%s1067 + $0x8] sm:$0xff]
        %v1070 = vld [vmem:[%s3] sm:$0xff]
        %v1071 = vld [vmem:[%s3 + $0x8] sm:$0xff]
        %v1072 = vld [vmem:[%s3 + $0x10] sm:$0xff]
        %v1073 = vld [vmem:[%s3 + $0x18] sm:$0xff]
        %v1074 = vld [vmem:[%s3 + $0x20] sm:$0xff]
        %v1075 = vld [vmem:[%s3 + $0x28] sm:$0xff]
        %v1076 = vld [vmem:[%s3 + $0x30] sm:$0xff]
        %v1077 = vld [vmem:[%s3 + $0x38] sm:$0xff]
        %v1078 = vld [vmem:[%s5] sm:$0x1]
        %v1080 = vperm.slane %v1078, 0
        %vm1082 = vcmask 523264
        %v1084 = vsel %vm1082, %v1068, 0
        %v1087 = vsel %vm1082, %v1069, 0
        %1089 = vmatpush.msra.mxu0 0.0
        %1090 = vmatpush.msra.mxu0 0.0
        %1091 = vmatpush.msra.mxu0 0.0
        %1092 = vmatpush.msra.mxu0 0.0
        %1093 = vmatpush.msra.mxu0 0.0
        %1094 = vmatpush.msra.mxu0 0.0
        %1095 = vmatpush.msra.mxu0 0.0
        %1096 = vmatpush.msra.mxu0 0.0
        %1097 = vmatpush.msra.mxu0 %v1077
        %1098 = vmatpush.msra.mxu0 %v1076
        %1099 = vmatpush.msra.mxu0 %v1075
        %1100 = vmatpush.msra.mxu0 %v1074
        %1101 = vmatpush.msra.mxu0 %v1073
        %1102 = vmatpush.msra.mxu0 %v1072
        %1103 = vmatpush.msra.mxu0 %v1071
        %1104 = vmatpush.msra.mxu0 %v1070
        %1105 = vmatmul.f32.gmra.mxu0 %v1084
        %v1106 = vpop.f32.mrf.mxu0
        %v1107 = vadd.f32 %v1080, %v1106
        %1108 = vmatmul.f32.gmra.mxu0 %v1087
        %v1109 = vpop.f32.mrf.mxu0
        %v1110 = vadd.f32 %v1080, %v1109
        %1111 = vdwg.mxu0
        %v1112 = vld [vmem:[%s7] sm:$0xff]
        %v1113 = vld [vmem:[%s7 + $0x8] sm:$0xff]
        %v1114 = vld [vmem:[%s9] sm:$0x1]
        %v1115 = vld [vmem:[%s11] sm:$0x1]
        %v1116 = vld [vmem:[%s13] sm:$0xff]
        %v1117 = vld [vmem:[%s13 + $0x8] sm:$0xff]
        %v1118 = vld [vmem:[%s13 + $0x10] sm:$0xff]
        %v1119 = vld [vmem:[%s13 + $0x18] sm:$0xff]
        %v1120 = vld [vmem:[%s13 + $0x20] sm:$0xff]
        %v1121 = vld [vmem:[%s13 + $0x28] sm:$0xff]
        %v1122 = vld [vmem:[%s13 + $0x30] sm:$0xff]
        %v1123 = vld [vmem:[%s13 + $0x38] sm:$0xff]
        %v1124 = vld [vmem:[%s15] sm:$0xff]
        %v1125 = vld [vmem:[%s15 + $0x8] sm:$0xff]
        %v1126 = vld [vmem:[%s15 + $0x10] sm:$0xff]
        %v1127 = vld [vmem:[%s15 + $0x18] sm:$0xff]
        %v1128 = vld [vmem:[%s15 + $0x20] sm:$0xff]
        %v1129 = vld [vmem:[%s15 + $0x28] sm:$0xff]
        %v1130 = vld [vmem:[%s15 + $0x30] sm:$0xff]
        %v1131 = vld [vmem:[%s15 + $0x38] sm:$0xff]
        %v1132 = vld [vmem:[%s17] sm:$0xff]
        %v1133 = vld [vmem:[%s17 + $0x8] sm:$0xff]
        %v1134 = vld [vmem:[%s17 + $0x10] sm:$0xff]
        %v1135 = vld [vmem:[%s17 + $0x18] sm:$0xff]
        %v1136 = vld [vmem:[%s17 + $0x20] sm:$0xff]
        %v1137 = vld [vmem:[%s17 + $0x28] sm:$0xff]
        %v1138 = vld [vmem:[%s17 + $0x30] sm:$0xff]
        %v1139 = vld [vmem:[%s17 + $0x38] sm:$0xff]
        %v1140 = vld [vmem:[%s19] sm:$0xff]
        %v1141 = vld [vmem:[%s19 + $0x8] sm:$0xff]
        %v1142 = vld [vmem:[%s19 + $0x10] sm:$0xff]
        %v1143 = vld [vmem:[%s19 + $0x18] sm:$0xff]
        %v1144 = vld [vmem:[%s21] sm:$0x1]
        %v1145 = vld [vmem:[%s23] sm:$0x1]
        %v1146 = vld [vmem:[%s25] sm:$0x1]
        %v1147 = vld [vmem:[%s27] sm:$0xff]
        %v1148 = vld [vmem:[%s27 + $0x8] sm:$0xff]
        %v1149 = vld [vmem:[%s27 + $0x10] sm:$0xff]
        %v1150 = vld [vmem:[%s27 + $0x18] sm:$0xff]
        %v1151 = vld [vmem:[%s29] sm:$0x1]
        %v1152 = vld [vmem:[%s31] sm:$0xff]
        %v1153 = vld [vmem:[%s31 + $0x8] sm:$0xff]
        %v1154 = vld [vmem:[%s31 + $0x10] sm:$0xff]
        %v1155 = vld [vmem:[%s31 + $0x18] sm:$0xff]
        %v1156 = vld [vmem:[%s31 + $0x20] sm:$0xff]
        %v1157 = vld [vmem:[%s31 + $0x28] sm:$0xff]
        %v1158 = vld [vmem:[%s31 + $0x30] sm:$0xff]
        %v1159 = vld [vmem:[%s31 + $0x38] sm:$0xff]
        %v1160 = vld [vmem:[%s31 + $0x40] sm:$0xff]
        %v1161 = vld [vmem:[%s31 + $0x48] sm:$0xff]
        %v1162 = vld [vmem:[%s31 + $0x50] sm:$0xff]
        %v1163 = vld [vmem:[%s31 + $0x58] sm:$0xff]
        %v1164 = vld [vmem:[%s31 + $0x60] sm:$0xff]
        %v1165 = vld [vmem:[%s31 + $0x68] sm:$0xff]
        %v1166 = vld [vmem:[%s31 + $0x70] sm:$0xff]
        %v1167 = vld [vmem:[%s31 + $0x78] sm:$0xff]
        %v1168 = vld [vmem:[%s33] sm:$0x1]
        %v1169 = vmul.f32 %v1107, %v1107
        %v1170 = vmul.f32 %v1110, %v1110
        %vm1171 = vcmask 261120
        %v1172 = vsel %vm1171, %v1169, 0.0
        %v1173 = vsel %vm1171, %v1170, 0.0
        %v1174 = vadd.f32 %v1172, %v1173
        %v1175 = vrot.slane %v1174, 4
        %v1176 = vadd.f32 %v1174, %v1175
        %v1177 = vrot.slane %v1176, 2
        %v1178 = vadd.f32 %v1176, %v1177
        %v1179 = vrot.slane %v1178, 1
        %v1180 = vadd.f32 %v1178, %v1179
        %v1181 = vrsqrt.pop %v1180
        %v1182 = vmul.f32 %v1181, %v1180
        %v1183 = vmul.f32 %v1182, %v1181
        %v1184 = vmul.f32 0.5, %v1183
        %v1185 = vsub.f32 1.5, %v1184
        %v1186 = vmul.f32 %v1181, %v1185
        %v1187 = vmul.f32 %v1180, %v1186
        %vm1188 = vcmp.eq.f32.partialorder %v1180, inf
        %v1189 = vsel %vm1188, %v1180, %v1187
        %vm1190 = vcmp.eq.f32.partialorder %v1180, 0.0
        %v1191 = vand.u32 %v1180, 2147483648
        %v1192 = vsel %vm1190, %v1191, %v1189
        %v1193 = vsel %vm1171, %v1192, 0.0
        %1194 = vadd.xlane.f32.xlu0 %v1193
        %v1195 = vpop.xlane.xlu0 %1194
        %v1196 = vrcp.pop 32.0
        %v1197 = vmul.f32 32.0, %v1196
        %v1198 = vsub.f32 1.0, %v1197
        %v1199 = vmul.f32 %v1196, %v1198
        %v1200 = vadd.f32 %v1196, %v1199
        %vm1201 = vweird.f32 %v1196
        %v1202 = vsel %vm1201, %v1196, %v1200
        %v1203 = vmul.f32 %v1195, %v1202
        %v1204 = vadd.f32 %v1203, 1e-06
        %v1205 = vrcp.pop %v1204
        %v1206 = vmul.f32 %v1204, %v1205
        %v1207 = vsub.f32 1.0, %v1206
        %v1208 = vmul.f32 %v1205, %v1207
        %v1209 = vadd.f32 %v1205, %v1208
        %vm1210 = vweird.f32 %v1204
        %vm1211 = vweird.f32 %v1205
        %vm1212 = vmor %vm1210, %vm1211
        %v1213 = vsel %vm1212, %v1205, %v1209
        %v1214 = vand.u32 2147483647, %v1204
        %vm1215 = vcmp.eq.f32.partialorder %v1214, 8.507059e+37
        %v1216 = vand.u32 %v1204, 2147483648
        %v1217 = vor.u32 1.1754944e-38, %v1216
        %v1218 = vsel %vm1215, %v1217, %v1213
        %v1219 = vmul.f32 %v1192, %v1218
        %v1220 = vmul.f32 %v1107, %v1219
        %v1221 = vmul.f32 %v1110, %v1219
        %v1223 = vperm.slane %v1114, 0
        %v1225 = vmul.f32 %v1223, %v1220
        %v1226 = vmul.f32 %v1223, %v1221
        %v1228 = vperm.slane %v1115, 0
        %v1230 = vadd.f32 %v1225, %v1228
        %v1231 = vadd.f32 %v1226, %v1228
        %v1232 = vadd.f32 %v1230, %v1107
        %v1233 = vadd.f32 %v1231, %v1110
        %v1235 = vsel %vm1171, %v1232, 0
        %v1238 = vsel %vm1171, %v1233, 0
        %1240 = vmatpush.msra.mxu0 0.0
        %1241 = vmatpush.msra.mxu0 0.0
        %1242 = vmatpush.msra.mxu0 0.0
        %1243 = vmatpush.msra.mxu0 0.0
        %1244 = vmatpush.msra.mxu0 0.0
        %1245 = vmatpush.msra.mxu0 0.0
        %1246 = vmatpush.msra.mxu0 0.0
        %1247 = vmatpush.msra.mxu0 0.0
        %1248 = vmatpush.msra.mxu0 0.0
        %1249 = vmatpush.msra.mxu0 0.0
        %1250 = vmatpush.msra.mxu0 0.0
        %1251 = vmatpush.msra.mxu0 0.0
        %1252 = vmatpush.msra.mxu0 %v1119
        %1253 = vmatpush.msra.mxu0 %v1118
        %1254 = vmatpush.msra.mxu0 %v1117
        %1255 = vmatpush.msra.mxu0 %v1116
        %1256 = vmatmul.f32.gmra.mxu0 %v1235
        %v1257 = vpop.f32.mrf.mxu0
        %v1258 = vadd.f32 0.0, %v1257
        %1259 = vmatmul.f32.gmra.mxu0 %v1238
        %v1260 = vpop.f32.mrf.mxu0
        %v1261 = vadd.f32 0.0, %v1260
        %1262 = vdwg.mxu0
        %1263 = vmatpush.msra.mxu0 0.0
        %1264 = vmatpush.msra.mxu0 0.0
        %1265 = vmatpush.msra.mxu0 0.0
        %1266 = vmatpush.msra.mxu0 0.0
        %1267 = vmatpush.msra.mxu0 0.0
        %1268 = vmatpush.msra.mxu0 0.0
        %1269 = vmatpush.msra.mxu0 0.0
        %1270 = vmatpush.msra.mxu0 0.0
        %1271 = vmatpush.msra.mxu0 0.0
        %1272 = vmatpush.msra.mxu0 0.0
        %1273 = vmatpush.msra.mxu0 0.0
        %1274 = vmatpush.msra.mxu0 0.0
        %1275 = vmatpush.msra.mxu0 %v1123
        %1276 = vmatpush.msra.mxu0 %v1122
        %1277 = vmatpush.msra.mxu0 %v1121
        %1278 = vmatpush.msra.mxu0 %v1120
        %1279 = vmatmul.f32.gmra.mxu0 %v1235
        %v1280 = vpop.f32.mrf.mxu0
        %v1281 = vadd.f32 0.0, %v1280
        %1282 = vmatmul.f32.gmra.mxu0 %v1238
        %v1283 = vpop.f32.mrf.mxu0
        %v1284 = vadd.f32 0.0, %v1283
        %1285 = vdwg.mxu0
        %1286 = vmatpush.msra.mxu0 0.0
        %1287 = vmatpush.msra.mxu0 0.0
        %1288 = vmatpush.msra.mxu0 0.0
        %1289 = vmatpush.msra.mxu0 0.0
        %1290 = vmatpush.msra.mxu0 0.0
        %1291 = vmatpush.msra.mxu0 0.0
        %1292 = vmatpush.msra.mxu0 0.0
        %1293 = vmatpush.msra.mxu0 0.0
        %1294 = vmatpush.msra.mxu0 0.0
        %1295 = vmatpush.msra.mxu0 0.0
        %1296 = vmatpush.msra.mxu0 0.0
        %1297 = vmatpush.msra.mxu0 0.0
        %1298 = vmatpush.msra.mxu0 %v1127
        %1299 = vmatpush.msra.mxu0 %v1126
        %1300 = vmatpush.msra.mxu0 %v1125
        %1301 = vmatpush.msra.mxu0 %v1124
        %1302 = vmatmul.f32.gmra.mxu0 %v1235
        %v1303 = vpop.f32.mrf.mxu0
        %v1304 = vadd.f32 0.0, %v1303
        %1305 = vmatmul.f32.gmra.mxu0 %v1238
        %v1306 = vpop.f32.mrf.mxu0
        %v1307 = vadd.f32 0.0, %v1306
        %1308 = vdwg.mxu0
        %1309 = vmatpush.msra.mxu0 0.0
        %1310 = vmatpush.msra.mxu0 0.0
        %1311 = vmatpush.msra.mxu0 0.0
        %1312 = vmatpush.msra.mxu0 0.0
        %1313 = vmatpush.msra.mxu0 0.0
        %1314 = vmatpush.msra.mxu0 0.0
        %1315 = vmatpush.msra.mxu0 0.0
        %1316 = vmatpush.msra.mxu0 0.0
        %1317 = vmatpush.msra.mxu0 0.0
        %1318 = vmatpush.msra.mxu0 0.0
        %1319 = vmatpush.msra.mxu0 0.0
        %1320 = vmatpush.msra.mxu0 0.0
        %1321 = vmatpush.msra.mxu0 %v1131
        %1322 = vmatpush.msra.mxu0 %v1130
        %1323 = vmatpush.msra.mxu0 %v1129
        %1324 = vmatpush.msra.mxu0 %v1128
        %1325 = vmatmul.f32.gmra.mxu0 %v1235
        %v1326 = vpop.f32.mrf.mxu0
        %v1327 = vadd.f32 0.0, %v1326
        %1328 = vmatmul.f32.gmra.mxu0 %v1238
        %v1329 = vpop.f32.mrf.mxu0
        %v1330 = vadd.f32 0.0, %v1329
        %1331 = vdwg.mxu0
        %1332 = vmatpush.msra.mxu0 0.0
        %1333 = vmatpush.msra.mxu0 0.0
        %1334 = vmatpush.msra.mxu0 0.0
        %1335 = vmatpush.msra.mxu0 0.0
        %1336 = vmatpush.msra.mxu0 0.0
        %1337 = vmatpush.msra.mxu0 0.0
        %1338 = vmatpush.msra.mxu0 0.0
        %1339 = vmatpush.msra.mxu0 0.0
        %1340 = vmatpush.msra.mxu0 0.0
        %1341 = vmatpush.msra.mxu0 0.0
        %1342 = vmatpush.msra.mxu0 0.0
        %1343 = vmatpush.msra.mxu0 0.0
        %1344 = vmatpush.msra.mxu0 %v1135
        %1345 = vmatpush.msra.mxu0 %v1134
        %1346 = vmatpush.msra.mxu0 %v1133
        %1347 = vmatpush.msra.mxu0 %v1132
        %1348 = vmatmul.f32.gmra.mxu0 %v1235
        %v1349 = vpop.f32.mrf.mxu0
        %v1350 = vadd.f32 0.0, %v1349
        %1351 = vmatmul.f32.gmra.mxu0 %v1238
        %v1352 = vpop.f32.mrf.mxu0
        %v1353 = vadd.f32 0.0, %v1352
        %1354 = vdwg.mxu0
        %1355 = vmatpush.msra.mxu0 0.0
        %1356 = vmatpush.msra.mxu0 0.0
        %1357 = vmatpush.msra.mxu0 0.0
        %1358 = vmatpush.msra.mxu0 0.0
        %1359 = vmatpush.msra.mxu0 0.0
        %1360 = vmatpush.msra.mxu0 0.0
        %1361 = vmatpush.msra.mxu0 0.0
        %1362 = vmatpush.msra.mxu0 0.0
        %1363 = vmatpush.msra.mxu0 0.0
        %1364 = vmatpush.msra.mxu0 0.0
        %1365 = vmatpush.msra.mxu0 0.0
        %1366 = vmatpush.msra.mxu0 0.0
        %1367 = vmatpush.msra.mxu0 %v1139
        %1368 = vmatpush.msra.mxu0 %v1138
        %1369 = vmatpush.msra.mxu0 %v1137
        %1370 = vmatpush.msra.mxu0 %v1136
        %1371 = vmatmul.f32.gmra.mxu0 %v1235
        %v1372 = vpop.f32.mrf.mxu0
        %v1373 = vadd.f32 0.0, %v1372
        %1374 = vmatmul.f32.gmra.mxu0 %v1238
        %v1375 = vpop.f32.mrf.mxu0
        %v1376 = vadd.f32 0.0, %v1375
        %1377 = vdwg.mxu0
        %vm1378 = vcmask 130048
        %v1380 = vsel %vm1378, %v1258, 0
        %v1383 = vsel %vm1378, %v1261, 0
        %v1386 = vsel %vm1378, %v1304, 0
        %v1389 = vsel %vm1378, %v1307, 0
        %1391 = vmatpush.xpose.msra.mxu0 0.0
        %1392 = vmatpush.xpose.msra.mxu0 0.0
        %1393 = vmatpush.xpose.msra.mxu0 0.0
        %1394 = vmatpush.xpose.msra.mxu0 0.0
        %1395 = vmatpush.xpose.msra.mxu0 0.0
        %1396 = vmatpush.xpose.msra.mxu0 0.0
        %1397 = vmatpush.xpose.msra.mxu0 0.0
        %1398 = vmatpush.xpose.msra.mxu0 0.0
        %1399 = vmatpush.xpose.msra.mxu0 0.0
        %1400 = vmatpush.xpose.msra.mxu0 0.0
        %1401 = vmatpush.xpose.msra.mxu0 0.0
        %1402 = vmatpush.xpose.msra.mxu0 0.0
        %1403 = vmatpush.xpose.msra.mxu0 0.0
        %1404 = vmatpush.xpose.msra.mxu0 0.0
        %1405 = vmatpush.xpose.msra.mxu0 %v1389
        %1406 = vmatpush.xpose.msra.mxu0 %v1386
        %1407 = vmatmul.f32.gmra.mxu0 %v1380
        %v1408 = vpop.f32.mrf.mxu0
        %v1409 = vadd.f32 0.0, %v1408
        %1410 = vmatmul.f32.gmra.mxu0 %v1383
        %v1411 = vpop.f32.mrf.mxu0
        %v1412 = vadd.f32 0.0, %v1411
        %1413 = vdwg.mxu0
        %v1415 = vsel %vm1378, %v1281, 0
        %v1418 = vsel %vm1378, %v1284, 0
        %v1421 = vsel %vm1378, %v1327, 0
        %v1424 = vsel %vm1378, %v1330, 0
        %1426 = vmatpush.xpose.msra.mxu0 0.0
        %1427 = vmatpush.xpose.msra.mxu0 0.0
        %1428 = vmatpush.xpose.msra.mxu0 0.0
        %1429 = vmatpush.xpose.msra.mxu0 0.0
        %1430 = vmatpush.xpose.msra.mxu0 0.0
        %1431 = vmatpush.xpose.msra.mxu0 0.0
        %1432 = vmatpush.xpose.msra.mxu0 0.0
        %1433 = vmatpush.xpose.msra.mxu0 0.0
        %1434 = vmatpush.xpose.msra.mxu0 0.0
        %1435 = vmatpush.xpose.msra.mxu0 0.0
        %1436 = vmatpush.xpose.msra.mxu0 0.0
        %1437 = vmatpush.xpose.msra.mxu0 0.0
        %1438 = vmatpush.xpose.msra.mxu0 0.0
        %1439 = vmatpush.xpose.msra.mxu0 0.0
        %1440 = vmatpush.xpose.msra.mxu0 %v1424
        %1441 = vmatpush.xpose.msra.mxu0 %v1421
        %1442 = vmatmul.f32.gmra.mxu0 %v1415
        %v1443 = vpop.f32.mrf.mxu0
        %v1444 = vadd.f32 0.0, %v1443
        %1445 = vmatmul.f32.gmra.mxu0 %v1418
        %v1446 = vpop.f32.mrf.mxu0
        %v1447 = vadd.f32 0.0, %v1446
        %1448 = vdwg.mxu0
        %v1449 = vmul.f32 %v1409, 0.25
        %v1450 = vmul.f32 %v1412, 0.25
        %v1451 = vmul.f32 %v1444, 0.25
        %v1452 = vmul.f32 %v1447, 0.25
        %v1453 = vadd.f32 %v1449, %v1112
        %v1454 = vadd.f32 %v1450, %v1113
        %v1455 = vadd.f32 %v1451, %v1112
        %v1456 = vadd.f32 %v1452, %v1113
        %v1457 = vsel %vm1378, %v1453, -inf
        %1458 = vmax.xlane.f32.xlu0 %v1457
        %v1459 = vpop.xlane.xlu0 %1458
        %v1460 = vsel %vm1378, %v1454, -inf
        %1461 = vmax.xlane.f32.xlu0 %v1460
        %v1462 = vpop.xlane.xlu0 %1461
        %v1463 = vsel %vm1378, %v1455, -inf
        %1464 = vmax.xlane.f32.xlu0 %v1463
        %v1465 = vpop.xlane.xlu0 %1464
        %v1466 = vsel %vm1378, %v1456, -inf
        %1467 = vmax.xlane.f32.xlu0 %v1466
        %v1468 = vpop.xlane.xlu0 %1467
        %v1469 = vsub.f32 %v1453, %v1459
        %v1470 = vsub.f32 %v1454, %v1462
        %v1471 = vsub.f32 %v1455, %v1465
        %v1472 = vsub.f32 %v1456, %v1468
        %v1473 = vmul.f32 %v1469, 1.442695
        %v1474 = vpow.pop %v1473
        %v1475 = vmul.f32 %v1470, 1.442695
        %v1476 = vpow.pop %v1475
        %v1477 = vmul.f32 %v1471, 1.442695
        %v1478 = vpow.pop %v1477
        %v1479 = vmul.f32 %v1472, 1.442695
        %v1480 = vpow.pop %v1479
        %v1481 = vsel %vm1378, %v1474, 0.0
        %1482 = vadd.xlane.f32.xlu0 %v1481
        %v1483 = vpop.xlane.xlu0 %1482
        %v1484 = vsel %vm1378, %v1476, 0.0
        %1485 = vadd.xlane.f32.xlu0 %v1484
        %v1486 = vpop.xlane.xlu0 %1485
        %v1487 = vsel %vm1378, %v1478, 0.0
        %1488 = vadd.xlane.f32.xlu0 %v1487
        %v1489 = vpop.xlane.xlu0 %1488
        %v1490 = vsel %vm1378, %v1480, 0.0
        %1491 = vadd.xlane.f32.xlu0 %v1490
        %v1492 = vpop.xlane.xlu0 %1491
        %v1493 = vrcp.pop %v1483
        %v1494 = vmul.f32 %v1483, %v1493
        %v1495 = vsub.f32 1.0, %v1494
        %v1496 = vmul.f32 %v1493, %v1495
        %v1497 = vadd.f32 %v1493, %v1496
        %vm1498 = vweird.f32 %v1483
        %vm1499 = vweird.f32 %v1493
        %vm1500 = vmor %vm1498, %vm1499
        %v1501 = vsel %vm1500, %v1493, %v1497
        %v1502 = vand.u32 2147483647, %v1483
        %vm1503 = vcmp.eq.f32.partialorder %v1502, 8.507059e+37
        %v1504 = vand.u32 %v1483, 2147483648
        %v1505 = vor.u32 1.1754944e-38, %v1504
        %v1506 = vsel %vm1503, %v1505, %v1501
        %v1507 = vmul.f32 %v1474, %v1506
        %v1508 = vrcp.pop %v1486
        %v1509 = vmul.f32 %v1486, %v1508
        %v1510 = vsub.f32 1.0, %v1509
        %v1511 = vmul.f32 %v1508, %v1510
        %v1512 = vadd.f32 %v1508, %v1511
        %vm1513 = vweird.f32 %v1486
        %vm1514 = vweird.f32 %v1508
        %vm1515 = vmor %vm1513, %vm1514
        %v1516 = vsel %vm1515, %v1508, %v1512
        %v1517 = vand.u32 2147483647, %v1486
        %vm1518 = vcmp.eq.f32.partialorder %v1517, 8.507059e+37
        %v1519 = vand.u32 %v1486, 2147483648
        %v1520 = vor.u32 1.1754944e-38, %v1519
        %v1521 = vsel %vm1518, %v1520, %v1516
        %v1522 = vmul.f32 %v1476, %v1521
        %v1523 = vrcp.pop %v1489
        %v1524 = vmul.f32 %v1489, %v1523
        %v1525 = vsub.f32 1.0, %v1524
        %v1526 = vmul.f32 %v1523, %v1525
        %v1527 = vadd.f32 %v1523, %v1526
        %vm1528 = vweird.f32 %v1489
        %vm1529 = vweird.f32 %v1523
        %vm1530 = vmor %vm1528, %vm1529
        %v1531 = vsel %vm1530, %v1523, %v1527
        %v1532 = vand.u32 2147483647, %v1489
        %vm1533 = vcmp.eq.f32.partialorder %v1532, 8.507059e+37
        %v1534 = vand.u32 %v1489, 2147483648
        %v1535 = vor.u32 1.1754944e-38, %v1534
        %v1536 = vsel %vm1533, %v1535, %v1531
        %v1537 = vmul.f32 %v1478, %v1536
        %v1538 = vrcp.pop %v1492
        %v1539 = vmul.f32 %v1492, %v1538
        %v1540 = vsub.f32 1.0, %v1539
        %v1541 = vmul.f32 %v1538, %v1540
        %v1542 = vadd.f32 %v1538, %v1541
        %vm1543 = vweird.f32 %v1492
        %vm1544 = vweird.f32 %v1538
        %vm1545 = vmor %vm1543, %vm1544
        %v1546 = vsel %vm1545, %v1538, %v1542
        %v1547 = vand.u32 2147483647, %v1492
        %vm1548 = vcmp.eq.f32.partialorder %v1547, 8.507059e+37
        %v1549 = vand.u32 %v1492, 2147483648
        %v1550 = vor.u32 1.1754944e-38, %v1549
        %v1551 = vsel %vm1548, %v1550, %v1546
        %v1552 = vmul.f32 %v1480, %v1551
        %v1554 = vsel %vm1378, %v1507, 0
        %v1557 = vsel %vm1378, %v1522, 0
        %1559 = vmatpush.msra.mxu0 0.0
        %1560 = vmatpush.msra.mxu0 0.0
        %1561 = vmatpush.msra.mxu0 0.0
        %1562 = vmatpush.msra.mxu0 0.0
        %1563 = vmatpush.msra.mxu0 0.0
        %1564 = vmatpush.msra.mxu0 0.0
        %1565 = vmatpush.msra.mxu0 0.0
        %1566 = vmatpush.msra.mxu0 0.0
        %1567 = vmatpush.msra.mxu0 0.0
        %1568 = vmatpush.msra.mxu0 0.0
        %1569 = vmatpush.msra.mxu0 0.0
        %1570 = vmatpush.msra.mxu0 0.0
        %1571 = vmatpush.msra.mxu0 0.0
        %1572 = vmatpush.msra.mxu0 0.0
        %1573 = vmatpush.msra.mxu0 %v1353
        %1574 = vmatpush.msra.mxu0 %v1350
        %1575 = vmatmul.f32.gmra.mxu0 %v1554
        %v1576 = vpop.f32.mrf.mxu0
        %v1577 = vadd.f32 0.0, %v1576
        %1578 = vmatmul.f32.gmra.mxu0 %v1557
        %v1579 = vpop.f32.mrf.mxu0
        %v1580 = vadd.f32 0.0, %v1579
        %1581 = vdwg.mxu0
        %v1583 = vsel %vm1378, %v1537, 0
        %v1586 = vsel %vm1378, %v1552, 0
        %1588 = vmatpush.msra.mxu0 0.0
        %1589 = vmatpush.msra.mxu0 0.0
        %1590 = vmatpush.msra.mxu0 0.0
        %1591 = vmatpush.msra.mxu0 0.0
        %1592 = vmatpush.msra.mxu0 0.0
        %1593 = vmatpush.msra.mxu0 0.0
        %1594 = vmatpush.msra.mxu0 0.0
        %1595 = vmatpush.msra.mxu0 0.0
        %1596 = vmatpush.msra.mxu0 0.0
        %1597 = vmatpush.msra.mxu0 0.0
        %1598 = vmatpush.msra.mxu0 0.0
        %1599 = vmatpush.msra.mxu0 0.0
        %1600 = vmatpush.msra.mxu0 0.0
        %1601 = vmatpush.msra.mxu0 0.0
        %1602 = vmatpush.msra.mxu0 %v1376
        %1603 = vmatpush.msra.mxu0 %v1373
        %1604 = vmatmul.f32.gmra.mxu0 %v1583
        %v1605 = vpop.f32.mrf.mxu0
        %v1606 = vadd.f32 0.0, %v1605
        %1607 = vmatmul.f32.gmra.mxu0 %v1586
        %v1608 = vpop.f32.mrf.mxu0
        %v1609 = vadd.f32 0.0, %v1608
        %1610 = vdwg.mxu0
        %v1612 = vsel %vm1378, %v1577, 0
        %v1615 = vsel %vm1378, %v1580, 0
        %1617 = vmatpush.msra.mxu0 0.0
        %1618 = vmatpush.msra.mxu0 0.0
        %1619 = vmatpush.msra.mxu0 0.0
        %1620 = vmatpush.msra.mxu0 0.0
        %1621 = vmatpush.msra.mxu0 0.0
        %1622 = vmatpush.msra.mxu0 0.0
        %1623 = vmatpush.msra.mxu0 0.0
        %1624 = vmatpush.msra.mxu0 0.0
        %1625 = vmatpush.msra.mxu0 0.0
        %1626 = vmatpush.msra.mxu0 0.0
        %1627 = vmatpush.msra.mxu0 0.0
        %1628 = vmatpush.msra.mxu0 0.0
        %1629 = vmatpush.msra.mxu0 0.0
        %1630 = vmatpush.msra.mxu0 0.0
        %1631 = vmatpush.msra.mxu0 %v1141
        %1632 = vmatpush.msra.mxu0 %v1140
        %1633 = vmatmul.f32.gmra.mxu0 %v1612
        %v1634 = vpop.f32.mrf.mxu0
        %v1635 = vadd.f32 0.0, %v1634
        %1636 = vmatmul.f32.gmra.mxu0 %v1615
        %v1637 = vpop.f32.mrf.mxu0
        %v1638 = vadd.f32 0.0, %v1637
        %1639 = vdwg.mxu0
        %v1641 = vsel %vm1378, %v1606, 0
        %v1644 = vsel %vm1378, %v1609, 0
        %1646 = vmatpush.msra.mxu0 0.0
        %1647 = vmatpush.msra.mxu0 0.0
        %1648 = vmatpush.msra.mxu0 0.0
        %1649 = vmatpush.msra.mxu0 0.0
        %1650 = vmatpush.msra.mxu0 0.0
        %1651 = vmatpush.msra.mxu0 0.0
        %1652 = vmatpush.msra.mxu0 0.0
        %1653 = vmatpush.msra.mxu0 0.0
        %1654 = vmatpush.msra.mxu0 0.0
        %1655 = vmatpush.msra.mxu0 0.0
        %1656 = vmatpush.msra.mxu0 0.0
        %1657 = vmatpush.msra.mxu0 0.0
        %1658 = vmatpush.msra.mxu0 0.0
        %1659 = vmatpush.msra.mxu0 0.0
        %1660 = vmatpush.msra.mxu0 %v1143
        %1661 = vmatpush.msra.mxu0 %v1142
        %1662 = vmatmul.f32.gmra.mxu0 %v1641
        %v1663 = vpop.f32.mrf.mxu0
        %v1664 = vadd.f32 0.0, %v1663
        %1665 = vmatmul.f32.gmra.mxu0 %v1644
        %v1666 = vpop.f32.mrf.mxu0
        %v1667 = vadd.f32 0.0, %v1666
        %1668 = vdwg.mxu0
        %v1669 = vsel %vm1171, %v1635, 0.0
        %v1670 = vsel %vm1171, %v1664, 0.0
        %v1671 = vadd.f32 %v1669, %v1670
        %v1672 = vsel %vm1171, %v1638, 0.0
        %v1673 = vsel %vm1171, %v1667, 0.0
        %v1674 = vadd.f32 %v1672, %v1673
        %v1676 = vperm.slane %v1144, 0
        %v1678 = vadd.f32 %v1671, %v1676
        %v1679 = vadd.f32 %v1674, %v1676
        %v1680 = vadd.f32 %v1678, %v1107
        %v1681 = vadd.f32 %v1679, %v1110
        %v1682 = vmul.f32 %v1680, %v1680
        %v1683 = vmul.f32 %v1681, %v1681
        %v1684 = vsel %vm1171, %v1682, 0.0
        %v1685 = vsel %vm1171, %v1683, 0.0
        %v1686 = vadd.f32 %v1684, %v1685
        %v1687 = vrot.slane %v1686, 4
        %v1688 = vadd.f32 %v1686, %v1687
        %v1689 = vrot.slane %v1688, 2
        %v1690 = vadd.f32 %v1688, %v1689
        %v1691 = vrot.slane %v1690, 1
        %v1692 = vadd.f32 %v1690, %v1691
        %v1693 = vrsqrt.pop %v1692
        %v1694 = vmul.f32 %v1693, %v1692
        %v1695 = vmul.f32 %v1694, %v1693
        %v1696 = vmul.f32 0.5, %v1695
        %v1697 = vsub.f32 1.5, %v1696
        %v1698 = vmul.f32 %v1693, %v1697
        %v1699 = vmul.f32 %v1692, %v1698
        %vm1700 = vcmp.eq.f32.partialorder %v1692, inf
        %v1701 = vsel %vm1700, %v1692, %v1699
        %vm1702 = vcmp.eq.f32.partialorder %v1692, 0.0
        %v1703 = vand.u32 %v1692, 2147483648
        %v1704 = vsel %vm1702, %v1703, %v1701
        %v1705 = vsel %vm1171, %v1704, 0.0
        %1706 = vadd.xlane.f32.xlu0 %v1705
        %v1707 = vpop.xlane.xlu0 %1706
        %v1708 = vmul.f32 %v1707, %v1202
        %v1709 = vadd.f32 %v1708, 1e-06
        %v1710 = vrcp.pop %v1709
        %v1711 = vmul.f32 %v1709, %v1710
        %v1712 = vsub.f32 1.0, %v1711
        %v1713 = vmul.f32 %v1710, %v1712
        %v1714 = vadd.f32 %v1710, %v1713
        %vm1715 = vweird.f32 %v1709
        %vm1716 = vweird.f32 %v1710
        %vm1717 = vmor %vm1715, %vm1716
        %v1718 = vsel %vm1717, %v1710, %v1714
        %v1719 = vand.u32 2147483647, %v1709
        %vm1720 = vcmp.eq.f32.partialorder %v1719, 8.507059e+37
        %v1721 = vand.u32 %v1709, 2147483648
        %v1722 = vor.u32 1.1754944e-38, %v1721
        %v1723 = vsel %vm1720, %v1722, %v1718
        %v1724 = vmul.f32 %v1704, %v1723
        %v1725 = vmul.f32 %v1680, %v1724
        %v1726 = vmul.f32 %v1681, %v1724
        %v1728 = vperm.slane %v1145, 0
        %v1730 = vmul.f32 %v1728, %v1725
        %v1731 = vmul.f32 %v1728, %v1726
        %v1733 = vperm.slane %v1146, 0
        %v1735 = vadd.f32 %v1730, %v1733
        %v1736 = vadd.f32 %v1731, %v1733
        %v1737 = vadd.f32 %v1735, %v1680
        %v1738 = vadd.f32 %v1736, %v1681
        %v1740 = vperm.slane %v1151, 0
        %v1743 = vsel %vm1171, %v1737, 0
        %v1746 = vsel %vm1171, %v1738, 0
        %1748 = vmatpush.msra.mxu0 0.0
        %1749 = vmatpush.msra.mxu0 0.0
        %1750 = vmatpush.msra.mxu0 0.0
        %1751 = vmatpush.msra.mxu0 0.0
        %1752 = vmatpush.msra.mxu0 0.0
        %1753 = vmatpush.msra.mxu0 0.0
        %1754 = vmatpush.msra.mxu0 0.0
        %1755 = vmatpush.msra.mxu0 0.0
        %1756 = vmatpush.msra.mxu0 0.0
        %1757 = vmatpush.msra.mxu0 0.0
        %1758 = vmatpush.msra.mxu0 0.0
        %1759 = vmatpush.msra.mxu0 0.0
        %1760 = vmatpush.msra.mxu0 %v1150
        %1761 = vmatpush.msra.mxu0 %v1149
        %1762 = vmatpush.msra.mxu0 %v1148
        %1763 = vmatpush.msra.mxu0 %v1147
        %1764 = vmatmul.f32.gmra.mxu0 %v1743
        %v1765 = vpop.f32.mrf.mxu0
        %v1766 = vadd.f32 %v1740, %v1765
        %1767 = vmatmul.f32.gmra.mxu0 %v1746
        %v1768 = vpop.f32.mrf.mxu0
        %v1769 = vadd.f32 %v1740, %v1768
        %1770 = vdwg.mxu0
        %v1771 = vmul.f32 %v1766, 0.5
        %v1772 = vmul.f32 %v1769, 0.5
        %v1773 = vmul.f32 %v1766, 0.70710677
        %v1774 = vmul.f32 %v1769, 0.70710677
        %vm1775 = vcmp.ge.f32.partialorder %v1773, 0.0
        %vm1776 = vcmp.ge.f32.partialorder %v1774, 0.0
        %v1777 = vsel %vm1775, 1.0, -1.0
        %v1778 = vsel %vm1776, 1.0, -1.0
        %v1779 = vand.u32 2147483647, %v1773
        %v1780 = vand.u32 2147483647, %v1774
        %v1781 = vmul.f32 %v1779, 0.3275911
        %v1782 = vmul.f32 %v1780, 0.3275911
        %v1783 = vadd.f32 %v1781, 1.0
        %v1784 = vadd.f32 %v1782, 1.0
        %v1785 = vrcp.pop %v1783
        %v1786 = vmul.f32 %v1783, %v1785
        %v1787 = vsub.f32 1.0, %v1786
        %v1788 = vmul.f32 %v1785, %v1787
        %v1789 = vadd.f32 %v1785, %v1788
        %vm1790 = vweird.f32 %v1783
        %vm1791 = vweird.f32 %v1785
        %vm1792 = vmor %vm1790, %vm1791
        %v1793 = vsel %vm1792, %v1785, %v1789
        %v1794 = vand.u32 2147483647, %v1783
        %vm1795 = vcmp.eq.f32.partialorder %v1794, 8.507059e+37
        %v1796 = vand.u32 %v1783, 2147483648
        %v1797 = vor.u32 1.1754944e-38, %v1796
        %v1798 = vsel %vm1795, %v1797, %v1793
        %v1799 = vmul.f32 1.0, %v1798
        %v1800 = vrcp.pop %v1784
        %v1801 = vmul.f32 %v1784, %v1800
        %v1802 = vsub.f32 1.0, %v1801
        %v1803 = vmul.f32 %v1800, %v1802
        %v1804 = vadd.f32 %v1800, %v1803
        %vm1805 = vweird.f32 %v1784
        %vm1806 = vweird.f32 %v1800
        %vm1807 = vmor %vm1805, %vm1806
        %v1808 = vsel %vm1807, %v1800, %v1804
        %v1809 = vand.u32 2147483647, %v1784
        %vm1810 = vcmp.eq.f32.partialorder %v1809, 8.507059e+37
        %v1811 = vand.u32 %v1784, 2147483648
        %v1812 = vor.u32 1.1754944e-38, %v1811
        %v1813 = vsel %vm1810, %v1812, %v1808
        %v1814 = vmul.f32 1.0, %v1813
        %v1815 = vmul.f32 %v1799, 1.0614054
        %v1816 = vmul.f32 %v1814, 1.0614054
        %v1817 = vadd.f32 %v1815, -1.4531521
        %v1818 = vadd.f32 %v1816, -1.4531521
        %v1819 = vmul.f32 %v1817, %v1799
        %v1820 = vmul.f32 %v1818, %v1814
        %v1821 = vadd.f32 %v1819, 1.4214138
        %v1822 = vadd.f32 %v1820, 1.4214138
        %v1823 = vmul.f32 %v1821, %v1799
        %v1824 = vmul.f32 %v1822, %v1814
        %v1825 = vadd.f32 %v1823, -0.28449672
        %v1826 = vadd.f32 %v1824, -0.28449672
        %v1827 = vmul.f32 %v1825, %v1799
        %v1828 = vmul.f32 %v1826, %v1814
        %v1829 = vadd.f32 %v1827, 0.2548296
        %v1830 = vadd.f32 %v1828, 0.2548296
        %v1831 = vmul.f32 %v1829, %v1799
        %v1832 = vmul.f32 %v1830, %v1814
        %v1833 = vsub.f32 0.0, %v1779
        %v1834 = vsub.f32 0.0, %v1780
        %v1835 = vmul.f32 %v1833, %v1779
        %v1836 = vmul.f32 %v1834, %v1780
        %v1837 = vmul.f32 %v1835, 1.442695
        %v1838 = vpow.pop %v1837
        %v1839 = vmul.f32 %v1836, 1.442695
        %v1840 = vpow.pop %v1839
        %v1841 = vmul.f32 %v1831, %v1838
        %v1842 = vmul.f32 %v1832, %v1840
        %v1843 = vsub.f32 1.0, %v1841
        %v1844 = vsub.f32 1.0, %v1842
        %v1845 = vmul.f32 %v1777, %v1843
        %v1846 = vmul.f32 %v1778, %v1844
        %v1847 = vadd.f32 %v1845, 1.0
        %v1848 = vadd.f32 %v1846, 1.0
        %v1849 = vmul.f32 %v1771, %v1847
        %v1850 = vmul.f32 %v1772, %v1848
        %v1852 = vperm.slane %v1168, 0
        %1854 = vmatpush.msra.mxu0 %v1167
        %1855 = vmatpush.msra.mxu0 %v1166
        %1856 = vmatpush.msra.mxu0 %v1165
        %1857 = vmatpush.msra.mxu0 %v1164
        %1858 = vmatpush.msra.mxu0 %v1163
        %1859 = vmatpush.msra.mxu0 %v1162
        %1860 = vmatpush.msra.mxu0 %v1161
        %1861 = vmatpush.msra.mxu0 %v1160
        %1862 = vmatpush.msra.mxu0 %v1159
        %1863 = vmatpush.msra.mxu0 %v1158
        %1864 = vmatpush.msra.mxu0 %v1157
        %1865 = vmatpush.msra.mxu0 %v1156
        %1866 = vmatpush.msra.mxu0 %v1155
        %1867 = vmatpush.msra.mxu0 %v1154
        %1868 = vmatpush.msra.mxu0 %v1153
        %1869 = vmatpush.msra.mxu0 %v1152
        %1870 = vmatmul.f32.gmra.mxu0 %v1849
        %v1871 = vpop.f32.mrf.mxu0
        %v1872 = vadd.f32 %v1852, %v1871
        %1873 = vmatmul.f32.gmra.mxu0 %v1850
        %v1874 = vpop.f32.mrf.mxu0
        %v1875 = vadd.f32 %v1852, %v1874
        %1876 = vdwg.mxu0
        %v1877 = vadd.f32 %v1872, %v1680
        %v1878 = vadd.f32 %v1875, %v1681
        %v1879 = vld [vmem:[%s35] sm:$0xff]
        %v1880 = vld [vmem:[%s35 + $0x8] sm:$0xff]
        %v1881 = vld [vmem:[%s37] sm:$0x1]
        %v1882 = vld [vmem:[%s39] sm:$0x1]
        %v1883 = vld [vmem:[%s41] sm:$0xff]
        %v1884 = vld [vmem:[%s41 + $0x8] sm:$0xff]
        %v1885 = vld [vmem:[%s41 + $0x10] sm:$0xff]
        %v1886 = vld [vmem:[%s41 + $0x18] sm:$0xff]
        %v1887 = vld [vmem:[%s41 + $0x20] sm:$0xff]
        %v1888 = vld [vmem:[%s41 + $0x28] sm:$0xff]
        %v1889 = vld [vmem:[%s41 + $0x30] sm:$0xff]
        %v1890 = vld [vmem:[%s41 + $0x38] sm:$0xff]
        %v1891 = vld [vmem:[%s43] sm:$0xff]
        %v1892 = vld [vmem:[%s43 + $0x8] sm:$0xff]
        %v1893 = vld [vmem:[%s43 + $0x10] sm:$0xff]
        %v1894 = vld [vmem:[%s43 + $0x18] sm:$0xff]
        %v1895 = vld [vmem:[%s43 + $0x20] sm:$0xff]
        %v1896 = vld [vmem:[%s43 + $0x28] sm:$0xff]
        %v1897 = vld [vmem:[%s43 + $0x30] sm:$0xff]
        %v1898 = vld [vmem:[%s43 + $0x38] sm:$0xff]
        %v1899 = vld [vmem:[%s45] sm:$0xff]
        %v1900 = vld [vmem:[%s45 + $0x8] sm:$0xff]
        %v1901 = vld [vmem:[%s45 + $0x10] sm:$0xff]
        %v1902 = vld [vmem:[%s45 + $0x18] sm:$0xff]
        %v1903 = vld [vmem:[%s45 + $0x20] sm:$0xff]
        %v1904 = vld [vmem:[%s45 + $0x28] sm:$0xff]
        %v1905 = vld [vmem:[%s45 + $0x30] sm:$0xff]
        %v1906 = vld [vmem:[%s45 + $0x38] sm:$0xff]
        %v1907 = vld [vmem:[%s47] sm:$0xff]
        %v1908 = vld [vmem:[%s47 + $0x8] sm:$0xff]
        %v1909 = vld [vmem:[%s47 + $0x10] sm:$0xff]
        %v1910 = vld [vmem:[%s47 + $0x18] sm:$0xff]
        %v1911 = vld [vmem:[%s49] sm:$0x1]
        %v1912 = vld [vmem:[%s51] sm:$0x1]
        %v1913 = vld [vmem:[%s53] sm:$0x1]
        %v1914 = vld [vmem:[%s55] sm:$0xff]
        %v1915 = vld [vmem:[%s55 + $0x8] sm:$0xff]
        %v1916 = vld [vmem:[%s55 + $0x10] sm:$0xff]
        %v1917 = vld [vmem:[%s55 + $0x18] sm:$0xff]
        %v1918 = vld [vmem:[%s57] sm:$0x1]
        %v1919 = vld [vmem:[%s59] sm:$0xff]
        %v1920 = vld [vmem:[%s59 + $0x8] sm:$0xff]
        %v1921 = vld [vmem:[%s59 + $0x10] sm:$0xff]
        %v1922 = vld [vmem:[%s59 + $0x18] sm:$0xff]
        %v1923 = vld [vmem:[%s59 + $0x20] sm:$0xff]
        %v1924 = vld [vmem:[%s59 + $0x28] sm:$0xff]
        %v1925 = vld [vmem:[%s59 + $0x30] sm:$0xff]
        %v1926 = vld [vmem:[%s59 + $0x38] sm:$0xff]
        %v1927 = vld [vmem:[%s59 + $0x40] sm:$0xff]
        %v1928 = vld [vmem:[%s59 + $0x48] sm:$0xff]
        %v1929 = vld [vmem:[%s59 + $0x50] sm:$0xff]
        %v1930 = vld [vmem:[%s59 + $0x58] sm:$0xff]
        %v1931 = vld [vmem:[%s59 + $0x60] sm:$0xff]
        %v1932 = vld [vmem:[%s59 + $0x68] sm:$0xff]
        %v1933 = vld [vmem:[%s59 + $0x70] sm:$0xff]
        %v1934 = vld [vmem:[%s59 + $0x78] sm:$0xff]
        %v1935 = vld [vmem:[%s61] sm:$0x1]
        %v1936 = vmul.f32 %v1877, %v1877
        %v1937 = vmul.f32 %v1878, %v1878
        %v1938 = vsel %vm1171, %v1936, 0.0
        %v1939 = vsel %vm1171, %v1937, 0.0
        %v1940 = vadd.f32 %v1938, %v1939
        %v1941 = vrot.slane %v1940, 4
        %v1942 = vadd.f32 %v1940, %v1941
        %v1943 = vrot.slane %v1942, 2
        %v1944 = vadd.f32 %v1942, %v1943
        %v1945 = vrot.slane %v1944, 1
        %v1946 = vadd.f32 %v1944, %v1945
        %v1947 = vrsqrt.pop %v1946
        %v1948 = vmul.f32 %v1947, %v1946
        %v1949 = vmul.f32 %v1948, %v1947
        %v1950 = vmul.f32 0.5, %v1949
        %v1951 = vsub.f32 1.5, %v1950
        %v1952 = vmul.f32 %v1947, %v1951
        %v1953 = vmul.f32 %v1946, %v1952
        %vm1954 = vcmp.eq.f32.partialorder %v1946, inf
        %v1955 = vsel %vm1954, %v1946, %v1953
        %vm1956 = vcmp.eq.f32.partialorder %v1946, 0.0
        %v1957 = vand.u32 %v1946, 2147483648
        %v1958 = vsel %vm1956, %v1957, %v1955
        %v1959 = vsel %vm1171, %v1958, 0.0
        %1960 = vadd.xlane.f32.xlu0 %v1959
        %v1961 = vpop.xlane.xlu0 %1960
        %v1962 = vmul.f32 %v1961, %v1202
        %v1963 = vadd.f32 %v1962, 1e-06
        %v1964 = vrcp.pop %v1963
        %v1965 = vmul.f32 %v1963, %v1964
        %v1966 = vsub.f32 1.0, %v1965
        %v1967 = vmul.f32 %v1964, %v1966
        %v1968 = vadd.f32 %v1964, %v1967
        %vm1969 = vweird.f32 %v1963
        %vm1970 = vweird.f32 %v1964
        %vm1971 = vmor %vm1969, %vm1970
        %v1972 = vsel %vm1971, %v1964, %v1968
        %v1973 = vand.u32 2147483647, %v1963
        %vm1974 = vcmp.eq.f32.partialorder %v1973, 8.507059e+37
        %v1975 = vand.u32 %v1963, 2147483648
        %v1976 = vor.u32 1.1754944e-38, %v1975
        %v1977 = vsel %vm1974, %v1976, %v1972
        %v1978 = vmul.f32 %v1958, %v1977
        %v1979 = vmul.f32 %v1877, %v1978
        %v1980 = vmul.f32 %v1878, %v1978
        %v1982 = vperm.slane %v1881, 0
        %v1984 = vmul.f32 %v1982, %v1979
        %v1985 = vmul.f32 %v1982, %v1980
        %v1987 = vperm.slane %v1882, 0
        %v1989 = vadd.f32 %v1984, %v1987
        %v1990 = vadd.f32 %v1985, %v1987
        %v1991 = vadd.f32 %v1989, %v1877
        %v1992 = vadd.f32 %v1990, %v1878
        %v1994 = vsel %vm1171, %v1991, 0
        %v1997 = vsel %vm1171, %v1992, 0
        %1999 = vmatpush.msra.mxu0 0.0
        %2000 = vmatpush.msra.mxu0 0.0
        %2001 = vmatpush.msra.mxu0 0.0
        %2002 = vmatpush.msra.mxu0 0.0
        %2003 = vmatpush.msra.mxu0 0.0
        %2004 = vmatpush.msra.mxu0 0.0
        %2005 = vmatpush.msra.mxu0 0.0
        %2006 = vmatpush.msra.mxu0 0.0
        %2007 = vmatpush.msra.mxu0 0.0
        %2008 = vmatpush.msra.mxu0 0.0
        %2009 = vmatpush.msra.mxu0 0.0
        %2010 = vmatpush.msra.mxu0 0.0
        %2011 = vmatpush.msra.mxu0 %v1886
        %2012 = vmatpush.msra.mxu0 %v1885
        %2013 = vmatpush.msra.mxu0 %v1884
        %2014 = vmatpush.msra.mxu0 %v1883
        %2015 = vmatmul.f32.gmra.mxu0 %v1994
        %v2016 = vpop.f32.mrf.mxu0
        %v2017 = vadd.f32 0.0, %v2016
        %2018 = vmatmul.f32.gmra.mxu0 %v1997
        %v2019 = vpop.f32.mrf.mxu0
        %v2020 = vadd.f32 0.0, %v2019
        %2021 = vdwg.mxu0
        %2022 = vmatpush.msra.mxu0 0.0
        %2023 = vmatpush.msra.mxu0 0.0
        %2024 = vmatpush.msra.mxu0 0.0
        %2025 = vmatpush.msra.mxu0 0.0
        %2026 = vmatpush.msra.mxu0 0.0
        %2027 = vmatpush.msra.mxu0 0.0
        %2028 = vmatpush.msra.mxu0 0.0
        %2029 = vmatpush.msra.mxu0 0.0
        %2030 = vmatpush.msra.mxu0 0.0
        %2031 = vmatpush.msra.mxu0 0.0
        %2032 = vmatpush.msra.mxu0 0.0
        %2033 = vmatpush.msra.mxu0 0.0
        %2034 = vmatpush.msra.mxu0 %v1890
        %2035 = vmatpush.msra.mxu0 %v1889
        %2036 = vmatpush.msra.mxu0 %v1888
        %2037 = vmatpush.msra.mxu0 %v1887
        %2038 = vmatmul.f32.gmra.mxu0 %v1994
        %v2039 = vpop.f32.mrf.mxu0
        %v2040 = vadd.f32 0.0, %v2039
        %2041 = vmatmul.f32.gmra.mxu0 %v1997
        %v2042 = vpop.f32.mrf.mxu0
        %v2043 = vadd.f32 0.0, %v2042
        %2044 = vdwg.mxu0
        %2045 = vmatpush.msra.mxu0 0.0
        %2046 = vmatpush.msra.mxu0 0.0
        %2047 = vmatpush.msra.mxu0 0.0
        %2048 = vmatpush.msra.mxu0 0.0
        %2049 = vmatpush.msra.mxu0 0.0
        %2050 = vmatpush.msra.mxu0 0.0
        %2051 = vmatpush.msra.mxu0 0.0
        %2052 = vmatpush.msra.mxu0 0.0
        %2053 = vmatpush.msra.mxu0 0.0
        %2054 = vmatpush.msra.mxu0 0.0
        %2055 = vmatpush.msra.mxu0 0.0
        %2056 = vmatpush.msra.mxu0 0.0
        %2057 = vmatpush.msra.mxu0 %v1894
        %2058 = vmatpush.msra.mxu0 %v1893
        %2059 = vmatpush.msra.mxu0 %v1892
        %2060 = vmatpush.msra.mxu0 %v1891
        %2061 = vmatmul.f32.gmra.mxu0 %v1994
        %v2062 = vpop.f32.mrf.mxu0
        %v2063 = vadd.f32 0.0, %v2062
        %2064 = vmatmul.f32.gmra.mxu0 %v1997
        %v2065 = vpop.f32.mrf.mxu0
        %v2066 = vadd.f32 0.0, %v2065
        %2067 = vdwg.mxu0
        %2068 = vmatpush.msra.mxu0 0.0
        %2069 = vmatpush.msra.mxu0 0.0
        %2070 = vmatpush.msra.mxu0 0.0
        %2071 = vmatpush.msra.mxu0 0.0
        %2072 = vmatpush.msra.mxu0 0.0
        %2073 = vmatpush.msra.mxu0 0.0
        %2074 = vmatpush.msra.mxu0 0.0
        %2075 = vmatpush.msra.mxu0 0.0
        %2076 = vmatpush.msra.mxu0 0.0
        %2077 = vmatpush.msra.mxu0 0.0
        %2078 = vmatpush.msra.mxu0 0.0
        %2079 = vmatpush.msra.mxu0 0.0
        %2080 = vmatpush.msra.mxu0 %v1898
        %2081 = vmatpush.msra.mxu0 %v1897
        %2082 = vmatpush.msra.mxu0 %v1896
        %2083 = vmatpush.msra.mxu0 %v1895
        %2084 = vmatmul.f32.gmra.mxu0 %v1994
        %v2085 = vpop.f32.mrf.mxu0
        %v2086 = vadd.f32 0.0, %v2085
        %2087 = vmatmul.f32.gmra.mxu0 %v1997
        %v2088 = vpop.f32.mrf.mxu0
        %v2089 = vadd.f32 0.0, %v2088
        %2090 = vdwg.mxu0
        %2091 = vmatpush.msra.mxu0 0.0
        %2092 = vmatpush.msra.mxu0 0.0
        %2093 = vmatpush.msra.mxu0 0.0
        %2094 = vmatpush.msra.mxu0 0.0
        %2095 = vmatpush.msra.mxu0 0.0
        %2096 = vmatpush.msra.mxu0 0.0
        %2097 = vmatpush.msra.mxu0 0.0
        %2098 = vmatpush.msra.mxu0 0.0
        %2099 = vmatpush.msra.mxu0 0.0
        %2100 = vmatpush.msra.mxu0 0.0
        %2101 = vmatpush.msra.mxu0 0.0
        %2102 = vmatpush.msra.mxu0 0.0
        %2103 = vmatpush.msra.mxu0 %v1902
        %2104 = vmatpush.msra.mxu0 %v1901
        %2105 = vmatpush.msra.mxu0 %v1900
        %2106 = vmatpush.msra.mxu0 %v1899
        %2107 = vmatmul.f32.gmra.mxu0 %v1994
        %v2108 = vpop.f32.mrf.mxu0
        %v2109 = vadd.f32 0.0, %v2108
        %2110 = vmatmul.f32.gmra.mxu0 %v1997
        %v2111 = vpop.f32.mrf.mxu0
        %v2112 = vadd.f32 0.0, %v2111
        %2113 = vdwg.mxu0
        %2114 = vmatpush.msra.mxu0 0.0
        %2115 = vmatpush.msra.mxu0 0.0
        %2116 = vmatpush.msra.mxu0 0.0
        %2117 = vmatpush.msra.mxu0 0.0
        %2118 = vmatpush.msra.mxu0 0.0
        %2119 = vmatpush.msra.mxu0 0.0
        %2120 = vmatpush.msra.mxu0 0.0
        %2121 = vmatpush.msra.mxu0 0.0
        %2122 = vmatpush.msra.mxu0 0.0
        %2123 = vmatpush.msra.mxu0 0.0
        %2124 = vmatpush.msra.mxu0 0.0
        %2125 = vmatpush.msra.mxu0 0.0
        %2126 = vmatpush.msra.mxu0 %v1906
        %2127 = vmatpush.msra.mxu0 %v1905
        %2128 = vmatpush.msra.mxu0 %v1904
        %2129 = vmatpush.msra.mxu0 %v1903
        %2130 = vmatmul.f32.gmra.mxu0 %v1994
        %v2131 = vpop.f32.mrf.mxu0
        %v2132 = vadd.f32 0.0, %v2131
        %2133 = vmatmul.f32.gmra.mxu0 %v1997
        %v2134 = vpop.f32.mrf.mxu0
        %v2135 = vadd.f32 0.0, %v2134
        %2136 = vdwg.mxu0
        %v2138 = vsel %vm1378, %v2017, 0
        %v2141 = vsel %vm1378, %v2020, 0
        %v2144 = vsel %vm1378, %v2063, 0
        %v2147 = vsel %vm1378, %v2066, 0
        %2149 = vmatpush.xpose.msra.mxu0 0.0
        %2150 = vmatpush.xpose.msra.mxu0 0.0
        %2151 = vmatpush.xpose.msra.mxu0 0.0
        %2152 = vmatpush.xpose.msra.mxu0 0.0
        %2153 = vmatpush.xpose.msra.mxu0 0.0
        %2154 = vmatpush.xpose.msra.mxu0 0.0
        %2155 = vmatpush.xpose.msra.mxu0 0.0
        %2156 = vmatpush.xpose.msra.mxu0 0.0
        %2157 = vmatpush.xpose.msra.mxu0 0.0
        %2158 = vmatpush.xpose.msra.mxu0 0.0
        %2159 = vmatpush.xpose.msra.mxu0 0.0
        %2160 = vmatpush.xpose.msra.mxu0 0.0
        %2161 = vmatpush.xpose.msra.mxu0 0.0
        %2162 = vmatpush.xpose.msra.mxu0 0.0
        %2163 = vmatpush.xpose.msra.mxu0 %v2147
        %2164 = vmatpush.xpose.msra.mxu0 %v2144
        %2165 = vmatmul.f32.gmra.mxu0 %v2138
        %v2166 = vpop.f32.mrf.mxu0
        %v2167 = vadd.f32 0.0, %v2166
        %2168 = vmatmul.f32.gmra.mxu0 %v2141
        %v2169 = vpop.f32.mrf.mxu0
        %v2170 = vadd.f32 0.0, %v2169
        %2171 = vdwg.mxu0
        %v2173 = vsel %vm1378, %v2040, 0
        %v2176 = vsel %vm1378, %v2043, 0
        %v2179 = vsel %vm1378, %v2086, 0
        %v2182 = vsel %vm1378, %v2089, 0
        %2184 = vmatpush.xpose.msra.mxu0 0.0
        %2185 = vmatpush.xpose.msra.mxu0 0.0
        %2186 = vmatpush.xpose.msra.mxu0 0.0
        %2187 = vmatpush.xpose.msra.mxu0 0.0
        %2188 = vmatpush.xpose.msra.mxu0 0.0
        %2189 = vmatpush.xpose.msra.mxu0 0.0
        %2190 = vmatpush.xpose.msra.mxu0 0.0
        %2191 = vmatpush.xpose.msra.mxu0 0.0
        %2192 = vmatpush.xpose.msra.mxu0 0.0
        %2193 = vmatpush.xpose.msra.mxu0 0.0
        %2194 = vmatpush.xpose.msra.mxu0 0.0
        %2195 = vmatpush.xpose.msra.mxu0 0.0
        %2196 = vmatpush.xpose.msra.mxu0 0.0
        %2197 = vmatpush.xpose.msra.mxu0 0.0
        %2198 = vmatpush.xpose.msra.mxu0 %v2182
        %2199 = vmatpush.xpose.msra.mxu0 %v2179
        %2200 = vmatmul.f32.gmra.mxu0 %v2173
        %v2201 = vpop.f32.mrf.mxu0
        %v2202 = vadd.f32 0.0, %v2201
        %2203 = vmatmul.f32.gmra.mxu0 %v2176
        %v2204 = vpop.f32.mrf.mxu0
        %v2205 = vadd.f32 0.0, %v2204
        %2206 = vdwg.mxu0
        %v2207 = vmul.f32 %v2167, 0.25
        %v2208 = vmul.f32 %v2170, 0.25
        %v2209 = vmul.f32 %v2202, 0.25
        %v2210 = vmul.f32 %v2205, 0.25
        %v2211 = vadd.f32 %v2207, %v1879
        %v2212 = vadd.f32 %v2208, %v1880
        %v2213 = vadd.f32 %v2209, %v1879
        %v2214 = vadd.f32 %v2210, %v1880
        %v2215 = vsel %vm1378, %v2211, -inf
        %2216 = vmax.xlane.f32.xlu0 %v2215
        %v2217 = vpop.xlane.xlu0 %2216
        %v2218 = vsel %vm1378, %v2212, -inf
        %2219 = vmax.xlane.f32.xlu0 %v2218
        %v2220 = vpop.xlane.xlu0 %2219
        %v2221 = vsel %vm1378, %v2213, -inf
        %2222 = vmax.xlane.f32.xlu0 %v2221
        %v2223 = vpop.xlane.xlu0 %2222
        %v2224 = vsel %vm1378, %v2214, -inf
        %2225 = vmax.xlane.f32.xlu0 %v2224
        %v2226 = vpop.xlane.xlu0 %2225
        %v2227 = vsub.f32 %v2211, %v2217
        %v2228 = vsub.f32 %v2212, %v2220
        %v2229 = vsub.f32 %v2213, %v2223
        %v2230 = vsub.f32 %v2214, %v2226
        %v2231 = vmul.f32 %v2227, 1.442695
        %v2232 = vpow.pop %v2231
        %v2233 = vmul.f32 %v2228, 1.442695
        %v2234 = vpow.pop %v2233
        %v2235 = vmul.f32 %v2229, 1.442695
        %v2236 = vpow.pop %v2235
        %v2237 = vmul.f32 %v2230, 1.442695
        %v2238 = vpow.pop %v2237
        %v2239 = vsel %vm1378, %v2232, 0.0
        %2240 = vadd.xlane.f32.xlu0 %v2239
        %v2241 = vpop.xlane.xlu0 %2240
        %v2242 = vsel %vm1378, %v2234, 0.0
        %2243 = vadd.xlane.f32.xlu0 %v2242
        %v2244 = vpop.xlane.xlu0 %2243
        %v2245 = vsel %vm1378, %v2236, 0.0
        %2246 = vadd.xlane.f32.xlu0 %v2245
        %v2247 = vpop.xlane.xlu0 %2246
        %v2248 = vsel %vm1378, %v2238, 0.0
        %2249 = vadd.xlane.f32.xlu0 %v2248
        %v2250 = vpop.xlane.xlu0 %2249
        %v2251 = vrcp.pop %v2241
        %v2252 = vmul.f32 %v2241, %v2251
        %v2253 = vsub.f32 1.0, %v2252
        %v2254 = vmul.f32 %v2251, %v2253
        %v2255 = vadd.f32 %v2251, %v2254
        %vm2256 = vweird.f32 %v2241
        %vm2257 = vweird.f32 %v2251
        %vm2258 = vmor %vm2256, %vm2257
        %v2259 = vsel %vm2258, %v2251, %v2255
        %v2260 = vand.u32 2147483647, %v2241
        %vm2261 = vcmp.eq.f32.partialorder %v2260, 8.507059e+37
        %v2262 = vand.u32 %v2241, 2147483648
        %v2263 = vor.u32 1.1754944e-38, %v2262
        %v2264 = vsel %vm2261, %v2263, %v2259
        %v2265 = vmul.f32 %v2232, %v2264
        %v2266 = vrcp.pop %v2244
        %v2267 = vmul.f32 %v2244, %v2266
        %v2268 = vsub.f32 1.0, %v2267
        %v2269 = vmul.f32 %v2266, %v2268
        %v2270 = vadd.f32 %v2266, %v2269
        %vm2271 = vweird.f32 %v2244
        %vm2272 = vweird.f32 %v2266
        %vm2273 = vmor %vm2271, %vm2272
        %v2274 = vsel %vm2273, %v2266, %v2270
        %v2275 = vand.u32 2147483647, %v2244
        %vm2276 = vcmp.eq.f32.partialorder %v2275, 8.507059e+37
        %v2277 = vand.u32 %v2244, 2147483648
        %v2278 = vor.u32 1.1754944e-38, %v2277
        %v2279 = vsel %vm2276, %v2278, %v2274
        %v2280 = vmul.f32 %v2234, %v2279
        %v2281 = vrcp.pop %v2247
        %v2282 = vmul.f32 %v2247, %v2281
        %v2283 = vsub.f32 1.0, %v2282
        %v2284 = vmul.f32 %v2281, %v2283
        %v2285 = vadd.f32 %v2281, %v2284
        %vm2286 = vweird.f32 %v2247
        %vm2287 = vweird.f32 %v2281
        %vm2288 = vmor %vm2286, %vm2287
        %v2289 = vsel %vm2288, %v2281, %v2285
        %v2290 = vand.u32 2147483647, %v2247
        %vm2291 = vcmp.eq.f32.partialorder %v2290, 8.507059e+37
        %v2292 = vand.u32 %v2247, 2147483648
        %v2293 = vor.u32 1.1754944e-38, %v2292
        %v2294 = vsel %vm2291, %v2293, %v2289
        %v2295 = vmul.f32 %v2236, %v2294
        %v2296 = vrcp.pop %v2250
        %v2297 = vmul.f32 %v2250, %v2296
        %v2298 = vsub.f32 1.0, %v2297
        %v2299 = vmul.f32 %v2296, %v2298
        %v2300 = vadd.f32 %v2296, %v2299
        %vm2301 = vweird.f32 %v2250
        %vm2302 = vweird.f32 %v2296
        %vm2303 = vmor %vm2301, %vm2302
        %v2304 = vsel %vm2303, %v2296, %v2300
        %v2305 = vand.u32 2147483647, %v2250
        %vm2306 = vcmp.eq.f32.partialorder %v2305, 8.507059e+37
        %v2307 = vand.u32 %v2250, 2147483648
        %v2308 = vor.u32 1.1754944e-38, %v2307
        %v2309 = vsel %vm2306, %v2308, %v2304
        %v2310 = vmul.f32 %v2238, %v2309
        %v2312 = vsel %vm1378, %v2265, 0
        %v2315 = vsel %vm1378, %v2280, 0
        %2317 = vmatpush.msra.mxu0 0.0
        %2318 = vmatpush.msra.mxu0 0.0
        %2319 = vmatpush.msra.mxu0 0.0
        %2320 = vmatpush.msra.mxu0 0.0
        %2321 = vmatpush.msra.mxu0 0.0
        %2322 = vmatpush.msra.mxu0 0.0
        %2323 = vmatpush.msra.mxu0 0.0
        %2324 = vmatpush.msra.mxu0 0.0
        %2325 = vmatpush.msra.mxu0 0.0
        %2326 = vmatpush.msra.mxu0 0.0
        %2327 = vmatpush.msra.mxu0 0.0
        %2328 = vmatpush.msra.mxu0 0.0
        %2329 = vmatpush.msra.mxu0 0.0
        %2330 = vmatpush.msra.mxu0 0.0
        %2331 = vmatpush.msra.mxu0 %v2112
        %2332 = vmatpush.msra.mxu0 %v2109
        %2333 = vmatmul.f32.gmra.mxu0 %v2312
        %v2334 = vpop.f32.mrf.mxu0
        %v2335 = vadd.f32 0.0, %v2334
        %2336 = vmatmul.f32.gmra.mxu0 %v2315
        %v2337 = vpop.f32.mrf.mxu0
        %v2338 = vadd.f32 0.0, %v2337
        %2339 = vdwg.mxu0
        %v2341 = vsel %vm1378, %v2295, 0
        %v2344 = vsel %vm1378, %v2310, 0
        %2346 = vmatpush.msra.mxu0 0.0
        %2347 = vmatpush.msra.mxu0 0.0
        %2348 = vmatpush.msra.mxu0 0.0
        %2349 = vmatpush.msra.mxu0 0.0
        %2350 = vmatpush.msra.mxu0 0.0
        %2351 = vmatpush.msra.mxu0 0.0
        %2352 = vmatpush.msra.mxu0 0.0
        %2353 = vmatpush.msra.mxu0 0.0
        %2354 = vmatpush.msra.mxu0 0.0
        %2355 = vmatpush.msra.mxu0 0.0
        %2356 = vmatpush.msra.mxu0 0.0
        %2357 = vmatpush.msra.mxu0 0.0
        %2358 = vmatpush.msra.mxu0 0.0
        %2359 = vmatpush.msra.mxu0 0.0
        %2360 = vmatpush.msra.mxu0 %v2135
        %2361 = vmatpush.msra.mxu0 %v2132
        %2362 = vmatmul.f32.gmra.mxu0 %v2341
        %v2363 = vpop.f32.mrf.mxu0
        %v2364 = vadd.f32 0.0, %v2363
        %2365 = vmatmul.f32.gmra.mxu0 %v2344
        %v2366 = vpop.f32.mrf.mxu0
        %v2367 = vadd.f32 0.0, %v2366
        %2368 = vdwg.mxu0
        %v2370 = vsel %vm1378, %v2335, 0
        %v2373 = vsel %vm1378, %v2338, 0
        %2375 = vmatpush.msra.mxu0 0.0
        %2376 = vmatpush.msra.mxu0 0.0
        %2377 = vmatpush.msra.mxu0 0.0
        %2378 = vmatpush.msra.mxu0 0.0
        %2379 = vmatpush.msra.mxu0 0.0
        %2380 = vmatpush.msra.mxu0 0.0
        %2381 = vmatpush.msra.mxu0 0.0
        %2382 = vmatpush.msra.mxu0 0.0
        %2383 = vmatpush.msra.mxu0 0.0
        %2384 = vmatpush.msra.mxu0 0.0
        %2385 = vmatpush.msra.mxu0 0.0
        %2386 = vmatpush.msra.mxu0 0.0
        %2387 = vmatpush.msra.mxu0 0.0
        %2388 = vmatpush.msra.mxu0 0.0
        %2389 = vmatpush.msra.mxu0 %v1908
        %2390 = vmatpush.msra.mxu0 %v1907
        %2391 = vmatmul.f32.gmra.mxu0 %v2370
        %v2392 = vpop.f32.mrf.mxu0
        %v2393 = vadd.f32 0.0, %v2392
        %2394 = vmatmul.f32.gmra.mxu0 %v2373
        %v2395 = vpop.f32.mrf.mxu0
        %v2396 = vadd.f32 0.0, %v2395
        %2397 = vdwg.mxu0
        %v2399 = vsel %vm1378, %v2364, 0
        %v2402 = vsel %vm1378, %v2367, 0
        %2404 = vmatpush.msra.mxu0 0.0
        %2405 = vmatpush.msra.mxu0 0.0
        %2406 = vmatpush.msra.mxu0 0.0
        %2407 = vmatpush.msra.mxu0 0.0
        %2408 = vmatpush.msra.mxu0 0.0
        %2409 = vmatpush.msra.mxu0 0.0
        %2410 = vmatpush.msra.mxu0 0.0
        %2411 = vmatpush.msra.mxu0 0.0
        %2412 = vmatpush.msra.mxu0 0.0
        %2413 = vmatpush.msra.mxu0 0.0
        %2414 = vmatpush.msra.mxu0 0.0
        %2415 = vmatpush.msra.mxu0 0.0
        %2416 = vmatpush.msra.mxu0 0.0
        %2417 = vmatpush.msra.mxu0 0.0
        %2418 = vmatpush.msra.mxu0 %v1910
        %2419 = vmatpush.msra.mxu0 %v1909
        %2420 = vmatmul.f32.gmra.mxu0 %v2399
        %v2421 = vpop.f32.mrf.mxu0
        %v2422 = vadd.f32 0.0, %v2421
        %2423 = vmatmul.f32.gmra.mxu0 %v2402
        %v2424 = vpop.f32.mrf.mxu0
        %v2425 = vadd.f32 0.0, %v2424
        %2426 = vdwg.mxu0
        %v2427 = vsel %vm1171, %v2393, 0.0
        %v2428 = vsel %vm1171, %v2422, 0.0
        %v2429 = vadd.f32 %v2427, %v2428
        %v2430 = vsel %vm1171, %v2396, 0.0
        %v2431 = vsel %vm1171, %v2425, 0.0
        %v2432 = vadd.f32 %v2430, %v2431
        %v2434 = vperm.slane %v1911, 0
        %v2436 = vadd.f32 %v2429, %v2434
        %v2437 = vadd.f32 %v2432, %v2434
        %v2438 = vadd.f32 %v2436, %v1877
        %v2439 = vadd.f32 %v2437, %v1878
        %v2440 = vmul.f32 %v2438, %v2438
        %v2441 = vmul.f32 %v2439, %v2439
        %v2442 = vsel %vm1171, %v2440, 0.0
        %v2443 = vsel %vm1171, %v2441, 0.0
        %v2444 = vadd.f32 %v2442, %v2443
        %v2445 = vrot.slane %v2444, 4
        %v2446 = vadd.f32 %v2444, %v2445
        %v2447 = vrot.slane %v2446, 2
        %v2448 = vadd.f32 %v2446, %v2447
        %v2449 = vrot.slane %v2448, 1
        %v2450 = vadd.f32 %v2448, %v2449
        %v2451 = vrsqrt.pop %v2450
        %v2452 = vmul.f32 %v2451, %v2450
        %v2453 = vmul.f32 %v2452, %v2451
        %v2454 = vmul.f32 0.5, %v2453
        %v2455 = vsub.f32 1.5, %v2454
        %v2456 = vmul.f32 %v2451, %v2455
        %v2457 = vmul.f32 %v2450, %v2456
        %vm2458 = vcmp.eq.f32.partialorder %v2450, inf
        %v2459 = vsel %vm2458, %v2450, %v2457
        %vm2460 = vcmp.eq.f32.partialorder %v2450, 0.0
        %v2461 = vand.u32 %v2450, 2147483648
        %v2462 = vsel %vm2460, %v2461, %v2459
        %v2463 = vsel %vm1171, %v2462, 0.0
        %2464 = vadd.xlane.f32.xlu0 %v2463
        %v2465 = vpop.xlane.xlu0 %2464
        %v2466 = vmul.f32 %v2465, %v1202
        %v2467 = vadd.f32 %v2466, 1e-06
        %v2468 = vrcp.pop %v2467
        %v2469 = vmul.f32 %v2467, %v2468
        %v2470 = vsub.f32 1.0, %v2469
        %v2471 = vmul.f32 %v2468, %v2470
        %v2472 = vadd.f32 %v2468, %v2471
        %vm2473 = vweird.f32 %v2467
        %vm2474 = vweird.f32 %v2468
        %vm2475 = vmor %vm2473, %vm2474
        %v2476 = vsel %vm2475, %v2468, %v2472
        %v2477 = vand.u32 2147483647, %v2467
        %vm2478 = vcmp.eq.f32.partialorder %v2477, 8.507059e+37
        %v2479 = vand.u32 %v2467, 2147483648
        %v2480 = vor.u32 1.1754944e-38, %v2479
        %v2481 = vsel %vm2478, %v2480, %v2476
        %v2482 = vmul.f32 %v2462, %v2481
        %v2483 = vmul.f32 %v2438, %v2482
        %v2484 = vmul.f32 %v2439, %v2482
        %v2486 = vperm.slane %v1912, 0
        %v2488 = vmul.f32 %v2486, %v2483
        %v2489 = vmul.f32 %v2486, %v2484
        %v2491 = vperm.slane %v1913, 0
        %v2493 = vadd.f32 %v2488, %v2491
        %v2494 = vadd.f32 %v2489, %v2491
        %v2495 = vadd.f32 %v2493, %v2438
        %v2496 = vadd.f32 %v2494, %v2439
        %v2498 = vperm.slane %v1918, 0
        %v2501 = vsel %vm1171, %v2495, 0
        %v2504 = vsel %vm1171, %v2496, 0
        %2506 = vmatpush.msra.mxu0 0.0
        %2507 = vmatpush.msra.mxu0 0.0
        %2508 = vmatpush.msra.mxu0 0.0
        %2509 = vmatpush.msra.mxu0 0.0
        %2510 = vmatpush.msra.mxu0 0.0
        %2511 = vmatpush.msra.mxu0 0.0
        %2512 = vmatpush.msra.mxu0 0.0
        %2513 = vmatpush.msra.mxu0 0.0
        %2514 = vmatpush.msra.mxu0 0.0
        %2515 = vmatpush.msra.mxu0 0.0
        %2516 = vmatpush.msra.mxu0 0.0
        %2517 = vmatpush.msra.mxu0 0.0
        %2518 = vmatpush.msra.mxu0 %v1917
        %2519 = vmatpush.msra.mxu0 %v1916
        %2520 = vmatpush.msra.mxu0 %v1915
        %2521 = vmatpush.msra.mxu0 %v1914
        %2522 = vmatmul.f32.gmra.mxu0 %v2501
        %v2523 = vpop.f32.mrf.mxu0
        %v2524 = vadd.f32 %v2498, %v2523
        %2525 = vmatmul.f32.gmra.mxu0 %v2504
        %v2526 = vpop.f32.mrf.mxu0
        %v2527 = vadd.f32 %v2498, %v2526
        %2528 = vdwg.mxu0
        %v2529 = vmul.f32 %v2524, 0.5
        %v2530 = vmul.f32 %v2527, 0.5
        %v2531 = vmul.f32 %v2524, 0.70710677
        %v2532 = vmul.f32 %v2527, 0.70710677
        %vm2533 = vcmp.ge.f32.partialorder %v2531, 0.0
        %vm2534 = vcmp.ge.f32.partialorder %v2532, 0.0
        %v2535 = vsel %vm2533, 1.0, -1.0
        %v2536 = vsel %vm2534, 1.0, -1.0
        %v2537 = vand.u32 2147483647, %v2531
        %v2538 = vand.u32 2147483647, %v2532
        %v2539 = vmul.f32 %v2537, 0.3275911
        %v2540 = vmul.f32 %v2538, 0.3275911
        %v2541 = vadd.f32 %v2539, 1.0
        %v2542 = vadd.f32 %v2540, 1.0
        %v2543 = vrcp.pop %v2541
        %v2544 = vmul.f32 %v2541, %v2543
        %v2545 = vsub.f32 1.0, %v2544
        %v2546 = vmul.f32 %v2543, %v2545
        %v2547 = vadd.f32 %v2543, %v2546
        %vm2548 = vweird.f32 %v2541
        %vm2549 = vweird.f32 %v2543
        %vm2550 = vmor %vm2548, %vm2549
        %v2551 = vsel %vm2550, %v2543, %v2547
        %v2552 = vand.u32 2147483647, %v2541
        %vm2553 = vcmp.eq.f32.partialorder %v2552, 8.507059e+37
        %v2554 = vand.u32 %v2541, 2147483648
        %v2555 = vor.u32 1.1754944e-38, %v2554
        %v2556 = vsel %vm2553, %v2555, %v2551
        %v2557 = vmul.f32 1.0, %v2556
        %v2558 = vrcp.pop %v2542
        %v2559 = vmul.f32 %v2542, %v2558
        %v2560 = vsub.f32 1.0, %v2559
        %v2561 = vmul.f32 %v2558, %v2560
        %v2562 = vadd.f32 %v2558, %v2561
        %vm2563 = vweird.f32 %v2542
        %vm2564 = vweird.f32 %v2558
        %vm2565 = vmor %vm2563, %vm2564
        %v2566 = vsel %vm2565, %v2558, %v2562
        %v2567 = vand.u32 2147483647, %v2542
        %vm2568 = vcmp.eq.f32.partialorder %v2567, 8.507059e+37
        %v2569 = vand.u32 %v2542, 2147483648
        %v2570 = vor.u32 1.1754944e-38, %v2569
        %v2571 = vsel %vm2568, %v2570, %v2566
        %v2572 = vmul.f32 1.0, %v2571
        %v2573 = vmul.f32 %v2557, 1.0614054
        %v2574 = vmul.f32 %v2572, 1.0614054
        %v2575 = vadd.f32 %v2573, -1.4531521
        %v2576 = vadd.f32 %v2574, -1.4531521
        %v2577 = vmul.f32 %v2575, %v2557
        %v2578 = vmul.f32 %v2576, %v2572
        %v2579 = vadd.f32 %v2577, 1.4214138
        %v2580 = vadd.f32 %v2578, 1.4214138
        %v2581 = vmul.f32 %v2579, %v2557
        %v2582 = vmul.f32 %v2580, %v2572
        %v2583 = vadd.f32 %v2581, -0.28449672
        %v2584 = vadd.f32 %v2582, -0.28449672
        %v2585 = vmul.f32 %v2583, %v2557
        %v2586 = vmul.f32 %v2584, %v2572
        %v2587 = vadd.f32 %v2585, 0.2548296
        %v2588 = vadd.f32 %v2586, 0.2548296
        %v2589 = vmul.f32 %v2587, %v2557
        %v2590 = vmul.f32 %v2588, %v2572
        %v2591 = vsub.f32 0.0, %v2537
        %v2592 = vsub.f32 0.0, %v2538
        %v2593 = vmul.f32 %v2591, %v2537
        %v2594 = vmul.f32 %v2592, %v2538
        %v2595 = vmul.f32 %v2593, 1.442695
        %v2596 = vpow.pop %v2595
        %v2597 = vmul.f32 %v2594, 1.442695
        %v2598 = vpow.pop %v2597
        %v2599 = vmul.f32 %v2589, %v2596
        %v2600 = vmul.f32 %v2590, %v2598
        %v2601 = vsub.f32 1.0, %v2599
        %v2602 = vsub.f32 1.0, %v2600
        %v2603 = vmul.f32 %v2535, %v2601
        %v2604 = vmul.f32 %v2536, %v2602
        %v2605 = vadd.f32 %v2603, 1.0
        %v2606 = vadd.f32 %v2604, 1.0
        %v2607 = vmul.f32 %v2529, %v2605
        %v2608 = vmul.f32 %v2530, %v2606
        %v2610 = vperm.slane %v1935, 0
        %2612 = vmatpush.msra.mxu0 %v1934
        %2613 = vmatpush.msra.mxu0 %v1933
        %2614 = vmatpush.msra.mxu0 %v1932
        %2615 = vmatpush.msra.mxu0 %v1931
        %2616 = vmatpush.msra.mxu0 %v1930
        %2617 = vmatpush.msra.mxu0 %v1929
        %2618 = vmatpush.msra.mxu0 %v1928
        %2619 = vmatpush.msra.mxu0 %v1927
        %2620 = vmatpush.msra.mxu0 %v1926
        %2621 = vmatpush.msra.mxu0 %v1925
        %2622 = vmatpush.msra.mxu0 %v1924
        %2623 = vmatpush.msra.mxu0 %v1923
        %2624 = vmatpush.msra.mxu0 %v1922
        %2625 = vmatpush.msra.mxu0 %v1921
        %2626 = vmatpush.msra.mxu0 %v1920
        %2627 = vmatpush.msra.mxu0 %v1919
        %2628 = vmatmul.f32.gmra.mxu0 %v2607
        %v2629 = vpop.f32.mrf.mxu0
        %v2630 = vadd.f32 %v2610, %v2629
        %2631 = vmatmul.f32.gmra.mxu0 %v2608
        %v2632 = vpop.f32.mrf.mxu0
        %v2633 = vadd.f32 %v2610, %v2632
        %2634 = vdwg.mxu0
        %v2635 = vadd.f32 %v2630, %v2438
        %v2636 = vadd.f32 %v2633, %v2439
        %v2637 = vsel %vm1171, %v2635, 0.0
        %v2638 = vsel %vm1171, %v2636, 0.0
        %v2639 = vadd.f32 %v2637, %v2638
        %v2640 = vrot.slane %v2639, 4
        %v2641 = vadd.f32 %v2639, %v2640
        %v2642 = vrot.slane %v2641, 2
        %v2643 = vadd.f32 %v2641, %v2642
        %v2644 = vrot.slane %v2643, 1
        %v2645 = vadd.f32 %v2643, %v2644
        %v2646 = vrcp.pop 16.0
        %v2647 = vmul.f32 16.0, %v2646
        %v2648 = vsub.f32 1.0, %v2647
        %v2649 = vmul.f32 %v2646, %v2648
        %v2650 = vadd.f32 %v2646, %v2649
        %vm2651 = vweird.f32 %v2646
        %v2652 = vsel %vm2651, %v2646, %v2650
        %v2653 = vmul.f32 %v2645, %v2652
        %v2654 = vsel %vm1171, %v2653, 0.0
        %2655 = vadd.xlane.f32.xlu0 %v2654
        %v2656 = vpop.xlane.xlu0 %2655
        %v2657 = vmul.f32 %v2656, %v1202
        %v2658 = vsub.f32 %v2653, %v2657
        %v2659 = vmul.f32 %v2658, %v2658
        %v2660 = vsel %vm1171, %v2659, 0.0
        %2661 = vadd.xlane.f32.xlu0 %v2660
        %v2662 = vpop.xlane.xlu0 %2661
        %v2663 = vmul.f32 %v2662, %v1202
        %v2664 = vadd.f32 %v2663, 1e-05
        %v2665 = vrsqrt.pop %v2664
        %v2666 = vmul.f32 %v2665, %v2664
        %v2667 = vmul.f32 %v2666, %v2665
        %v2668 = vmul.f32 0.5, %v2667
        %v2669 = vsub.f32 1.5, %v2668
        %v2670 = vmul.f32 %v2665, %v2669
        %vm2671 = vweird.f32 %v2664
        %vm2672 = vweird.f32 %v2665
        %vm2673 = vmor %vm2671, %vm2672
        %v2674 = vsel %vm2673, %v2665, %v2670
        %v2675 = vmul.f32 %v2658, %v2674
        %v2676 = vld [vmem:[%s63] sm:$0x1]
        %v2677 = vmul.f32 %v2675, %v2676
        %v2678 = vld [vmem:[%s65] sm:$0x1]
        %v2679 = vadd.f32 %v2677, %v2678
        %v2680 = vld [vmem:[%s67] sm:$0xff]
        %v2681 = vld [vmem:[%s67 + $0x8] sm:$0xff]
        %v2682 = vld [vmem:[%s67 + $0x10] sm:$0xff]
        %v2683 = vld [vmem:[%s67 + $0x18] sm:$0xff]
        %v2684 = vld [vmem:[%s69] sm:$0x1]
        %v2686 = vsel %vm1171, %v2679, 0
        %2688 = vmatpush.msra.mxu0 0.0
        %2689 = vmatpush.msra.mxu0 0.0
        %2690 = vmatpush.msra.mxu0 0.0
        %2691 = vmatpush.msra.mxu0 0.0
        %2692 = vmatpush.msra.mxu0 0.0
        %2693 = vmatpush.msra.mxu0 0.0
        %2694 = vmatpush.msra.mxu0 0.0
        %2695 = vmatpush.msra.mxu0 0.0
        %2696 = vmatpush.msra.mxu0 0.0
        %2697 = vmatpush.msra.mxu0 0.0
        %2698 = vmatpush.msra.mxu0 0.0
        %2699 = vmatpush.msra.mxu0 0.0
        %2700 = vmatpush.msra.mxu0 %v2683
        %2701 = vmatpush.msra.mxu0 %v2682
        %2702 = vmatpush.msra.mxu0 %v2681
        %2703 = vmatpush.msra.mxu0 %v2680
        %2704 = vmatmul.f32.gmra.mxu0 %v2686
        %v2705 = vpop.f32.mrf.mxu0
        %v2706 = vadd.f32 %v2684, %v2705
        %2707 = vdwg.mxu0
        %vm2708 = vcmask 73728
        %2709 = vst.msk [vmem:[%s1062] sm:$0x1] %vm2708, %v2706
        %s2710 = sand.u32 %s833, 1
        %s2711 = scalar_lea.sflag [#allocation3], %s2710
        %s2712 = sand.u32 %s833, 1
        %s2713 = scalar_lea.vmem [#allocation2], %s2712
        // Predicated region
        $region161: #{swin_forward.1} parent=159 // pred_check
          %p2714 = pneg %p843
        $region162: #{swin_forward.1} parent=159 // pred_check_branch
          %2716 = sbr.rel (%p2714) target = $region164
        $region163: #{swin_forward.1} parent=159 // pred_region
          %2718 = vsyncadd %s2711, 0
          %s2719 = scalar_lea.hbm %s71, %s85
          %s2721 = sshll.u32 %s2713, 4
          %s2722 = int_to_ptr.vmem [resolvable:$true] %s2721
          %s2723 = sshll.u32 %s2719, 4
          %s2724 = int_to_ptr.hbm [resolvable:$true] %s2723
          %2726 = dma.vmem_to_hbm [thread:$0]  %s2722, 16, %s2724, %s2711
        $region164: #{swin_forward.1} parent=159 // pred_fallthru
          _
      $region160: #{swin_forward.1} parent=5 // pred_fallthru
        _
      %p2727 = scmp.le.s32.totalorder 2, %s80
      // Predicated region
      $region165: #{swin_forward.1} parent=5 // pred_check
        %p2728 = pneg %p2727
      $region166: #{swin_forward.1} parent=5 // pred_check_branch
        %2730 = sbr.rel (%p2728) target = $region168
      $region167: #{swin_forward.1} parent=5 // pred_region
        %s2731 = ssub.s32 %s80, 2
        // Predicated region
        $region169: #{swin_forward.1} parent=167 // pred_check
          %p2732 = pneg %p849
        $region170: #{swin_forward.1} parent=167 // pred_check_branch
          %2734 = sbr.rel (%p2732) target = $region172
        $region171: #{swin_forward.1} parent=167 // pred_region
          %s2735 = sand.u32 %s834, 1
          %s2736 = scalar_lea.sflag [#allocation3], %s2735
          %s2737 = sand.u32 %s834, 1
          %s2738 = scalar_lea.vmem [#allocation2], %s2737
          %2740 = dma.done %s2736, 16
        $region172: #{swin_forward.1} parent=167 // pred_fallthru
          _
      $region168: #{swin_forward.1} parent=5 // pred_fallthru
        _
    $region6: #{swin_forward.1} parent=1 // loop_footer
      %s84 = sadd.s32 1, %s80
    $region7: #{swin_forward.1} parent=1 // loop_footer_branch
      %79 = sbr.rel target = $region3
    $region8: #{swin_forward.1} parent=1 // loop_exit
      _
    %2741 = vsyncpa [#allocation3], 1
    %s2742 = scalar_lea.sflag [#allocation3], 1
    %2743 = vsyncpa %s2742, 1

</llo_original>
